<compile_context>
chip_gen: v7x
topology: tpu7x:2x2x1
jax: 0.10.0
libtpu: 0.0.40
codegen_flags: <defaults>
</compile_context>

<pallas_src>
import jax
import jax.numpy as jnp
from jax import lax
from jax.experimental import pallas as pl
from jax.experimental.pallas import tpu as pltpu


def _round_up(n, m):
    return ((n + m - 1) // m) * m


def _largest_divisor_leq(n, bound):
    bound = max(1, min(n, bound))
    for d in range(bound, 0, -1):
        if n % d == 0:
            return d
    return 1


def upsample_conv_kernel(x_hbm, w_ref, b_ref, o_ref,
                         xbuf_ref, col_ref, acc_ref, sem):
    """conv3x3(nearest_up2(x)) for one (batch, group, row-tile[, phase]) step.

    x_hbm:    [B, H+2, Wp, Cp]  zero-padded NHWC input, left in HBM (pl.ANY).
    w_ref:    [16|4, Cp, Cp]    phase-collapsed 2x2 taps, [in_C, out_C].
                                16 -> all phases resident, 4 -> per-phase block.
    b_ref:    [1, Cp]           fp32 bias.
    o_ref:    [4, TH, Wc, Cp] or [TH, Wc, Cp]  output phase(s) for this tile.
    xbuf_ref: [2, TH+2, Wp, Cp] double-buffered halo tile (manual DMA dst).
    col_ref:  [3, TH+2, Wc, Cp] column-shifted slabs (im2col-lite).
    acc_ref:  [TH*Wc, Cp] fp32  MXU accumulator.
    sem:      DMA semaphores, one per xbuf slot.
    """
    split_phases = (w_ref.shape[0] == 4)
    _, th_p2, wc, cp = col_ref.shape
    th = th_p2 - 2

    b = pl.program_id(0)
    g = pl.program_id(1)
    t = pl.program_id(2)
    n_tpg = pl.num_programs(2)
    t_glob = g * n_tpg + t
    slot = t % 2

    def issue(row_block, s_):
        pltpu.make_async_copy(
            x_hbm.at[b, pl.ds(row_block * th, th + 2)],
            xbuf_ref.at[s_], sem.at[s_]).start()

    def wait(s_):
        pltpu.make_async_copy(
            x_hbm.at[b, pl.ds(0, th + 2)],
            xbuf_ref.at[s_], sem.at[s_]).wait()

    def load_tile():
        # First row tile of this (batch, group): nothing was prefetched yet.
        @pl.when(t == 0)
        def _():
            issue(t_glob, slot)

        wait(slot)

        # Prefetch the next row tile while this one is being computed.
        @pl.when(t + 1 < n_tpg)
        def _():
            issue(t_glob + 1, 1 - slot)

        # Build the 3 column-shifted slabs ONCE; every matmul LHS below is a
        # contiguous row-slice of these (no per-tap relayout before the MXU).
        for s in range(3):
            col_ref[s] = xbuf_ref[slot, :, pl.ds(s, wc), :]

    if split_phases:
        p = pl.program_id(3)

        @pl.when(p == 0)
        def _():
            load_tile()
    else:
        load_tile()

    bias = b_ref[...]                                      # [1, Cp] fp32

    def phase_result(a, bb, tap_base):
        # a/bb = output row/col phase (python int or traced scalar).
        for i, (tr, tc) in enumerate(((0, 0), (0, 1), (1, 0), (1, 1))):
            lhs = col_ref[bb + tc, pl.ds(a + tr, th)]      # [TH, Wc, Cp]
            lhs = lhs.reshape(th * wc, cp)
            part = jnp.dot(lhs, w_ref[tap_base + 2 * tr + tc],
                           preferred_element_type=jnp.float32)
            if i == 0:
                acc_ref[...] = part
            else:
                acc_ref[...] += part
        res = (acc_ref[...] + bias).reshape(th, wc, cp)
        return res.astype(o_ref.dtype)

    if split_phases:
        o_ref[...] = phase_result(p // 2, p % 2, 0)
    else:
        for a in range(2):
            for bb in range(2):
                o_ref[2 * a + bb] = phase_result(a, bb, (2 * a + bb) * 4)


def upsample_forward(x_nchw, weight, bias, *, compute_dtype=jnp.bfloat16,
                     block_rows=None, phase_grid=None):
    """Equivalent of Upsample.forward: Conv2d(3x3, pad=1)(nearest_up2(x)).

    x_nchw: [B, C, H, W], weight: [C, C, 3, 3] (OIHW), bias: [C].
    compute_dtype: MXU operand dtype (default bf16; accumulation stays fp32).
    phase_grid: None -> auto; True forces the per-phase grid axis (used when
                the 16-tap weight stack cannot stay VMEM-resident, e.g.
                C=1280 on v7x).
    """
    B, C, H, W = x_nchw.shape
    out_dtype = x_nchw.dtype
    cdt = jnp.dtype(out_dtype if compute_dtype is None else compute_dtype)

    Cp = _round_up(C, 128)            # lane-dense channels
    Wc = _round_up(W, 8)              # slab / output width, multiple of 8
    Wp = _round_up(Wc + 2, 8)         # padded input width (left pad + data + halo)

    cdt_b = cdt.itemsize
    out_b = jnp.dtype(out_dtype).itemsize

    # --- generation-aware VMEM budget & row-tile size -----------------------
    try:
        vmem_cap = int(pltpu.get_tpu_info().vmem_capacity_bytes)
    except Exception:
        vmem_cap = 64 * 1024 * 1024   # conservative (v7x-sized) assumption
    vmem_budget = min(int(vmem_cap * 0.85), 100 * 1024 * 1024)

    def step_vmem(th, split):
        xbuf = 2 * (th + 2) * Wp * Cp * cdt_b              # manual DMA dbl-buffer
        col = 3 * (th + 2) * Wc * Cp * cdt_b               # column slabs
        acc = th * Wc * Cp * 4                             # fp32 accumulator
        wgt = (2 * 4 if split else 16) * Cp * Cp * cdt_b   # weights (resident
        out = (2 if split else 2 * 4) * th * Wc * Cp * out_b  # or streamed)
        return xbuf + col + acc + wgt + out + Cp * 4

    if block_rows is not None:
        target_th = int(block_rows)
    else:
        target_th = pl.cdiv(2048, Wc)        # TH*Wc >= ~2048 rows into the MXU
    target_th = max(1, min(target_th, H))

    def pick_th(split):
        th = _largest_divisor_leq(H, target_th)
        while th > 1 and step_vmem(th, split) > vmem_budget:
            th = _largest_divisor_leq(H, th - 1)
        return th

    if phase_grid is None:
        # Stream 4 taps/phase per step only when the full 16-tap stack cannot
        # stay resident (e.g. C=1280 on v7x's 64 MiB VMEM).
        phase_grid = step_vmem(pick_th(False), False) > vmem_budget
    phase_grid = bool(phase_grid)
    TH = pick_th(phase_grid)
    n_t = H // TH
    # Megacore: batch is "parallel"; when B == 1 split row tiles into a small
    # extra parallel group axis so both TensorCores get work.
    n_g = 2 if (B == 1 and n_t >= 2 and n_t % 2 == 0) else 1
    n_tpg = n_t // n_g

    # --- layout glue: NCHW->NHWC + zero pad (no halo duplication) -----------
    x_nhwc = jnp.transpose(x_nchw, (0, 2, 3, 1))                   # [B,H,W,C]
    xp = jnp.pad(x_nhwc, ((0, 0), (1, 1), (1, Wp - W - 1), (0, Cp - C)))
    xp = xp.astype(cdt)                                            # [B,H+2,Wp,Cp]

    # --- phase-collapsed weights: 4 phases x (2x2) taps of [in_C, out_C] ----
    wk = jnp.transpose(weight, (2, 3, 1, 0))            # [3, 3, Cin, Cout]
    groups = (((0,), (1, 2)), ((0, 1), (2,)))           # [phase][tap] -> kh/kw
    taps = []
    for a in range(2):
        for bb in range(2):
            for tr in range(2):
                for tc in range(2):
                    m = 0.0
                    for kh in groups[a][tr]:
                        for kw in groups[bb][tc]:
                            m = m + wk[kh, kw]
                    taps.append(m)
    w_eff = jnp.stack(taps, axis=0)                                # [16, C, C]
    w_eff = jnp.pad(w_eff, ((0, 0), (0, Cp - C), (0, Cp - C))).astype(cdt)
    b_eff = jnp.pad(bias, (0, Cp - C)).reshape(1, Cp).astype(jnp.float32)

    if phase_grid:
        grid = (B, n_g, n_tpg, 4)
        w_spec = pl.BlockSpec((4, Cp, Cp), lambda b, g, t, p: (p, 0, 0))
        b_spec = pl.BlockSpec((1, Cp), lambda b, g, t, p: (0, 0),
                              pipeline_mode=pl.Buffered(1))
        out_spec = pl.BlockSpec((None, None, TH, Wc, Cp),
                                lambda b, g, t, p: (b, p, g * n_tpg + t, 0, 0))
        dims = ("parallel", "parallel", "arbitrary", "arbitrary")
    else:
        grid = (B, n_g, n_tpg)
        w_spec = pl.BlockSpec((16, Cp, Cp), lambda b, g, t: (0, 0, 0),
                              pipeline_mode=pl.Buffered(1))
        b_spec = pl.BlockSpec((1, Cp), lambda b, g, t: (0, 0),
                              pipeline_mode=pl.Buffered(1))
        out_spec = pl.BlockSpec((None, 4, TH, Wc, Cp),
                                lambda b, g, t: (b, 0, g * n_tpg + t, 0, 0))
        dims = ("parallel", "parallel", "arbitrary")

    out_phases = pl.pallas_call(
        upsample_conv_kernel,
        out_shape=jax.ShapeDtypeStruct((B, 4, H, Wc, Cp), out_dtype),
        grid_spec=pltpu.PrefetchScalarGridSpec(
            num_scalar_prefetch=0,
            grid=grid,
            in_specs=[
                pl.BlockSpec(memory_space=pl.ANY),   # padded input stays in HBM
                w_spec,
                b_spec,
            ],
            out_specs=out_spec,
            scratch_shapes=[
                pltpu.VMEM((2, TH + 2, Wp, Cp), cdt),     # halo double buffer
                pltpu.VMEM((3, TH + 2, Wc, Cp), cdt),     # column slabs
                pltpu.VMEM((TH * Wc, Cp), jnp.float32),   # fp32 accumulator
                pltpu.SemaphoreType.DMA((2,)),
            ]),
        compiler_params=pltpu.CompilerParams(
            dimension_semantics=dims,
            vmem_limit_bytes=int(vmem_budget)),
    )(xp, w_eff, b_eff)

    # --- phase interleave + NHWC->NCHW (the one unavoidable layout pass) ----
    # TODO(synk): in a full UNet, keep the 4-phase NHWC layout and fuse this
    # interleave/transpose into the consumer to save an HBM round trip.
    y = out_phases[:, :, :, :W, :C].reshape(B, 2, 2, H, W, C)
    y = jnp.transpose(y, (0, 5, 3, 1, 4, 2))            # [B, C, H, 2, W, 2]
    return y.reshape(B, C, 2 * H, 2 * W)


if __name__ == "__main__":
    B, C, H, W = 2, 4, 16, 16

    key = jax.random.PRNGKey(0)
    kx, kw, kb = jax.random.split(key, 3)

    x = jax.random.normal(kx, (B, C, H, W), dtype=jnp.float32)

    # Deterministic Conv2d(C, C, 3, padding=1) params (PyTorch-style uniform).
    fan_in = C * 3 * 3
    bound = 1.0 / (fan_in ** 0.5)
    weight = jax.random.uniform(kw, (C, C, 3, 3), jnp.float32, -bound, bound)
    bias = jax.random.uniform(kb, (C,), jnp.float32, -bound, bound)

    # Pure-JAX reference of the exact PyTorch semantics.
    up_ref = jnp.repeat(jnp.repeat(x, 2, axis=2), 2, axis=3)
    ref = lax.conv_general_dilated(
        up_ref, weight, window_strides=(1, 1), padding=((1, 1), (1, 1)),
        dimension_numbers=("NCHW", "OIHW", "NCHW"),
    ) + bias[None, :, None, None]

    fwd = jax.jit(upsample_forward,
                  static_argnames=("compute_dtype", "block_rows", "phase_grid"))

    # 1) fp32 operands, several row tiles (exercises the manual halo-DMA chain).
    out = jax.block_until_ready(
        fwd(x, weight, bias, compute_dtype=jnp.float32, block_rows=4))
    assert out.shape == (B, C, 2 * H, 2 * W), out.shape
    assert jnp.allclose(out, ref, atol=1e-4, rtol=1e-4), (
        float(jnp.max(jnp.abs(out - ref))))

    # 2) fp32 operands, phase-split grid (the large-C / v7x weight path).
    out_ph = jax.block_until_ready(
        fwd(x, weight, bias, compute_dtype=jnp.float32, phase_grid=True))
    assert jnp.allclose(out_ph, ref, atol=1e-4, rtol=1e-4), (
        float(jnp.max(jnp.abs(out_ph - ref))))

    # 3) batch=1: row tiles split over the extra "parallel" group axis.
    out_b1 = jax.block_until_ready(
        fwd(x[:1], weight, bias, compute_dtype=jnp.float32, block_rows=4))
    assert jnp.allclose(out_b1, ref[:1], atol=1e-4, rtol=1e-4), (
        float(jnp.max(jnp.abs(out_b1 - ref[:1]))))

    # 4) default path: bf16 MXU operands, fp32 accumulation (loose tolerance).
    out_bf16 = jax.block_until_ready(fwd(x, weight, bias))
    assert jnp.allclose(out_bf16, ref, atol=2e-1, rtol=2e-1), (
        float(jnp.max(jnp.abs(out_bf16 - ref))))

    print("KERNEL_OK")
</pallas_src>

<mosaic_0001>
module attributes {stable_mosaic.version = 11 : i64} {
  func.func @upsample_conv_kernel(%arg0: i32, %arg1: i32, %arg2: i32, %arg3: memref<2x18x24x128xf32, #tpu.memory_space<any>>, %arg4: memref<16x128x128xf32, #tpu.memory_space<vmem>>, %arg5: memref<1x128xf32, #tpu.memory_space<vmem>>, %arg6: memref<1x4x4x16x128xf32, #tpu.memory_space<vmem>>, %arg7: memref<2x6x24x128xf32, #tpu.memory_space<vmem>>, %arg8: memref<3x6x16x128xf32, #tpu.memory_space<vmem>>, %arg9: memref<64x128xf32, #tpu.memory_space<vmem>>, %arg10: memref<2x!tpu.dma_semaphore, #tpu.memory_space<semaphore_mem>>) attributes {dimension_semantics = [#tpu.dimension_semantics<parallel>, #tpu.dimension_semantics<parallel>, #tpu.dimension_semantics<arbitrary>], iteration_bounds = array<i64: 2, 1, 4>, scalar_prefetch = 0 : i64, scratch_operands = 4 : i64, tpu.core_type = #tpu.core_type<tc>, window_params = [{}, {pipeline_mode = #tpu.pipeline_mode<synchronous>, transform_indices = @transform_1, window_bounds = array<i64: 16, 128, 128>}, {pipeline_mode = #tpu.pipeline_mode<synchronous>, transform_indices = @transform_2, window_bounds = array<i64: 1, 128>}, {transform_indices = @transform_3, window_bounds = array<i64: 1, 4, 4, 16, 128>}]} {
    %c4_i32 = arith.constant 4 : i32
    %0 = arith.muli %arg1, %c4_i32 : i32
    %1 = arith.addi %0, %arg2 : i32
    %c2_i32 = arith.constant 2 : i32
    %c0_i32 = arith.constant 0 : i32
    %2 = arith.cmpi eq, %c2_i32, %c0_i32 : i32
    %c1_i32 = arith.constant 1 : i32
    %3 = arith.select %2, %c1_i32, %c2_i32 : i32
    %4 = arith.remsi %arg2, %3 : i32
    %c0_i32_0 = arith.constant 0 : i32
    %5 = arith.cmpi ne, %4, %c0_i32_0 : i32
    %c0_i32_1 = arith.constant 0 : i32
    %6 = arith.cmpi slt, %4, %c0_i32_1 : i32
    %c0_i32_2 = arith.constant 0 : i32
    %7 = arith.cmpi slt, %3, %c0_i32_2 : i32
    %8 = arith.xori %6, %7 : i1
    %9 = arith.andi %8, %5 : i1
    %10 = arith.addi %4, %3 : i32
    %11 = arith.select %9, %10, %4 : i32
    %c0_i32_3 = arith.constant 0 : i32
    %12 = arith.cmpi eq, %arg2, %c0_i32_3 : i32
    %13 = arith.extui %12 : i1 to i32
    %c0_i32_4 = arith.constant 0 : i32
    %14 = arith.cmpi ne, %13, %c0_i32_4 : i32
    scf.if %14 {
      %c4_i32_232 = arith.constant 4 : i32
      %208 = arith.muli %1, %c4_i32_232 : i32
      %c0_i32_233 = arith.constant 0 : i32
      %c0_i32_234 = arith.constant 0 : i32
      %209 = tpu.memref_slice %arg3[%arg0, %208, %c0_i32_233, %c0_i32_234] : memref<2x18x24x128xf32, #tpu.memory_space<any>> -> memref<1x6x24x128xf32, #tpu.memory_space<any>>
      %210 = tpu.memref_squeeze %209 : memref<1x6x24x128xf32, #tpu.memory_space<any>> -> memref<6x24x128xf32, #tpu.memory_space<any>>
      %c0_i32_235 = arith.constant 0 : i32
      %c0_i32_236 = arith.constant 0 : i32
      %c0_i32_237 = arith.constant 0 : i32
      %211 = tpu.memref_slice %arg7[%11, %c0_i32_235, %c0_i32_236, %c0_i32_237] : memref<2x6x24x128xf32, #tpu.memory_space<vmem>> -> memref<1x6x24x128xf32, #tpu.memory_space<vmem>>
      %212 = tpu.memref_squeeze %211 : memref<1x6x24x128xf32, #tpu.memory_space<vmem>> -> memref<6x24x128xf32, #tpu.memory_space<vmem>>
      %213 = tpu.memref_slice %arg10[%11] : memref<2x!tpu.dma_semaphore, #tpu.memory_space<semaphore_mem>> -> memref<1x!tpu.dma_semaphore, #tpu.memory_space<semaphore_mem>>
      %214 = tpu.memref_squeeze %213 : memref<1x!tpu.dma_semaphore, #tpu.memory_space<semaphore_mem>> -> memref<!tpu.dma_semaphore, #tpu.memory_space<semaphore_mem>>
      tpu.enqueue_dma source(%210 : memref<6x24x128xf32, #tpu.memory_space<any>>) target(%212 : memref<6x24x128xf32, #tpu.memory_space<vmem>>) target_semaphore(%214 : memref<!tpu.dma_semaphore, #tpu.memory_space<semaphore_mem>>)
    } else {
    }
    %c0_i32_5 = arith.constant 0 : i32
    %c0_i32_6 = arith.constant 0 : i32
    %c0_i32_7 = arith.constant 0 : i32
    %15 = tpu.memref_slice %arg3[%arg0, %c0_i32_5, %c0_i32_6, %c0_i32_7] : memref<2x18x24x128xf32, #tpu.memory_space<any>> -> memref<1x6x24x128xf32, #tpu.memory_space<any>>
    %16 = tpu.memref_squeeze %15 : memref<1x6x24x128xf32, #tpu.memory_space<any>> -> memref<6x24x128xf32, #tpu.memory_space<any>>
    %c0_i32_8 = arith.constant 0 : i32
    %c0_i32_9 = arith.constant 0 : i32
    %c0_i32_10 = arith.constant 0 : i32
    %17 = tpu.memref_slice %arg7[%11, %c0_i32_8, %c0_i32_9, %c0_i32_10] : memref<2x6x24x128xf32, #tpu.memory_space<vmem>> -> memref<1x6x24x128xf32, #tpu.memory_space<vmem>>
    %18 = tpu.memref_squeeze %17 : memref<1x6x24x128xf32, #tpu.memory_space<vmem>> -> memref<6x24x128xf32, #tpu.memory_space<vmem>>
    %19 = tpu.memref_slice %arg10[%11] : memref<2x!tpu.dma_semaphore, #tpu.memory_space<semaphore_mem>> -> memref<1x!tpu.dma_semaphore, #tpu.memory_space<semaphore_mem>>
    %20 = tpu.memref_squeeze %19 : memref<1x!tpu.dma_semaphore, #tpu.memory_space<semaphore_mem>> -> memref<!tpu.dma_semaphore, #tpu.memory_space<semaphore_mem>>
    tpu.wait_dma2 semaphore(%20 : memref<!tpu.dma_semaphore, #tpu.memory_space<semaphore_mem>>) src(%16 : memref<6x24x128xf32, #tpu.memory_space<any>>) dst(%18 : memref<6x24x128xf32, #tpu.memory_space<vmem>>)
    %c1_i32_11 = arith.constant 1 : i32
    %21 = arith.addi %arg2, %c1_i32_11 : i32
    %c4_i32_12 = arith.constant 4 : i32
    %22 = arith.cmpi slt, %21, %c4_i32_12 : i32
    %23 = arith.extui %22 : i1 to i32
    %c0_i32_13 = arith.constant 0 : i32
    %24 = arith.cmpi ne, %23, %c0_i32_13 : i32
    scf.if %24 {
      %c1_i32_232 = arith.constant 1 : i32
      %208 = arith.addi %1, %c1_i32_232 : i32
      %c1_i32_233 = arith.constant 1 : i32
      %209 = arith.subi %c1_i32_233, %11 : i32
      %c4_i32_234 = arith.constant 4 : i32
      %210 = arith.muli %208, %c4_i32_234 : i32
      %c0_i32_235 = arith.constant 0 : i32
      %c0_i32_236 = arith.constant 0 : i32
      %211 = tpu.memref_slice %arg3[%arg0, %210, %c0_i32_235, %c0_i32_236] : memref<2x18x24x128xf32, #tpu.memory_space<any>> -> memref<1x6x24x128xf32, #tpu.memory_space<any>>
      %212 = tpu.memref_squeeze %211 : memref<1x6x24x128xf32, #tpu.memory_space<any>> -> memref<6x24x128xf32, #tpu.memory_space<any>>
      %c0_i32_237 = arith.constant 0 : i32
      %c0_i32_238 = arith.constant 0 : i32
      %c0_i32_239 = arith.constant 0 : i32
      %213 = tpu.memref_slice %arg7[%209, %c0_i32_237, %c0_i32_238, %c0_i32_239] : memref<2x6x24x128xf32, #tpu.memory_space<vmem>> -> memref<1x6x24x128xf32, #tpu.memory_space<vmem>>
      %214 = tpu.memref_squeeze %213 : memref<1x6x24x128xf32, #tpu.memory_space<vmem>> -> memref<6x24x128xf32, #tpu.memory_space<vmem>>
      %215 = tpu.memref_slice %arg10[%209] : memref<2x!tpu.dma_semaphore, #tpu.memory_space<semaphore_mem>> -> memref<1x!tpu.dma_semaphore, #tpu.memory_space<semaphore_mem>>
      %216 = tpu.memref_squeeze %215 : memref<1x!tpu.dma_semaphore, #tpu.memory_space<semaphore_mem>> -> memref<!tpu.dma_semaphore, #tpu.memory_space<semaphore_mem>>
      tpu.enqueue_dma source(%212 : memref<6x24x128xf32, #tpu.memory_space<any>>) target(%214 : memref<6x24x128xf32, #tpu.memory_space<vmem>>) target_semaphore(%216 : memref<!tpu.dma_semaphore, #tpu.memory_space<semaphore_mem>>)
    } else {
    }
    %25 = arith.index_cast %11 : i32 to index
    %c0 = arith.constant 0 : index
    %c0_14 = arith.constant 0 : index
    %c0_15 = arith.constant 0 : index
    %26 = vector.load %arg7[%25, %c0, %c0_14, %c0_15] : memref<2x6x24x128xf32, #tpu.memory_space<vmem>>, vector<1x6x16x128xf32>
    %27 = vector.shape_cast %26 : vector<1x6x16x128xf32> to vector<6x16x128xf32>
    %c0_16 = arith.constant 0 : index
    %c0_17 = arith.constant 0 : index
    %c0_18 = arith.constant 0 : index
    %c0_19 = arith.constant 0 : index
    %28 = vector.load %arg8[%c0_16, %c0_17, %c0_18, %c0_19] : memref<3x6x16x128xf32, #tpu.memory_space<vmem>>, vector<1x6x16x128xf32>
    %29 = vector.shape_cast %28 : vector<1x6x16x128xf32> to vector<6x16x128xf32>
    %30 = vector.shape_cast %27 : vector<6x16x128xf32> to vector<1x6x16x128xf32>
    tpu.vector_store %arg8[%c0_16, %c0_17, %c0_18, %c0_19], %30 {strides = array<i32>} : memref<3x6x16x128xf32, #tpu.memory_space<vmem>>, vector<1x6x16x128xf32>,
    %31 = arith.index_cast %11 : i32 to index
    %c0_20 = arith.constant 0 : index
    %c1 = arith.constant 1 : index
    %c0_21 = arith.constant 0 : index
    %32 = vector.load %arg7[%31, %c0_20, %c1, %c0_21] : memref<2x6x24x128xf32, #tpu.memory_space<vmem>>, vector<1x6x16x128xf32>
    %33 = vector.shape_cast %32 : vector<1x6x16x128xf32> to vector<6x16x128xf32>
    %c1_22 = arith.constant 1 : index
    %c0_23 = arith.constant 0 : index
    %c0_24 = arith.constant 0 : index
    %c0_25 = arith.constant 0 : index
    %34 = vector.load %arg8[%c1_22, %c0_23, %c0_24, %c0_25] : memref<3x6x16x128xf32, #tpu.memory_space<vmem>>, vector<1x6x16x128xf32>
    %35 = vector.shape_cast %34 : vector<1x6x16x128xf32> to vector<6x16x128xf32>
    %36 = vector.shape_cast %33 : vector<6x16x128xf32> to vector<1x6x16x128xf32>
    tpu.vector_store %arg8[%c1_22, %c0_23, %c0_24, %c0_25], %36 {strides = array<i32>} : memref<3x6x16x128xf32, #tpu.memory_space<vmem>>, vector<1x6x16x128xf32>,
    %37 = arith.index_cast %11 : i32 to index
    %c0_26 = arith.constant 0 : index
    %c2 = arith.constant 2 : index
    %c0_27 = arith.constant 0 : index
    %38 = vector.load %arg7[%37, %c0_26, %c2, %c0_27] : memref<2x6x24x128xf32, #tpu.memory_space<vmem>>, vector<1x6x16x128xf32>
    %39 = vector.shape_cast %38 : vector<1x6x16x128xf32> to vector<6x16x128xf32>
    %c2_28 = arith.constant 2 : index
    %c0_29 = arith.constant 0 : index
    %c0_30 = arith.constant 0 : index
    %c0_31 = arith.constant 0 : index
    %40 = vector.load %arg8[%c2_28, %c0_29, %c0_30, %c0_31] : memref<3x6x16x128xf32, #tpu.memory_space<vmem>>, vector<1x6x16x128xf32>
    %41 = vector.shape_cast %40 : vector<1x6x16x128xf32> to vector<6x16x128xf32>
    %42 = vector.shape_cast %39 : vector<6x16x128xf32> to vector<1x6x16x128xf32>
    tpu.vector_store %arg8[%c2_28, %c0_29, %c0_30, %c0_31], %42 {strides = array<i32>} : memref<3x6x16x128xf32, #tpu.memory_space<vmem>>, vector<1x6x16x128xf32>,
    %c0_32 = arith.constant 0 : index
    %c0_33 = arith.constant 0 : index
    %43 = vector.load %arg5[%c0_32, %c0_33] : memref<1x128xf32, #tpu.memory_space<vmem>>, vector<1x128xf32>
    %c0_34 = arith.constant 0 : index
    %c0_35 = arith.constant 0 : index
    %c0_36 = arith.constant 0 : index
    %c0_37 = arith.constant 0 : index
    %44 = vector.load %arg8[%c0_34, %c0_35, %c0_36, %c0_37] : memref<3x6x16x128xf32, #tpu.memory_space<vmem>>, vector<1x4x16x128xf32>
    %45 = vector.shape_cast %44 : vector<1x4x16x128xf32> to vector<4x16x128xf32>
    %46 = vector.shape_cast %45 : vector<4x16x128xf32> to vector<64x128xf32>
    %c0_38 = arith.constant 0 : index
    %c0_39 = arith.constant 0 : index
    %c0_40 = arith.constant 0 : index
    %47 = vector.load %arg4[%c0_38, %c0_39, %c0_40] : memref<16x128x128xf32, #tpu.memory_space<vmem>>, vector<1x128x128xf32>
    %48 = vector.shape_cast %47 : vector<1x128x128xf32> to vector<128x128xf32>
    %cst = arith.constant dense<0.000000e+00> : vector<64x128xf32>
    %49 = tpu.matmul %46, %48, %cst {dimension_numbers = #tpu.dot_dimension_numbers<[1], [0], [0], [1], [0, 0, 1, 1], [], []>} : vector<64x128xf32>, vector<128x128xf32>, vector<64x128xf32> -> vector<64x128xf32>
    %c0_41 = arith.constant 0 : index
    %c0_42 = arith.constant 0 : index
    %50 = vector.load %arg9[%c0_41, %c0_42] : memref<64x128xf32, #tpu.memory_space<vmem>>, vector<64x128xf32>
    tpu.vector_store %arg9[%c0_41, %c0_42], %49 {strides = array<i32>} : memref<64x128xf32, #tpu.memory_space<vmem>>, vector<64x128xf32>,
    %c1_43 = arith.constant 1 : index
    %c0_44 = arith.constant 0 : index
    %c0_45 = arith.constant 0 : index
    %c0_46 = arith.constant 0 : index
    %51 = vector.load %arg8[%c1_43, %c0_44, %c0_45, %c0_46] : memref<3x6x16x128xf32, #tpu.memory_space<vmem>>, vector<1x4x16x128xf32>
    %52 = vector.shape_cast %51 : vector<1x4x16x128xf32> to vector<4x16x128xf32>
    %53 = vector.shape_cast %52 : vector<4x16x128xf32> to vector<64x128xf32>
    %c1_47 = arith.constant 1 : index
    %c0_48 = arith.constant 0 : index
    %c0_49 = arith.constant 0 : index
    %54 = vector.load %arg4[%c1_47, %c0_48, %c0_49] : memref<16x128x128xf32, #tpu.memory_space<vmem>>, vector<1x128x128xf32>
    %55 = vector.shape_cast %54 : vector<1x128x128xf32> to vector<128x128xf32>
    %cst_50 = arith.constant dense<0.000000e+00> : vector<64x128xf32>
    %56 = tpu.matmul %53, %55, %cst_50 {dimension_numbers = #tpu.dot_dimension_numbers<[1], [0], [0], [1], [0, 0, 1, 1], [], []>} : vector<64x128xf32>, vector<128x128xf32>, vector<64x128xf32> -> vector<64x128xf32>
    %c0_51 = arith.constant 0 : index
    %c0_52 = arith.constant 0 : index
    %57 = vector.load %arg9[%c0_51, %c0_52] : memref<64x128xf32, #tpu.memory_space<vmem>>, vector<64x128xf32>
    %58 = arith.addf %57, %56 : vector<64x128xf32>
    %c0_53 = arith.constant 0 : index
    %c0_54 = arith.constant 0 : index
    %59 = vector.load %arg9[%c0_53, %c0_54] : memref<64x128xf32, #tpu.memory_space<vmem>>, vector<64x128xf32>
    tpu.vector_store %arg9[%c0_53, %c0_54], %58 {strides = array<i32>} : memref<64x128xf32, #tpu.memory_space<vmem>>, vector<64x128xf32>,
    %c0_55 = arith.constant 0 : index
    %c1_56 = arith.constant 1 : index
    %c0_57 = arith.constant 0 : index
    %c0_58 = arith.constant 0 : index
    %60 = vector.load %arg8[%c0_55, %c1_56, %c0_57, %c0_58] : memref<3x6x16x128xf32, #tpu.memory_space<vmem>>, vector<1x4x16x128xf32>
    %61 = vector.shape_cast %60 : vector<1x4x16x128xf32> to vector<4x16x128xf32>
    %62 = vector.shape_cast %61 : vector<4x16x128xf32> to vector<64x128xf32>
    %c2_59 = arith.constant 2 : index
    %c0_60 = arith.constant 0 : index
    %c0_61 = arith.constant 0 : index
    %63 = vector.load %arg4[%c2_59, %c0_60, %c0_61] : memref<16x128x128xf32, #tpu.memory_space<vmem>>, vector<1x128x128xf32>
    %64 = vector.shape_cast %63 : vector<1x128x128xf32> to vector<128x128xf32>
    %cst_62 = arith.constant dense<0.000000e+00> : vector<64x128xf32>
    %65 = tpu.matmul %62, %64, %cst_62 {dimension_numbers = #tpu.dot_dimension_numbers<[1], [0], [0], [1], [0, 0, 1, 1], [], []>} : vector<64x128xf32>, vector<128x128xf32>, vector<64x128xf32> -> vector<64x128xf32>
    %c0_63 = arith.constant 0 : index
    %c0_64 = arith.constant 0 : index
    %66 = vector.load %arg9[%c0_63, %c0_64] : memref<64x128xf32, #tpu.memory_space<vmem>>, vector<64x128xf32>
    %67 = arith.addf %66, %65 : vector<64x128xf32>
    %c0_65 = arith.constant 0 : index
    %c0_66 = arith.constant 0 : index
    %68 = vector.load %arg9[%c0_65, %c0_66] : memref<64x128xf32, #tpu.memory_space<vmem>>, vector<64x128xf32>
    tpu.vector_store %arg9[%c0_65, %c0_66], %67 {strides = array<i32>} : memref<64x128xf32, #tpu.memory_space<vmem>>, vector<64x128xf32>,
    %c1_67 = arith.constant 1 : index
    %c1_68 = arith.constant 1 : index
    %c0_69 = arith.constant 0 : index
    %c0_70 = arith.constant 0 : index
    %69 = vector.load %arg8[%c1_67, %c1_68, %c0_69, %c0_70] : memref<3x6x16x128xf32, #tpu.memory_space<vmem>>, vector<1x4x16x128xf32>
    %70 = vector.shape_cast %69 : vector<1x4x16x128xf32> to vector<4x16x128xf32>
    %71 = vector.shape_cast %70 : vector<4x16x128xf32> to vector<64x128xf32>
    %c3 = arith.constant 3 : index
    %c0_71 = arith.constant 0 : index
    %c0_72 = arith.constant 0 : index
    %72 = vector.load %arg4[%c3, %c0_71, %c0_72] : memref<16x128x128xf32, #tpu.memory_space<vmem>>, vector<1x128x128xf32>
    %73 = vector.shape_cast %72 : vector<1x128x128xf32> to vector<128x128xf32>
    %cst_73 = arith.constant dense<0.000000e+00> : vector<64x128xf32>
    %74 = tpu.matmul %71, %73, %cst_73 {dimension_numbers = #tpu.dot_dimension_numbers<[1], [0], [0], [1], [0, 0, 1, 1], [], []>} : vector<64x128xf32>, vector<128x128xf32>, vector<64x128xf32> -> vector<64x128xf32>
    %c0_74 = arith.constant 0 : index
    %c0_75 = arith.constant 0 : index
    %75 = vector.load %arg9[%c0_74, %c0_75] : memref<64x128xf32, #tpu.memory_space<vmem>>, vector<64x128xf32>
    %76 = arith.addf %75, %74 : vector<64x128xf32>
    %c0_76 = arith.constant 0 : index
    %c0_77 = arith.constant 0 : index
    %77 = vector.load %arg9[%c0_76, %c0_77] : memref<64x128xf32, #tpu.memory_space<vmem>>, vector<64x128xf32>
    tpu.vector_store %arg9[%c0_76, %c0_77], %76 {strides = array<i32>} : memref<64x128xf32, #tpu.memory_space<vmem>>, vector<64x128xf32>,
    %c0_78 = arith.constant 0 : index
    %c0_79 = arith.constant 0 : index
    %78 = vector.load %arg9[%c0_78, %c0_79] : memref<64x128xf32, #tpu.memory_space<vmem>>, vector<64x128xf32>
    %79 = vector.broadcast %43 : vector<1x128xf32> to vector<64x128xf32>
    %80 = arith.addf %78, %79 : vector<64x128xf32>
    %81 = vector.shape_cast %80 : vector<64x128xf32> to vector<4x16x128xf32>
    %c0_80 = arith.constant 0 : index
    %c0_81 = arith.constant 0 : index
    %c0_82 = arith.constant 0 : index
    %c0_83 = arith.constant 0 : index
    %c0_84 = arith.constant 0 : index
    %82 = vector.load %arg6[%c0_80, %c0_81, %c0_82, %c0_83, %c0_84] : memref<1x4x4x16x128xf32, #tpu.memory_space<vmem>>, vector<1x1x4x16x128xf32>
    %83 = vector.shape_cast %82 : vector<1x1x4x16x128xf32> to vector<4x16x128xf32>
    %84 = vector.shape_cast %81 : vector<4x16x128xf32> to vector<1x1x4x16x128xf32>
    tpu.vector_store %arg6[%c0_80, %c0_81, %c0_82, %c0_83, %c0_84], %84 {strides = array<i32>} : memref<1x4x4x16x128xf32, #tpu.memory_space<vmem>>, vector<1x1x4x16x128xf32>,
    %c1_85 = arith.constant 1 : index
    %c0_86 = arith.constant 0 : index
    %c0_87 = arith.constant 0 : index
    %c0_88 = arith.constant 0 : index
    %85 = vector.load %arg8[%c1_85, %c0_86, %c0_87, %c0_88] : memref<3x6x16x128xf32, #tpu.memory_space<vmem>>, vector<1x4x16x128xf32>
    %86 = vector.shape_cast %85 : vector<1x4x16x128xf32> to vector<4x16x128xf32>
    %87 = vector.shape_cast %86 : vector<4x16x128xf32> to vector<64x128xf32>
    %c4 = arith.constant 4 : index
    %c0_89 = arith.constant 0 : index
    %c0_90 = arith.constant 0 : index
    %88 = vector.load %arg4[%c4, %c0_89, %c0_90] : memref<16x128x128xf32, #tpu.memory_space<vmem>>, vector<1x128x128xf32>
    %89 = vector.shape_cast %88 : vector<1x128x128xf32> to vector<128x128xf32>
    %cst_91 = arith.constant dense<0.000000e+00> : vector<64x128xf32>
    %90 = tpu.matmul %87, %89, %cst_91 {dimension_numbers = #tpu.dot_dimension_numbers<[1], [0], [0], [1], [0, 0, 1, 1], [], []>} : vector<64x128xf32>, vector<128x128xf32>, vector<64x128xf32> -> vector<64x128xf32>
    %c0_92 = arith.constant 0 : index
    %c0_93 = arith.constant 0 : index
    %91 = vector.load %arg9[%c0_92, %c0_93] : memref<64x128xf32, #tpu.memory_space<vmem>>, vector<64x128xf32>
    tpu.vector_store %arg9[%c0_92, %c0_93], %90 {strides = array<i32>} : memref<64x128xf32, #tpu.memory_space<vmem>>, vector<64x128xf32>,
    %c2_94 = arith.constant 2 : index
    %c0_95 = arith.constant 0 : index
    %c0_96 = arith.constant 0 : index
    %c0_97 = arith.constant 0 : index
    %92 = vector.load %arg8[%c2_94, %c0_95, %c0_96, %c0_97] : memref<3x6x16x128xf32, #tpu.memory_space<vmem>>, vector<1x4x16x128xf32>
    %93 = vector.shape_cast %92 : vector<1x4x16x128xf32> to vector<4x16x128xf32>
    %94 = vector.shape_cast %93 : vector<4x16x128xf32> to vector<64x128xf32>
    %c5 = arith.constant 5 : index
    %c0_98 = arith.constant 0 : index
    %c0_99 = arith.constant 0 : index
    %95 = vector.load %arg4[%c5, %c0_98, %c0_99] : memref<16x128x128xf32, #tpu.memory_space<vmem>>, vector<1x128x128xf32>
    %96 = vector.shape_cast %95 : vector<1x128x128xf32> to vector<128x128xf32>
    %cst_100 = arith.constant dense<0.000000e+00> : vector<64x128xf32>
    %97 = tpu.matmul %94, %96, %cst_100 {dimension_numbers = #tpu.dot_dimension_numbers<[1], [0], [0], [1], [0, 0, 1, 1], [], []>} : vector<64x128xf32>, vector<128x128xf32>, vector<64x128xf32> -> vector<64x128xf32>
    %c0_101 = arith.constant 0 : index
    %c0_102 = arith.constant 0 : index
    %98 = vector.load %arg9[%c0_101, %c0_102] : memref<64x128xf32, #tpu.memory_space<vmem>>, vector<64x128xf32>
    %99 = arith.addf %98, %97 : vector<64x128xf32>
    %c0_103 = arith.constant 0 : index
    %c0_104 = arith.constant 0 : index
    %100 = vector.load %arg9[%c0_103, %c0_104] : memref<64x128xf32, #tpu.memory_space<vmem>>, vector<64x128xf32>
    tpu.vector_store %arg9[%c0_103, %c0_104], %99 {strides = array<i32>} : memref<64x128xf32, #tpu.memory_space<vmem>>, vector<64x128xf32>,
    %c1_105 = arith.constant 1 : index
    %c1_106 = arith.constant 1 : index
    %c0_107 = arith.constant 0 : index
    %c0_108 = arith.constant 0 : index
    %101 = vector.load %arg8[%c1_105, %c1_106, %c0_107, %c0_108] : memref<3x6x16x128xf32, #tpu.memory_space<vmem>>, vector<1x4x16x128xf32>
    %102 = vector.shape_cast %101 : vector<1x4x16x128xf32> to vector<4x16x128xf32>
    %103 = vector.shape_cast %102 : vector<4x16x128xf32> to vector<64x128xf32>
    %c6 = arith.constant 6 : index
    %c0_109 = arith.constant 0 : index
    %c0_110 = arith.constant 0 : index
    %104 = vector.load %arg4[%c6, %c0_109, %c0_110] : memref<16x128x128xf32, #tpu.memory_space<vmem>>, vector<1x128x128xf32>
    %105 = vector.shape_cast %104 : vector<1x128x128xf32> to vector<128x128xf32>
    %cst_111 = arith.constant dense<0.000000e+00> : vector<64x128xf32>
    %106 = tpu.matmul %103, %105, %cst_111 {dimension_numbers = #tpu.dot_dimension_numbers<[1], [0], [0], [1], [0, 0, 1, 1], [], []>} : vector<64x128xf32>, vector<128x128xf32>, vector<64x128xf32> -> vector<64x128xf32>
    %c0_112 = arith.constant 0 : index
    %c0_113 = arith.constant 0 : index
    %107 = vector.load %arg9[%c0_112, %c0_113] : memref<64x128xf32, #tpu.memory_space<vmem>>, vector<64x128xf32>
    %108 = arith.addf %107, %106 : vector<64x128xf32>
    %c0_114 = arith.constant 0 : index
    %c0_115 = arith.constant 0 : index
    %109 = vector.load %arg9[%c0_114, %c0_115] : memref<64x128xf32, #tpu.memory_space<vmem>>, vector<64x128xf32>
    tpu.vector_store %arg9[%c0_114, %c0_115], %108 {strides = array<i32>} : memref<64x128xf32, #tpu.memory_space<vmem>>, vector<64x128xf32>,
    %c2_116 = arith.constant 2 : index
    %c1_117 = arith.constant 1 : index
    %c0_118 = arith.constant 0 : index
    %c0_119 = arith.constant 0 : index
    %110 = vector.load %arg8[%c2_116, %c1_117, %c0_118, %c0_119] : memref<3x6x16x128xf32, #tpu.memory_space<vmem>>, vector<1x4x16x128xf32>
    %111 = vector.shape_cast %110 : vector<1x4x16x128xf32> to vector<4x16x128xf32>
    %112 = vector.shape_cast %111 : vector<4x16x128xf32> to vector<64x128xf32>
    %c7 = arith.constant 7 : index
    %c0_120 = arith.constant 0 : index
    %c0_121 = arith.constant 0 : index
    %113 = vector.load %arg4[%c7, %c0_120, %c0_121] : memref<16x128x128xf32, #tpu.memory_space<vmem>>, vector<1x128x128xf32>
    %114 = vector.shape_cast %113 : vector<1x128x128xf32> to vector<128x128xf32>
    %cst_122 = arith.constant dense<0.000000e+00> : vector<64x128xf32>
    %115 = tpu.matmul %112, %114, %cst_122 {dimension_numbers = #tpu.dot_dimension_numbers<[1], [0], [0], [1], [0, 0, 1, 1], [], []>} : vector<64x128xf32>, vector<128x128xf32>, vector<64x128xf32> -> vector<64x128xf32>
    %c0_123 = arith.constant 0 : index
    %c0_124 = arith.constant 0 : index
    %116 = vector.load %arg9[%c0_123, %c0_124] : memref<64x128xf32, #tpu.memory_space<vmem>>, vector<64x128xf32>
    %117 = arith.addf %116, %115 : vector<64x128xf32>
    %c0_125 = arith.constant 0 : index
    %c0_126 = arith.constant 0 : index
    %118 = vector.load %arg9[%c0_125, %c0_126] : memref<64x128xf32, #tpu.memory_space<vmem>>, vector<64x128xf32>
    tpu.vector_store %arg9[%c0_125, %c0_126], %117 {strides = array<i32>} : memref<64x128xf32, #tpu.memory_space<vmem>>, vector<64x128xf32>,
    %c0_127 = arith.constant 0 : index
    %c0_128 = arith.constant 0 : index
    %119 = vector.load %arg9[%c0_127, %c0_128] : memref<64x128xf32, #tpu.memory_space<vmem>>, vector<64x128xf32>
    %120 = vector.broadcast %43 : vector<1x128xf32> to vector<64x128xf32>
    %121 = arith.addf %119, %120 : vector<64x128xf32>
    %122 = vector.shape_cast %121 : vector<64x128xf32> to vector<4x16x128xf32>
    %c0_129 = arith.constant 0 : index
    %c1_130 = arith.constant 1 : index
    %c0_131 = arith.constant 0 : index
    %c0_132 = arith.constant 0 : index
    %c0_133 = arith.constant 0 : index
    %123 = vector.load %arg6[%c0_129, %c1_130, %c0_131, %c0_132, %c0_133] : memref<1x4x4x16x128xf32, #tpu.memory_space<vmem>>, vector<1x1x4x16x128xf32>
    %124 = vector.shape_cast %123 : vector<1x1x4x16x128xf32> to vector<4x16x128xf32>
    %125 = vector.shape_cast %122 : vector<4x16x128xf32> to vector<1x1x4x16x128xf32>
    tpu.vector_store %arg6[%c0_129, %c1_130, %c0_131, %c0_132, %c0_133], %125 {strides = array<i32>} : memref<1x4x4x16x128xf32, #tpu.memory_space<vmem>>, vector<1x1x4x16x128xf32>,
    %c0_134 = arith.constant 0 : index
    %c1_135 = arith.constant 1 : index
    %c0_136 = arith.constant 0 : index
    %c0_137 = arith.constant 0 : index
    %126 = vector.load %arg8[%c0_134, %c1_135, %c0_136, %c0_137] : memref<3x6x16x128xf32, #tpu.memory_space<vmem>>, vector<1x4x16x128xf32>
    %127 = vector.shape_cast %126 : vector<1x4x16x128xf32> to vector<4x16x128xf32>
    %128 = vector.shape_cast %127 : vector<4x16x128xf32> to vector<64x128xf32>
    %c8 = arith.constant 8 : index
    %c0_138 = arith.constant 0 : index
    %c0_139 = arith.constant 0 : index
    %129 = vector.load %arg4[%c8, %c0_138, %c0_139] : memref<16x128x128xf32, #tpu.memory_space<vmem>>, vector<1x128x128xf32>
    %130 = vector.shape_cast %129 : vector<1x128x128xf32> to vector<128x128xf32>
    %cst_140 = arith.constant dense<0.000000e+00> : vector<64x128xf32>
    %131 = tpu.matmul %128, %130, %cst_140 {dimension_numbers = #tpu.dot_dimension_numbers<[1], [0], [0], [1], [0, 0, 1, 1], [], []>} : vector<64x128xf32>, vector<128x128xf32>, vector<64x128xf32> -> vector<64x128xf32>
    %c0_141 = arith.constant 0 : index
    %c0_142 = arith.constant 0 : index
    %132 = vector.load %arg9[%c0_141, %c0_142] : memref<64x128xf32, #tpu.memory_space<vmem>>, vector<64x128xf32>
    tpu.vector_store %arg9[%c0_141, %c0_142], %131 {strides = array<i32>} : memref<64x128xf32, #tpu.memory_space<vmem>>, vector<64x128xf32>,
    %c1_143 = arith.constant 1 : index
    %c1_144 = arith.constant 1 : index
    %c0_145 = arith.constant 0 : index
    %c0_146 = arith.constant 0 : index
    %133 = vector.load %arg8[%c1_143, %c1_144, %c0_145, %c0_146] : memref<3x6x16x128xf32, #tpu.memory_space<vmem>>, vector<1x4x16x128xf32>
    %134 = vector.shape_cast %133 : vector<1x4x16x128xf32> to vector<4x16x128xf32>
    %135 = vector.shape_cast %134 : vector<4x16x128xf32> to vector<64x128xf32>
    %c9 = arith.constant 9 : index
    %c0_147 = arith.constant 0 : index
    %c0_148 = arith.constant 0 : index
    %136 = vector.load %arg4[%c9, %c0_147, %c0_148] : memref<16x128x128xf32, #tpu.memory_space<vmem>>, vector<1x128x128xf32>
    %137 = vector.shape_cast %136 : vector<1x128x128xf32> to vector<128x128xf32>
    %cst_149 = arith.constant dense<0.000000e+00> : vector<64x128xf32>
    %138 = tpu.matmul %135, %137, %cst_149 {dimension_numbers = #tpu.dot_dimension_numbers<[1], [0], [0], [1], [0, 0, 1, 1], [], []>} : vector<64x128xf32>, vector<128x128xf32>, vector<64x128xf32> -> vector<64x128xf32>
    %c0_150 = arith.constant 0 : index
    %c0_151 = arith.constant 0 : index
    %139 = vector.load %arg9[%c0_150, %c0_151] : memref<64x128xf32, #tpu.memory_space<vmem>>, vector<64x128xf32>
    %140 = arith.addf %139, %138 : vector<64x128xf32>
    %c0_152 = arith.constant 0 : index
    %c0_153 = arith.constant 0 : index
    %141 = vector.load %arg9[%c0_152, %c0_153] : memref<64x128xf32, #tpu.memory_space<vmem>>, vector<64x128xf32>
    tpu.vector_store %arg9[%c0_152, %c0_153], %140 {strides = array<i32>} : memref<64x128xf32, #tpu.memory_space<vmem>>, vector<64x128xf32>,
    %c0_154 = arith.constant 0 : index
    %c2_155 = arith.constant 2 : index
    %c0_156 = arith.constant 0 : index
    %c0_157 = arith.constant 0 : index
    %142 = vector.load %arg8[%c0_154, %c2_155, %c0_156, %c0_157] : memref<3x6x16x128xf32, #tpu.memory_space<vmem>>, vector<1x4x16x128xf32>
    %143 = vector.shape_cast %142 : vector<1x4x16x128xf32> to vector<4x16x128xf32>
    %144 = vector.shape_cast %143 : vector<4x16x128xf32> to vector<64x128xf32>
    %c10 = arith.constant 10 : index
    %c0_158 = arith.constant 0 : index
    %c0_159 = arith.constant 0 : index
    %145 = vector.load %arg4[%c10, %c0_158, %c0_159] : memref<16x128x128xf32, #tpu.memory_space<vmem>>, vector<1x128x128xf32>
    %146 = vector.shape_cast %145 : vector<1x128x128xf32> to vector<128x128xf32>
    %cst_160 = arith.constant dense<0.000000e+00> : vector<64x128xf32>
    %147 = tpu.matmul %144, %146, %cst_160 {dimension_numbers = #tpu.dot_dimension_numbers<[1], [0], [0], [1], [0, 0, 1, 1], [], []>} : vector<64x128xf32>, vector<128x128xf32>, vector<64x128xf32> -> vector<64x128xf32>
    %c0_161 = arith.constant 0 : index
    %c0_162 = arith.constant 0 : index
    %148 = vector.load %arg9[%c0_161, %c0_162] : memref<64x128xf32, #tpu.memory_space<vmem>>, vector<64x128xf32>
    %149 = arith.addf %148, %147 : vector<64x128xf32>
    %c0_163 = arith.constant 0 : index
    %c0_164 = arith.constant 0 : index
    %150 = vector.load %arg9[%c0_163, %c0_164] : memref<64x128xf32, #tpu.memory_space<vmem>>, vector<64x128xf32>
    tpu.vector_store %arg9[%c0_163, %c0_164], %149 {strides = array<i32>} : memref<64x128xf32, #tpu.memory_space<vmem>>, vector<64x128xf32>,
    %c1_165 = arith.constant 1 : index
    %c2_166 = arith.constant 2 : index
    %c0_167 = arith.constant 0 : index
    %c0_168 = arith.constant 0 : index
    %151 = vector.load %arg8[%c1_165, %c2_166, %c0_167, %c0_168] : memref<3x6x16x128xf32, #tpu.memory_space<vmem>>, vector<1x4x16x128xf32>
    %152 = vector.shape_cast %151 : vector<1x4x16x128xf32> to vector<4x16x128xf32>
    %153 = vector.shape_cast %152 : vector<4x16x128xf32> to vector<64x128xf32>
    %c11 = arith.constant 11 : index
    %c0_169 = arith.constant 0 : index
    %c0_170 = arith.constant 0 : index
    %154 = vector.load %arg4[%c11, %c0_169, %c0_170] : memref<16x128x128xf32, #tpu.memory_space<vmem>>, vector<1x128x128xf32>
    %155 = vector.shape_cast %154 : vector<1x128x128xf32> to vector<128x128xf32>
    %cst_171 = arith.constant dense<0.000000e+00> : vector<64x128xf32>
    %156 = tpu.matmul %153, %155, %cst_171 {dimension_numbers = #tpu.dot_dimension_numbers<[1], [0], [0], [1], [0, 0, 1, 1], [], []>} : vector<64x128xf32>, vector<128x128xf32>, vector<64x128xf32> -> vector<64x128xf32>
    %c0_172 = arith.constant 0 : index
    %c0_173 = arith.constant 0 : index
    %157 = vector.load %arg9[%c0_172, %c0_173] : memref<64x128xf32, #tpu.memory_space<vmem>>, vector<64x128xf32>
    %158 = arith.addf %157, %156 : vector<64x128xf32>
    %c0_174 = arith.constant 0 : index
    %c0_175 = arith.constant 0 : index
    %159 = vector.load %arg9[%c0_174, %c0_175] : memref<64x128xf32, #tpu.memory_space<vmem>>, vector<64x128xf32>
    tpu.vector_store %arg9[%c0_174, %c0_175], %158 {strides = array<i32>} : memref<64x128xf32, #tpu.memory_space<vmem>>, vector<64x128xf32>,
    %c0_176 = arith.constant 0 : index
    %c0_177 = arith.constant 0 : index
    %160 = vector.load %arg9[%c0_176, %c0_177] : memref<64x128xf32, #tpu.memory_space<vmem>>, vector<64x128xf32>
    %161 = vector.broadcast %43 : vector<1x128xf32> to vector<64x128xf32>
    %162 = arith.addf %160, %161 : vector<64x128xf32>
    %163 = vector.shape_cast %162 : vector<64x128xf32> to vector<4x16x128xf32>
    %c0_178 = arith.constant 0 : index
    %c2_179 = arith.constant 2 : index
    %c0_180 = arith.constant 0 : index
    %c0_181 = arith.constant 0 : index
    %c0_182 = arith.constant 0 : index
    %164 = vector.load %arg6[%c0_178, %c2_179, %c0_180, %c0_181, %c0_182] : memref<1x4x4x16x128xf32, #tpu.memory_space<vmem>>, vector<1x1x4x16x128xf32>
    %165 = vector.shape_cast %164 : vector<1x1x4x16x128xf32> to vector<4x16x128xf32>
    %166 = vector.shape_cast %163 : vector<4x16x128xf32> to vector<1x1x4x16x128xf32>
    tpu.vector_store %arg6[%c0_178, %c2_179, %c0_180, %c0_181, %c0_182], %166 {strides = array<i32>} : memref<1x4x4x16x128xf32, #tpu.memory_space<vmem>>, vector<1x1x4x16x128xf32>,
    %c1_183 = arith.constant 1 : index
    %c1_184 = arith.constant 1 : index
    %c0_185 = arith.constant 0 : index
    %c0_186 = arith.constant 0 : index
    %167 = vector.load %arg8[%c1_183, %c1_184, %c0_185, %c0_186] : memref<3x6x16x128xf32, #tpu.memory_space<vmem>>, vector<1x4x16x128xf32>
    %168 = vector.shape_cast %167 : vector<1x4x16x128xf32> to vector<4x16x128xf32>
    %169 = vector.shape_cast %168 : vector<4x16x128xf32> to vector<64x128xf32>
    %c12 = arith.constant 12 : index
    %c0_187 = arith.constant 0 : index
    %c0_188 = arith.constant 0 : index
    %170 = vector.load %arg4[%c12, %c0_187, %c0_188] : memref<16x128x128xf32, #tpu.memory_space<vmem>>, vector<1x128x128xf32>
    %171 = vector.shape_cast %170 : vector<1x128x128xf32> to vector<128x128xf32>
    %cst_189 = arith.constant dense<0.000000e+00> : vector<64x128xf32>
    %172 = tpu.matmul %169, %171, %cst_189 {dimension_numbers = #tpu.dot_dimension_numbers<[1], [0], [0], [1], [0, 0, 1, 1], [], []>} : vector<64x128xf32>, vector<128x128xf32>, vector<64x128xf32> -> vector<64x128xf32>
    %c0_190 = arith.constant 0 : index
    %c0_191 = arith.constant 0 : index
    %173 = vector.load %arg9[%c0_190, %c0_191] : memref<64x128xf32, #tpu.memory_space<vmem>>, vector<64x128xf32>
    tpu.vector_store %arg9[%c0_190, %c0_191], %172 {strides = array<i32>} : memref<64x128xf32, #tpu.memory_space<vmem>>, vector<64x128xf32>,
    %c2_192 = arith.constant 2 : index
    %c1_193 = arith.constant 1 : index
    %c0_194 = arith.constant 0 : index
    %c0_195 = arith.constant 0 : index
    %174 = vector.load %arg8[%c2_192, %c1_193, %c0_194, %c0_195] : memref<3x6x16x128xf32, #tpu.memory_space<vmem>>, vector<1x4x16x128xf32>
    %175 = vector.shape_cast %174 : vector<1x4x16x128xf32> to vector<4x16x128xf32>
    %176 = vector.shape_cast %175 : vector<4x16x128xf32> to vector<64x128xf32>
    %c13 = arith.constant 13 : index
    %c0_196 = arith.constant 0 : index
    %c0_197 = arith.constant 0 : index
    %177 = vector.load %arg4[%c13, %c0_196, %c0_197] : memref<16x128x128xf32, #tpu.memory_space<vmem>>, vector<1x128x128xf32>
    %178 = vector.shape_cast %177 : vector<1x128x128xf32> to vector<128x128xf32>
    %cst_198 = arith.constant dense<0.000000e+00> : vector<64x128xf32>
    %179 = tpu.matmul %176, %178, %cst_198 {dimension_numbers = #tpu.dot_dimension_numbers<[1], [0], [0], [1], [0, 0, 1, 1], [], []>} : vector<64x128xf32>, vector<128x128xf32>, vector<64x128xf32> -> vector<64x128xf32>
    %c0_199 = arith.constant 0 : index
    %c0_200 = arith.constant 0 : index
    %180 = vector.load %arg9[%c0_199, %c0_200] : memref<64x128xf32, #tpu.memory_space<vmem>>, vector<64x128xf32>
    %181 = arith.addf %180, %179 : vector<64x128xf32>
    %c0_201 = arith.constant 0 : index
    %c0_202 = arith.constant 0 : index
    %182 = vector.load %arg9[%c0_201, %c0_202] : memref<64x128xf32, #tpu.memory_space<vmem>>, vector<64x128xf32>
    tpu.vector_store %arg9[%c0_201, %c0_202], %181 {strides = array<i32>} : memref<64x128xf32, #tpu.memory_space<vmem>>, vector<64x128xf32>,
    %c1_203 = arith.constant 1 : index
    %c2_204 = arith.constant 2 : index
    %c0_205 = arith.constant 0 : index
    %c0_206 = arith.constant 0 : index
    %183 = vector.load %arg8[%c1_203, %c2_204, %c0_205, %c0_206] : memref<3x6x16x128xf32, #tpu.memory_space<vmem>>, vector<1x4x16x128xf32>
    %184 = vector.shape_cast %183 : vector<1x4x16x128xf32> to vector<4x16x128xf32>
    %185 = vector.shape_cast %184 : vector<4x16x128xf32> to vector<64x128xf32>
    %c14 = arith.constant 14 : index
    %c0_207 = arith.constant 0 : index
    %c0_208 = arith.constant 0 : index
    %186 = vector.load %arg4[%c14, %c0_207, %c0_208] : memref<16x128x128xf32, #tpu.memory_space<vmem>>, vector<1x128x128xf32>
    %187 = vector.shape_cast %186 : vector<1x128x128xf32> to vector<128x128xf32>
    %cst_209 = arith.constant dense<0.000000e+00> : vector<64x128xf32>
    %188 = tpu.matmul %185, %187, %cst_209 {dimension_numbers = #tpu.dot_dimension_numbers<[1], [0], [0], [1], [0, 0, 1, 1], [], []>} : vector<64x128xf32>, vector<128x128xf32>, vector<64x128xf32> -> vector<64x128xf32>
    %c0_210 = arith.constant 0 : index
    %c0_211 = arith.constant 0 : index
    %189 = vector.load %arg9[%c0_210, %c0_211] : memref<64x128xf32, #tpu.memory_space<vmem>>, vector<64x128xf32>
    %190 = arith.addf %189, %188 : vector<64x128xf32>
    %c0_212 = arith.constant 0 : index
    %c0_213 = arith.constant 0 : index
    %191 = vector.load %arg9[%c0_212, %c0_213] : memref<64x128xf32, #tpu.memory_space<vmem>>, vector<64x128xf32>
    tpu.vector_store %arg9[%c0_212, %c0_213], %190 {strides = array<i32>} : memref<64x128xf32, #tpu.memory_space<vmem>>, vector<64x128xf32>,
    %c2_214 = arith.constant 2 : index
    %c2_215 = arith.constant 2 : index
    %c0_216 = arith.constant 0 : index
    %c0_217 = arith.constant 0 : index
    %192 = vector.load %arg8[%c2_214, %c2_215, %c0_216, %c0_217] : memref<3x6x16x128xf32, #tpu.memory_space<vmem>>, vector<1x4x16x128xf32>
    %193 = vector.shape_cast %192 : vector<1x4x16x128xf32> to vector<4x16x128xf32>
    %194 = vector.shape_cast %193 : vector<4x16x128xf32> to vector<64x128xf32>
    %c15 = arith.constant 15 : index
    %c0_218 = arith.constant 0 : index
    %c0_219 = arith.constant 0 : index
    %195 = vector.load %arg4[%c15, %c0_218, %c0_219] : memref<16x128x128xf32, #tpu.memory_space<vmem>>, vector<1x128x128xf32>
    %196 = vector.shape_cast %195 : vector<1x128x128xf32> to vector<128x128xf32>
    %cst_220 = arith.constant dense<0.000000e+00> : vector<64x128xf32>
    %197 = tpu.matmul %194, %196, %cst_220 {dimension_numbers = #tpu.dot_dimension_numbers<[1], [0], [0], [1], [0, 0, 1, 1], [], []>} : vector<64x128xf32>, vector<128x128xf32>, vector<64x128xf32> -> vector<64x128xf32>
    %c0_221 = arith.constant 0 : index
    %c0_222 = arith.constant 0 : index
    %198 = vector.load %arg9[%c0_221, %c0_222] : memref<64x128xf32, #tpu.memory_space<vmem>>, vector<64x128xf32>
    %199 = arith.addf %198, %197 : vector<64x128xf32>
    %c0_223 = arith.constant 0 : index
    %c0_224 = arith.constant 0 : index
    %200 = vector.load %arg9[%c0_223, %c0_224] : memref<64x128xf32, #tpu.memory_space<vmem>>, vector<64x128xf32>
    tpu.vector_store %arg9[%c0_223, %c0_224], %199 {strides = array<i32>} : memref<64x128xf32, #tpu.memory_space<vmem>>, vector<64x128xf32>,
    %c0_225 = arith.constant 0 : index
    %c0_226 = arith.constant 0 : index
    %201 = vector.load %arg9[%c0_225, %c0_226] : memref<64x128xf32, #tpu.memory_space<vmem>>, vector<64x128xf32>
    %202 = vector.broadcast %43 : vector<1x128xf32> to vector<64x128xf32>
    %203 = arith.addf %201, %202 : vector<64x128xf32>
    %204 = vector.shape_cast %203 : vector<64x128xf32> to vector<4x16x128xf32>
    %c0_227 = arith.constant 0 : index
    %c3_228 = arith.constant 3 : index
    %c0_229 = arith.constant 0 : index
    %c0_230 = arith.constant 0 : index
    %c0_231 = arith.constant 0 : index
    %205 = vector.load %arg6[%c0_227, %c3_228, %c0_229, %c0_230, %c0_231] : memref<1x4x4x16x128xf32, #tpu.memory_space<vmem>>, vector<1x1x4x16x128xf32>
    %206 = vector.shape_cast %205 : vector<1x1x4x16x128xf32> to vector<4x16x128xf32>
    %207 = vector.shape_cast %204 : vector<4x16x128xf32> to vector<1x1x4x16x128xf32>
    tpu.vector_store %arg6[%c0_227, %c3_228, %c0_229, %c0_230, %c0_231], %207 {strides = array<i32>} : memref<1x4x4x16x128xf32, #tpu.memory_space<vmem>>, vector<1x1x4x16x128xf32>,
    return
  }
  func.func @transform_1(%arg0: i32, %arg1: i32, %arg2: i32) -> (i32, i32, i32) {
    %c0_i32 = arith.constant 0 : i32
    %c0_i32_0 = arith.constant 0 : i32
    %c0_i32_1 = arith.constant 0 : i32
    %c0_i32_2 = arith.constant 0 : i32
    return %c0_i32, %c0_i32_0, %c0_i32_1 : i32, i32, i32
  }
  func.func @transform_2(%arg0: i32, %arg1: i32, %arg2: i32) -> (i32, i32) {
    %c0_i32 = arith.constant 0 : i32
    %c0_i32_0 = arith.constant 0 : i32
    %c0_i32_1 = arith.constant 0 : i32
    return %c0_i32, %c0_i32_0 : i32, i32
  }
  func.func @transform_3(%arg0: i32, %arg1: i32, %arg2: i32) -> (i32, i32, i32, i32, i32) {
    %c4_i32 = arith.constant 4 : i32
    %0 = arith.muli %arg1, %c4_i32 : i32
    %1 = arith.addi %0, %arg2 : i32
    %c0_i32 = arith.constant 0 : i32
    %c0_i32_0 = arith.constant 0 : i32
    %c0_i32_1 = arith.constant 0 : i32
    %c0_i32_2 = arith.constant 0 : i32
    return %arg0, %c0_i32, %1, %c0_i32_0, %c0_i32_1 : i32, i32, i32, i32, i32
  }
}

</mosaic_0001>

<llo_original>
// kernel: upsample_forward.1
$region0: #{upsample_forward.1}
  #allocation0 [shape = 'u32[]', space=smem, size = 0x4, offset = 0x4, fixed_abs, tag = 'smem constant byte address 0x4 - core index']
  #allocation1 [shape = 'u32[144,128]{1,0:T(1,128)}', space=vmem, size = 0x12000, scoped, tag = 'internal scratch']
  #allocation2 [shape = 'f32[2,6,24,128]{3,2,1,0:T(8,128)}', space=vmem, size = 0x24000, scoped, tag = 'scratch operand']
  #allocation3 [shape = 'f32[3,6,16,128]{3,2,1,0:T(8,128)}', space=vmem, size = 0x24000, scoped, tag = 'scratch operand']
  #allocation4 [shape = 'f32[64,128]{1,0:T(8,128)}', space=vmem, size = 0x8000, scoped, tag = 'scratch operand']
  #allocation5 [shape = 's32[2]{0}', space=sflag, size = 0x8, scoped, tag = 'scratch operand']
  #allocation7 [shape = 's32[]', space=sflag, size = 0x4, offset = 0, fixed_abs, tag = 'sflag constant byte address 0x0 - dummy sync flag']
  #allocation8 [shape = 's32[]', space=sflag, size = 0x4, offset = 0, fixed_abs, tag = 'sflag constant byte address 0x0 - dummy sync flag']
  %s0 = inlined_call_operand.vmem [shape: f32[2,18,24,128], index: 0, kind: input, shape index: {}]
  %s1 = inlined_call_operand.vmem [shape: f32[16,128,128], index: 1, kind: input, shape index: {}]
  %s2 = inlined_call_operand.vmem [shape: f32[1,128], index: 2, kind: input, shape index: {}]
  %s3 = inlined_call_operand.vmem [shape: f32[2,4,16,16,128], index: 3, kind: output, shape index: {}]
  %s4 = sld [smem:[#allocation0]]
  $region151: #{upsample_forward.1} parent=0
    _
  %s6 = ssub.s32 1, %s4
  %s7 = scalar_select 0, %s6, %s4
  $region1: #{upsample_forward.1} parent=0
    #allocation6 [shape = 'u8[262144]{0}', space=vmem, size = 0x40000, scoped, tag = 'output window, operand 0']
    loop: start=0, step=1, limit=10
    $region2: #{upsample_forward.1} parent=1 // loop_pre_header
      _
    $region3: #{upsample_forward.1} parent=1 // loop_header
      %s9 = sphi 0, %s13
      %p10 = scmp.ge.s32.totalorder %s9, 10
      %s16 = sphi 0, %s35
      %s17 = sphi 0, %s31
      %s18 = sphi 0, %s27
      %s19 = sphi 0, %s16
      %s20 = sphi 0, %s17
      %s21 = sphi 0, %s18
      %s22 = sphi 0, %s19
      %s23 = sphi 0, %s20
      %s24 = sphi 0, %s21
      %s36 = sphi 0, %s36
      %s38 = sphi 0, %s36
      %s39 = sphi 0, %s38
      %s53 = sphi 0, %s39
      %s57 = sphi 0, %s57
      %s59 = sphi 0, %s57
      %s60 = sphi 0, %s59
      %s74 = sphi 0, %s60
      %s86 = sphi 0, %s88
      %s89 = sphi 0, %s86
      %s90 = sphi 0, %s89
      %s106 = sphi 0, %s90
    $region4: #{upsample_forward.1} parent=1 // loop_header_branch
      %12 = sbr.rel (%p10) target = $region8
    $region5: #{upsample_forward.1} parent=1 // loop_body
      %s14 = ssub.s32 %s9, 1
      %s15 = ssub.s32 %s9, 2
      %s25 = sadd.s32 1, %s18
      %p26 = scmp.ge.s32.totalorder %s25, 4
      %s27 = scalar_select %p26, 0, %s25
      %s28 = sadd.s32 1, %s17
      %s29 = scalar_select %p26, %s28, %s17
      %p30 = scmp.ge.s32.totalorder %s29, 1
      %s31 = scalar_select %p30, 0, %s29
      %s32 = sadd.s32 1, %s16
      %s33 = scalar_select %p30, %s32, %s16
      %p34 = scmp.ge.s32.totalorder %s33, 2
      %s35 = scalar_select %p34, 0, %s33
      %s37 = sadd.s32 %s36, 1
      %p40 = scmp.eq.s32.totalorder %s9, 7
      %p41 = scmp.ne.s32.totalorder %s36, %s38
      %p42 = scmp.eq.s32.totalorder %s9, 0
      %p43 = por %p41, %p42
      %p44 = scmp.ne.s32.totalorder %s36, %s38
      %p45 = scmp.eq.s32.totalorder %s14, 7
      %p46 = por %p44, %p45
      %p47 = scmp.ne.s32.totalorder %s38, %s39
      %p48 = scmp.eq.s32.totalorder %s14, 0
      %p49 = por %p47, %p48
      %p50 = scmp.ne.s32.totalorder %s38, %s39
      %p51 = scmp.eq.s32.totalorder %s15, 7
      %p52 = por %p50, %p51
      %p54 = scmp.ne.s32.totalorder %s39, %s53
      %p55 = scmp.eq.s32.totalorder %s15, 0
      %p56 = por %p54, %p55
      %s58 = sadd.s32 %s57, 1
      %p61 = scmp.eq.s32.totalorder %s9, 7
      %p62 = scmp.ne.s32.totalorder %s57, %s59
      %p63 = scmp.eq.s32.totalorder %s9, 0
      %p64 = por %p62, %p63
      %p65 = scmp.ne.s32.totalorder %s57, %s59
      %p66 = scmp.eq.s32.totalorder %s14, 7
      %p67 = por %p65, %p66
      %p68 = scmp.ne.s32.totalorder %s59, %s60
      %p69 = scmp.eq.s32.totalorder %s14, 0
      %p70 = por %p68, %p69
      %p71 = scmp.ne.s32.totalorder %s59, %s60
      %p72 = scmp.eq.s32.totalorder %s15, 7
      %p73 = por %p71, %p72
      %p75 = scmp.ne.s32.totalorder %s60, %s74
      %p76 = scmp.eq.s32.totalorder %s15, 0
      %p77 = por %p75, %p76
      %s78 = smul.u32 %s17, 4
      %s79 = sadd.s32 %s78, %s18
      %s80 = smul.u32 %s31, 4
      %s81 = sadd.s32 %s80, %s27
      %s82 = ssub.s32 %s16, %s35
      %s83 = ssub.s32 %s79, %s81
      %s84 = sor.u32 %s82, %s83
      %p85 = scmp.eq.s32.totalorder %s84, 0
      %s87 = sadd.s32 %s86, 1
      %s88 = scalar_select %p85, %s86, %s87
      %p91 = pneg %p85
      %p92 = scmp.eq.s32.totalorder %s9, 7
      %p93 = por %p91, %p92
      %p94 = scmp.ne.s32.totalorder %s86, %s89
      %p95 = scmp.eq.s32.totalorder %s9, 0
      %p96 = por %p94, %p95
      %p97 = scmp.ne.s32.totalorder %s86, %s89
      %p98 = scmp.eq.s32.totalorder %s14, 7
      %p99 = por %p97, %p98
      %p100 = scmp.ne.s32.totalorder %s89, %s90
      %p101 = scmp.eq.s32.totalorder %s14, 0
      %p102 = por %p100, %p101
      %p103 = scmp.ne.s32.totalorder %s89, %s90
      %p104 = scmp.eq.s32.totalorder %s15, 7
      %p105 = por %p103, %p104
      %p107 = scmp.ne.s32.totalorder %s90, %s106
      %p108 = scmp.eq.s32.totalorder %s15, 0
      %p109 = por %p107, %p108
      %p110 = scmp.le.s32.totalorder 1, %s9
      %p111 = scmp.lt.s32.totalorder %s9, 9
      %p112 = pnand %p110, %p111
      %p113 = pneg %p112
      // Predicated region
      $region9: #{upsample_forward.1} parent=5 // pred_check
        _
      $region10: #{upsample_forward.1} parent=5 // pred_check_branch
        %115 = sbr.rel (%p112) target = $region12
      $region11: #{upsample_forward.1} parent=5 // pred_region
        %s116 = ssub.s32 %s9, 1
        // Predicated region
        $region13: #{upsample_forward.1} parent=11 // pred_check
          %p117 = pneg %p49
        $region14: #{upsample_forward.1} parent=11 // pred_check_branch
          %119 = sbr.rel (%p117) target = $region16
        $region15: #{upsample_forward.1} parent=11 // pred_region
          _
        $region16: #{upsample_forward.1} parent=11 // pred_fallthru
          _
        // Predicated region
        $region17: #{upsample_forward.1} parent=11 // pred_check
          %p120 = pneg %p70
        $region18: #{upsample_forward.1} parent=11 // pred_check_branch
          %122 = sbr.rel (%p120) target = $region20
        $region19: #{upsample_forward.1} parent=11 // pred_region
          _
        $region20: #{upsample_forward.1} parent=11 // pred_fallthru
          _
      $region12: #{upsample_forward.1} parent=5 // pred_fallthru
        _
      %p123 = scmp.lt.s32.totalorder %s9, 8
      // Predicated region
      $region21: #{upsample_forward.1} parent=5 // pred_check
        %p124 = pneg %p123
      $region22: #{upsample_forward.1} parent=5 // pred_check_branch
        %126 = sbr.rel (%p124) target = $region24
      $region23: #{upsample_forward.1} parent=5 // pred_region
        _
      $region24: #{upsample_forward.1} parent=5 // pred_fallthru
        _
      %p127 = scmp.le.s32.totalorder 1, %s9
      %p128 = scmp.lt.s32.totalorder %s9, 9
      %p129 = pnand %p127, %p128
      %p130 = pneg %p129
      // Predicated region
      $region25: #{upsample_forward.1} parent=5 // pred_check
        _
      $region26: #{upsample_forward.1} parent=5 // pred_check_branch
        %132 = sbr.rel (%p129) target = $region28
      $region27: #{upsample_forward.1} parent=5 // pred_region
        %s133 = ssub.s32 %s9, 1
        %p134 = pneg %p49
        %p135 = pneg %p46
        %p136 = pneg %p70
        %p137 = pneg %p67
        %p138 = pneg %p102
        %p139 = pneg %p99
        %s140 = sand.u32 %s89, 1
        %s141 = sand.u32 %s89, 1
        %s142 = smul.addr %s141, 256
        %s143 = scalar_lea.vmem [#allocation6], %s142
        %s144 = smul.u32 %s20, 4
        %s145 = sadd.s32 %s144, %s21
        %s146 = smul.u32 4, %s145
        %s147 = smul.u32 %s20, 4
        %s148 = sadd.s32 %s147, %s21
        %p149 = scmp.lt.s32.totalorder %s21, 0
        %s150 = ssub.s32 0, %s21
        %s151 = scalar_select %p149, %s150, %s21
        %s152 = sand.u32 %s151, 1
        %s153 = ssub.s32 0, %s152
        %s154 = scalar_select %p149, %s153, %s152
        %p155 = scmp.ne.s32.totalorder %s154, 0
        %p156 = scmp.lt.s32.totalorder %s154, 0
        %p157 = pnand %p156, %p155
        %p158 = pneg %p157
        %s159 = sadd.s32 %s154, 2
        %s160 = scalar_select %p158, %s159, %s154
        %p161 = scmp.eq.s32.totalorder %s21, 0
        // Predicated region
        $region29: #{upsample_forward.1} parent=27 // pred_check
          %p162 = pneg %p161
        $region30: #{upsample_forward.1} parent=27 // pred_check_branch
          %164 = sbr.rel (%p162) target = $region32
        $region31: #{upsample_forward.1} parent=27 // pred_region
          %s165 = smul.u32 %s148, 4
          %s166 = smul.u32 %s165, 24
          %s167 = smul.u32 %s19, 432
          %s168 = sadd.s32 %s166, %s167
          %s169 = scalar_lea.vmem %s0, %s168
          %s170 = smul.u32 %s160, 144
          %s171 = scalar_lea.vmem [#allocation2], %s170
          %s172 = scalar_lea.sflag [#allocation5], %s160
          %p174 = scmp.lt.u32.totalorder 144, 8
          %p175 = pneg %p174
          // Predicated region
          $region33: #{upsample_forward.1} parent=31 // pred_check
            _
          $region34: #{upsample_forward.1} parent=31 // pred_check_branch
            %177 = sbr.rel (%p174) target = $region36
          $region35: #{upsample_forward.1} parent=31 // pred_region
            %s192 = sand.u32 144, 7
            %p193 = scmp.eq.s32.totalorder %s192, 0
            // Predicated region
            $region48: #{upsample_forward.1} parent=35 // pred_check
              %p194 = pneg %p193
            $region49: #{upsample_forward.1} parent=35 // pred_check_branch
              %196 = sbr.rel (%p194) target = $region51
            $region50: #{upsample_forward.1} parent=35 // pred_region
              loop: start=0, step=1, limit=1
              $region52: #{upsample_forward.1} parent=50 // loop_pre_header
                _
              $region53: #{upsample_forward.1} parent=50 // loop_header
                %s198 = sphi 0, %s202
                %p199 = scmp.ge.s32.totalorder %s198, 1
                %s203 = sphi %s169, %s169
                %s204 = sphi %s171, %s171
              $region54: #{upsample_forward.1} parent=50 // loop_header_branch
                %201 = sbr.rel (%p199) target = $region58
              $region55: #{upsample_forward.1} parent=50 // loop_body
                %v205 = vld [vmem:[%s203] sm:$0xff]
                %206 = vst [vmem:[%s204] sm:$0xff] %v205
                %v207 = vld [vmem:[%s203 + $0x8] sm:$0xff]
                %208 = vst [vmem:[%s204 + $0x8] sm:$0xff] %v207
                %v209 = vld [vmem:[%s203 + $0x10] sm:$0xff]
                %210 = vst [vmem:[%s204 + $0x10] sm:$0xff] %v209
                %v211 = vld [vmem:[%s203 + $0x18] sm:$0xff]
                %212 = vst [vmem:[%s204 + $0x18] sm:$0xff] %v211
                %v213 = vld [vmem:[%s203 + $0x20] sm:$0xff]
                %214 = vst [vmem:[%s204 + $0x20] sm:$0xff] %v213
                %v215 = vld [vmem:[%s203 + $0x28] sm:$0xff]
                %216 = vst [vmem:[%s204 + $0x28] sm:$0xff] %v215
                %v217 = vld [vmem:[%s203 + $0x30] sm:$0xff]
                %218 = vst [vmem:[%s204 + $0x30] sm:$0xff] %v217
                %v219 = vld [vmem:[%s203 + $0x38] sm:$0xff]
                %220 = vst [vmem:[%s204 + $0x38] sm:$0xff] %v219
                %v221 = vld [vmem:[%s203 + $0x40] sm:$0xff]
                %222 = vst [vmem:[%s204 + $0x40] sm:$0xff] %v221
                %v223 = vld [vmem:[%s203 + $0x48] sm:$0xff]
                %224 = vst [vmem:[%s204 + $0x48] sm:$0xff] %v223
                %v225 = vld [vmem:[%s203 + $0x50] sm:$0xff]
                %226 = vst [vmem:[%s204 + $0x50] sm:$0xff] %v225
                %v227 = vld [vmem:[%s203 + $0x58] sm:$0xff]
                %228 = vst [vmem:[%s204 + $0x58] sm:$0xff] %v227
                %v229 = vld [vmem:[%s203 + $0x60] sm:$0xff]
                %230 = vst [vmem:[%s204 + $0x60] sm:$0xff] %v229
                %v231 = vld [vmem:[%s203 + $0x68] sm:$0xff]
                %232 = vst [vmem:[%s204 + $0x68] sm:$0xff] %v231
                %v233 = vld [vmem:[%s203 + $0x70] sm:$0xff]
                %234 = vst [vmem:[%s204 + $0x70] sm:$0xff] %v233
                %v235 = vld [vmem:[%s203 + $0x78] sm:$0xff]
                %236 = vst [vmem:[%s204 + $0x78] sm:$0xff] %v235
                %v237 = vld [vmem:[%s203 + $0x80] sm:$0xff]
                %238 = vst [vmem:[%s204 + $0x80] sm:$0xff] %v237
                %v239 = vld [vmem:[%s203 + $0x88] sm:$0xff]
                %240 = vst [vmem:[%s204 + $0x88] sm:$0xff] %v239
              $region56: #{upsample_forward.1} parent=50 // loop_footer
                %s202 = sadd.s32 1, %s198
              $region57: #{upsample_forward.1} parent=50 // loop_footer_branch
                %197 = sbr.rel target = $region53
              $region58: #{upsample_forward.1} parent=50 // loop_exit
                _
            $region51: #{upsample_forward.1} parent=35 // pred_fallthru
              _
            %p241 = pneg %p193
            // Predicated region
            $region59: #{upsample_forward.1} parent=35 // pred_check
              _
            $region60: #{upsample_forward.1} parent=35 // pred_check_branch
              %243 = sbr.rel (%p193) target = $region62
            $region61: #{upsample_forward.1} parent=35 // pred_region
              %s244 = sand.u32 144, 7
            $region62: #{upsample_forward.1} parent=35 // pred_fallthru
              _
          $region36: #{upsample_forward.1} parent=31 // pred_fallthru
            _
          // Predicated region
          $region37: #{upsample_forward.1} parent=31 // pred_check
            %p178 = pneg %p174
          $region38: #{upsample_forward.1} parent=31 // pred_check_branch
            %180 = sbr.rel (%p178) target = $region40
          $region39: #{upsample_forward.1} parent=31 // pred_region
            %s181 = sshllo.u32 0, 144
            loop: start=0, step=1, limit=1
            $region41: #{upsample_forward.1} parent=39 // loop_pre_header
              _
            $region42: #{upsample_forward.1} parent=39 // loop_header
              %s183 = sphi 0, %s187
              %p184 = scmp.ge.s32.totalorder %s183, 1
              %s188 = sphi %s169, %s169
              %s189 = sphi %s171, %s171
            $region43: #{upsample_forward.1} parent=39 // loop_header_branch
              %186 = sbr.rel (%p184) target = $region47
            $region44: #{upsample_forward.1} parent=39 // loop_body
              %v190 = vld [vmem:[%s188] sm:%s181]
              %191 = vst [vmem:[%s189] sm:%s181] %v190
            $region45: #{upsample_forward.1} parent=39 // loop_footer
              %s187 = sadd.s32 1, %s183
            $region46: #{upsample_forward.1} parent=39 // loop_footer_branch
              %182 = sbr.rel target = $region42
            $region47: #{upsample_forward.1} parent=39 // loop_exit
              _
          $region40: #{upsample_forward.1} parent=31 // pred_fallthru
            _
          // Predicated region
          $region63: #{upsample_forward.1} parent=31 // pred_check
            _
          $region64: #{upsample_forward.1} parent=31 // pred_check_branch
            %247 = sbr.rel (0) target = $region66
          $region65: #{upsample_forward.1} parent=31 // pred_region
            %248 = vsyncadd %s172, 2304
          $region66: #{upsample_forward.1} parent=31 // pred_fallthru
            _
        $region32: #{upsample_forward.1} parent=27 // pred_fallthru
          _
        %s249 = scalar_lea.sflag [#allocation5], %s160
        %s250 = smul.u32 6, 24
        %s251 = smul.u32 %s250, 1
        %s252 = sshll.u32 %s251, 4
        %253 = dma.done %s249, %s252
        %s254 = sadd.s32 %s21, 1
        %p255 = scmp.lt.s32.totalorder %s254, 4
        // Predicated region
        $region67: #{upsample_forward.1} parent=27 // pred_check
          %p256 = pneg %p255
        $region68: #{upsample_forward.1} parent=27 // pred_check_branch
          %258 = sbr.rel (%p256) target = $region70
        $region69: #{upsample_forward.1} parent=27 // pred_region
          %s259 = sadd.s32 %s148, 1
          %s260 = ssub.s32 1, %s160
          %s261 = smul.u32 %s259, 4
          %s262 = smul.u32 %s261, 24
          %s263 = smul.u32 %s19, 432
          %s264 = sadd.s32 %s262, %s263
          %s265 = scalar_lea.vmem %s0, %s264
          %s266 = smul.u32 %s260, 144
          %s267 = scalar_lea.vmem [#allocation2], %s266
          %s268 = scalar_lea.sflag [#allocation5], %s260
          %p270 = scmp.lt.u32.totalorder 144, 8
          %p271 = pneg %p270
          // Predicated region
          $region71: #{upsample_forward.1} parent=69 // pred_check
            _
          $region72: #{upsample_forward.1} parent=69 // pred_check_branch
            %273 = sbr.rel (%p270) target = $region74
          $region73: #{upsample_forward.1} parent=69 // pred_region
            %s288 = sand.u32 144, 7
            %p289 = scmp.eq.s32.totalorder %s288, 0
            // Predicated region
            $region86: #{upsample_forward.1} parent=73 // pred_check
              %p290 = pneg %p289
            $region87: #{upsample_forward.1} parent=73 // pred_check_branch
              %292 = sbr.rel (%p290) target = $region89
            $region88: #{upsample_forward.1} parent=73 // pred_region
              loop: start=0, step=1, limit=1
              $region90: #{upsample_forward.1} parent=88 // loop_pre_header
                _
              $region91: #{upsample_forward.1} parent=88 // loop_header
                %s294 = sphi 0, %s298
                %p295 = scmp.ge.s32.totalorder %s294, 1
                %s299 = sphi %s265, %s265
                %s300 = sphi %s267, %s267
              $region92: #{upsample_forward.1} parent=88 // loop_header_branch
                %297 = sbr.rel (%p295) target = $region96
              $region93: #{upsample_forward.1} parent=88 // loop_body
                %v301 = vld [vmem:[%s299] sm:$0xff]
                %302 = vst [vmem:[%s300] sm:$0xff] %v301
                %v303 = vld [vmem:[%s299 + $0x8] sm:$0xff]
                %304 = vst [vmem:[%s300 + $0x8] sm:$0xff] %v303
                %v305 = vld [vmem:[%s299 + $0x10] sm:$0xff]
                %306 = vst [vmem:[%s300 + $0x10] sm:$0xff] %v305
                %v307 = vld [vmem:[%s299 + $0x18] sm:$0xff]
                %308 = vst [vmem:[%s300 + $0x18] sm:$0xff] %v307
                %v309 = vld [vmem:[%s299 + $0x20] sm:$0xff]
                %310 = vst [vmem:[%s300 + $0x20] sm:$0xff] %v309
                %v311 = vld [vmem:[%s299 + $0x28] sm:$0xff]
                %312 = vst [vmem:[%s300 + $0x28] sm:$0xff] %v311
                %v313 = vld [vmem:[%s299 + $0x30] sm:$0xff]
                %314 = vst [vmem:[%s300 + $0x30] sm:$0xff] %v313
                %v315 = vld [vmem:[%s299 + $0x38] sm:$0xff]
                %316 = vst [vmem:[%s300 + $0x38] sm:$0xff] %v315
                %v317 = vld [vmem:[%s299 + $0x40] sm:$0xff]
                %318 = vst [vmem:[%s300 + $0x40] sm:$0xff] %v317
                %v319 = vld [vmem:[%s299 + $0x48] sm:$0xff]
                %320 = vst [vmem:[%s300 + $0x48] sm:$0xff] %v319
                %v321 = vld [vmem:[%s299 + $0x50] sm:$0xff]
                %322 = vst [vmem:[%s300 + $0x50] sm:$0xff] %v321
                %v323 = vld [vmem:[%s299 + $0x58] sm:$0xff]
                %324 = vst [vmem:[%s300 + $0x58] sm:$0xff] %v323
                %v325 = vld [vmem:[%s299 + $0x60] sm:$0xff]
                %326 = vst [vmem:[%s300 + $0x60] sm:$0xff] %v325
                %v327 = vld [vmem:[%s299 + $0x68] sm:$0xff]
                %328 = vst [vmem:[%s300 + $0x68] sm:$0xff] %v327
                %v329 = vld [vmem:[%s299 + $0x70] sm:$0xff]
                %330 = vst [vmem:[%s300 + $0x70] sm:$0xff] %v329
                %v331 = vld [vmem:[%s299 + $0x78] sm:$0xff]
                %332 = vst [vmem:[%s300 + $0x78] sm:$0xff] %v331
                %v333 = vld [vmem:[%s299 + $0x80] sm:$0xff]
                %334 = vst [vmem:[%s300 + $0x80] sm:$0xff] %v333
                %v335 = vld [vmem:[%s299 + $0x88] sm:$0xff]
                %336 = vst [vmem:[%s300 + $0x88] sm:$0xff] %v335
              $region94: #{upsample_forward.1} parent=88 // loop_footer
                %s298 = sadd.s32 1, %s294
              $region95: #{upsample_forward.1} parent=88 // loop_footer_branch
                %293 = sbr.rel target = $region91
              $region96: #{upsample_forward.1} parent=88 // loop_exit
                _
            $region89: #{upsample_forward.1} parent=73 // pred_fallthru
              _
            %p337 = pneg %p289
            // Predicated region
            $region97: #{upsample_forward.1} parent=73 // pred_check
              _
            $region98: #{upsample_forward.1} parent=73 // pred_check_branch
              %339 = sbr.rel (%p289) target = $region100
            $region99: #{upsample_forward.1} parent=73 // pred_region
              %s340 = sand.u32 144, 7
            $region100: #{upsample_forward.1} parent=73 // pred_fallthru
              _
          $region74: #{upsample_forward.1} parent=69 // pred_fallthru
            _
          // Predicated region
          $region75: #{upsample_forward.1} parent=69 // pred_check
            %p274 = pneg %p270
          $region76: #{upsample_forward.1} parent=69 // pred_check_branch
            %276 = sbr.rel (%p274) target = $region78
          $region77: #{upsample_forward.1} parent=69 // pred_region
            %s277 = sshllo.u32 0, 144
            loop: start=0, step=1, limit=1
            $region79: #{upsample_forward.1} parent=77 // loop_pre_header
              _
            $region80: #{upsample_forward.1} parent=77 // loop_header
              %s279 = sphi 0, %s283
              %p280 = scmp.ge.s32.totalorder %s279, 1
              %s284 = sphi %s265, %s265
              %s285 = sphi %s267, %s267
            $region81: #{upsample_forward.1} parent=77 // loop_header_branch
              %282 = sbr.rel (%p280) target = $region85
            $region82: #{upsample_forward.1} parent=77 // loop_body
              %v286 = vld [vmem:[%s284] sm:%s277]
              %287 = vst [vmem:[%s285] sm:%s277] %v286
            $region83: #{upsample_forward.1} parent=77 // loop_footer
              %s283 = sadd.s32 1, %s279
            $region84: #{upsample_forward.1} parent=77 // loop_footer_branch
              %278 = sbr.rel target = $region80
            $region85: #{upsample_forward.1} parent=77 // loop_exit
              _
          $region78: #{upsample_forward.1} parent=69 // pred_fallthru
            _
          // Predicated region
          $region101: #{upsample_forward.1} parent=69 // pred_check
            _
          $region102: #{upsample_forward.1} parent=69 // pred_check_branch
            %343 = sbr.rel (0) target = $region104
          $region103: #{upsample_forward.1} parent=69 // pred_region
            %344 = vsyncadd %s268, 2304
          $region104: #{upsample_forward.1} parent=69 // pred_fallthru
            _
        $region70: #{upsample_forward.1} parent=27 // pred_fallthru
          _
        %s345 = smul.u32 %s160, 144
        %s346 = scalar_lea.vmem [#allocation2], %s345
        %v347 = vld [vmem:[%s346] sm:$0xff]
        %v348 = vld [vmem:[%s346 + $0x8] sm:$0xff]
        %v349 = vld [vmem:[%s346 + $0x18] sm:$0xff]
        %v350 = vld [vmem:[%s346 + $0x20] sm:$0xff]
        %v351 = vld [vmem:[%s346 + $0x30] sm:$0xff]
        %v352 = vld [vmem:[%s346 + $0x38] sm:$0xff]
        %v353 = vld [vmem:[%s346 + $0x48] sm:$0xff]
        %v354 = vld [vmem:[%s346 + $0x50] sm:$0xff]
        %v355 = vld [vmem:[%s346 + $0x60] sm:$0xff]
        %v356 = vld [vmem:[%s346 + $0x68] sm:$0xff]
        %v357 = vld [vmem:[%s346 + $0x78] sm:$0xff]
        %v358 = vld [vmem:[%s346 + $0x80] sm:$0xff]
        %359 = vst [vmem:[#allocation3] sm:$0xff] %v347
        %360 = vst [vmem:[#allocation3 + $0x8] sm:$0xff] %v348
        %361 = vst [vmem:[#allocation3 + $0x10] sm:$0xff] %v349
        %362 = vst [vmem:[#allocation3 + $0x18] sm:$0xff] %v350
        %363 = vst [vmem:[#allocation3 + $0x20] sm:$0xff] %v351
        %364 = vst [vmem:[#allocation3 + $0x28] sm:$0xff] %v352
        %365 = vst [vmem:[#allocation3 + $0x30] sm:$0xff] %v353
        %366 = vst [vmem:[#allocation3 + $0x38] sm:$0xff] %v354
        %367 = vst [vmem:[#allocation3 + $0x40] sm:$0xff] %v355
        %368 = vst [vmem:[#allocation3 + $0x48] sm:$0xff] %v356
        %369 = vst [vmem:[#allocation3 + $0x50] sm:$0xff] %v357
        %370 = vst [vmem:[#allocation3 + $0x58] sm:$0xff] %v358
        %v371 = vld [vmem:[%s346 + $0x1] sm:$0xff]
        %v372 = vld [vmem:[%s346 + $0x9] sm:$0xff]
        %v373 = vld [vmem:[%s346 + $0x19] sm:$0xff]
        %v374 = vld [vmem:[%s346 + $0x21] sm:$0xff]
        %v375 = vld [vmem:[%s346 + $0x31] sm:$0xff]
        %v376 = vld [vmem:[%s346 + $0x39] sm:$0xff]
        %v377 = vld [vmem:[%s346 + $0x49] sm:$0xff]
        %v378 = vld [vmem:[%s346 + $0x51] sm:$0xff]
        %v379 = vld [vmem:[%s346 + $0x61] sm:$0xff]
        %v380 = vld [vmem:[%s346 + $0x69] sm:$0xff]
        %v381 = vld [vmem:[%s346 + $0x79] sm:$0xff]
        %v382 = vld [vmem:[%s346 + $0x81] sm:$0xff]
        %s383 = scalar_lea.vmem [#allocation3], 96
        %384 = vst [vmem:[%s383] sm:$0xff] %v371
        %385 = vst [vmem:[%s383 + $0x8] sm:$0xff] %v372
        %386 = vst [vmem:[%s383 + $0x10] sm:$0xff] %v373
        %387 = vst [vmem:[%s383 + $0x18] sm:$0xff] %v374
        %388 = vst [vmem:[%s383 + $0x20] sm:$0xff] %v375
        %389 = vst [vmem:[%s383 + $0x28] sm:$0xff] %v376
        %390 = vst [vmem:[%s383 + $0x30] sm:$0xff] %v377
        %391 = vst [vmem:[%s383 + $0x38] sm:$0xff] %v378
        %392 = vst [vmem:[%s383 + $0x40] sm:$0xff] %v379
        %393 = vst [vmem:[%s383 + $0x48] sm:$0xff] %v380
        %394 = vst [vmem:[%s383 + $0x50] sm:$0xff] %v381
        %395 = vst [vmem:[%s383 + $0x58] sm:$0xff] %v382
        %v396 = vld [vmem:[%s346 + $0x2] sm:$0xff]
        %v397 = vld [vmem:[%s346 + $0xa] sm:$0xff]
        %v398 = vld [vmem:[%s346 + $0x1a] sm:$0xff]
        %v399 = vld [vmem:[%s346 + $0x22] sm:$0xff]
        %v400 = vld [vmem:[%s346 + $0x32] sm:$0xff]
        %v401 = vld [vmem:[%s346 + $0x3a] sm:$0xff]
        %v402 = vld [vmem:[%s346 + $0x4a] sm:$0xff]
        %v403 = vld [vmem:[%s346 + $0x52] sm:$0xff]
        %v404 = vld [vmem:[%s346 + $0x62] sm:$0xff]
        %v405 = vld [vmem:[%s346 + $0x6a] sm:$0xff]
        %v406 = vld [vmem:[%s346 + $0x7a] sm:$0xff]
        %v407 = vld [vmem:[%s346 + $0x82] sm:$0xff]
        %s408 = scalar_lea.vmem [#allocation3], 192
        %409 = vst [vmem:[%s408] sm:$0xff] %v396
        %410 = vst [vmem:[%s408 + $0x8] sm:$0xff] %v397
        %411 = vst [vmem:[%s408 + $0x10] sm:$0xff] %v398
        %412 = vst [vmem:[%s408 + $0x18] sm:$0xff] %v399
        %413 = vst [vmem:[%s408 + $0x20] sm:$0xff] %v400
        %414 = vst [vmem:[%s408 + $0x28] sm:$0xff] %v401
        %415 = vst [vmem:[%s408 + $0x30] sm:$0xff] %v402
        %416 = vst [vmem:[%s408 + $0x38] sm:$0xff] %v403
        %417 = vst [vmem:[%s408 + $0x40] sm:$0xff] %v404
        %418 = vst [vmem:[%s408 + $0x48] sm:$0xff] %v405
        %419 = vst [vmem:[%s408 + $0x50] sm:$0xff] %v406
        %420 = vst [vmem:[%s408 + $0x58] sm:$0xff] %v407
        %v421 = vld [vmem:[%s2] sm:$0x1]
        %v422 = vld [vmem:[#allocation3] sm:$0xff]
        %v423 = vld [vmem:[#allocation3 + $0x8] sm:$0xff]
        %v424 = vld [vmem:[#allocation3 + $0x10] sm:$0xff]
        %v425 = vld [vmem:[#allocation3 + $0x18] sm:$0xff]
        %v426 = vld [vmem:[#allocation3 + $0x20] sm:$0xff]
        %v427 = vld [vmem:[#allocation3 + $0x28] sm:$0xff]
        %v428 = vld [vmem:[#allocation3 + $0x30] sm:$0xff]
        %v429 = vld [vmem:[#allocation3 + $0x38] sm:$0xff]
        %v430 = vld [vmem:[%s1] sm:$0xff]
        %v431 = vld [vmem:[%s1 + $0x8] sm:$0xff]
        %v432 = vld [vmem:[%s1 + $0x10] sm:$0xff]
        %v433 = vld [vmem:[%s1 + $0x18] sm:$0xff]
        %v434 = vld [vmem:[%s1 + $0x20] sm:$0xff]
        %v435 = vld [vmem:[%s1 + $0x28] sm:$0xff]
        %v436 = vld [vmem:[%s1 + $0x30] sm:$0xff]
        %v437 = vld [vmem:[%s1 + $0x38] sm:$0xff]
        %v438 = vld [vmem:[%s1 + $0x40] sm:$0xff]
        %v439 = vld [vmem:[%s1 + $0x48] sm:$0xff]
        %v440 = vld [vmem:[%s1 + $0x50] sm:$0xff]
        %v441 = vld [vmem:[%s1 + $0x58] sm:$0xff]
        %v442 = vld [vmem:[%s1 + $0x60] sm:$0xff]
        %v443 = vld [vmem:[%s1 + $0x68] sm:$0xff]
        %v444 = vld [vmem:[%s1 + $0x70] sm:$0xff]
        %v445 = vld [vmem:[%s1 + $0x78] sm:$0xff]
        %446 = vmatprep.subr.mxu0 0.0
        %447 = vmatpush1.msra.mxu0 %v430
        %448 = vmatprep.subr.mxu0 0.0
        %449 = vmatpush1.msra.mxu0 %v431
        %450 = vmatprep.subr.mxu0 0.0
        %451 = vmatpush1.msra.mxu0 %v432
        %452 = vmatprep.subr.mxu0 0.0
        %453 = vmatpush1.msra.mxu0 %v433
        %454 = vmatprep.subr.mxu0 0.0
        %455 = vmatpush1.msra.mxu0 %v434
        %456 = vmatprep.subr.mxu0 0.0
        %457 = vmatpush1.msra.mxu0 %v435
        %458 = vmatprep.subr.mxu0 0.0
        %459 = vmatpush1.msra.mxu0 %v436
        %460 = vmatprep.subr.mxu0 0.0
        %461 = vmatpush1.msra.mxu0 %v437
        %462 = vmatprep.subr.mxu0 0.0
        %463 = vmatpush1.msra.mxu0 %v438
        %464 = vmatprep.subr.mxu0 0.0
        %465 = vmatpush1.msra.mxu0 %v439
        %466 = vmatprep.subr.mxu0 0.0
        %467 = vmatpush1.msra.mxu0 %v440
        %468 = vmatprep.subr.mxu0 0.0
        %469 = vmatpush1.msra.mxu0 %v441
        %470 = vmatprep.subr.mxu0 0.0
        %471 = vmatpush1.msra.mxu0 %v442
        %472 = vmatprep.subr.mxu0 0.0
        %473 = vmatpush1.msra.mxu0 %v443
        %474 = vmatprep.subr.mxu0 0.0
        %475 = vmatpush1.msra.mxu0 %v444
        %476 = vmatprep.subr.mxu0 0.0
        %477 = vmatpush1.msra.mxu0 %v445
        %478 = vmatprep.subr.mxu0 0.0
        %479 = vmatpush1.msra.mxu0 0.0
        %480 = vmatprep.subr.mxu0 0.0
        %481 = vmatpush1.msra.mxu0 0.0
        %482 = vmatprep.subr.mxu0 0.0
        %483 = vmatpush1.msra.mxu0 0.0
        %484 = vmatprep.subr.mxu0 0.0
        %485 = vmatpush1.msra.mxu0 0.0
        %486 = vmatprep.subr.mxu0 0.0
        %487 = vmatpush1.msra.mxu0 0.0
        %488 = vmatprep.subr.mxu0 0.0
        %489 = vmatpush1.msra.mxu0 0.0
        %490 = vmatprep.subr.mxu0 0.0
        %491 = vmatpush1.msra.mxu0 0.0
        %492 = vmatprep.subr.mxu0 0.0
        %493 = vmatpush1.msra.mxu0 0.0
        %494 = vmatprep.subr.mxu0 0.0
        %495 = vmatpush1.msra.mxu0 0.0
        %496 = vmatprep.subr.mxu0 0.0
        %497 = vmatpush1.msra.mxu0 0.0
        %498 = vmatprep.subr.mxu0 0.0
        %499 = vmatpush1.msra.mxu0 0.0
        %500 = vmatprep.subr.mxu0 0.0
        %501 = vmatpush1.msra.mxu0 0.0
        %502 = vmatprep.subr.mxu0 0.0
        %503 = vmatpush1.msra.mxu0 0.0
        %504 = vmatprep.subr.mxu0 0.0
        %505 = vmatpush1.msra.mxu0 0.0
        %506 = vmatprep.subr.mxu0 0.0
        %507 = vmatpush1.msra.mxu0 0.0
        %508 = vmatprep.subr.mxu0 0.0
        %509 = vmatpush1.msra.mxu0 0.0
        %510 = vmatprep.mubr.f32.mxu0 0.0
        %511 = vmatmul.mubr.f32.gmra.mrb[0].mxu0 %v422
        %v512 = vpop.f32.mrb[0].mxu0
        %v513 = vadd.f32 0.0, %v512
        %v514 = vpop.f32.mrb[0].mxu0
        %515 = vmatprep.mubr.f32.mxu0 0.0
        %516 = vmatmul.mubr.f32.gmra.mrb[0].mxu0 %v423
        %v517 = vpop.f32.mrb[0].mxu0
        %v518 = vadd.f32 0.0, %v517
        %v519 = vpop.f32.mrb[0].mxu0
        %520 = vmatprep.mubr.f32.mxu0 0.0
        %521 = vmatmul.mubr.f32.gmra.mrb[0].mxu0 %v424
        %v522 = vpop.f32.mrb[0].mxu0
        %v523 = vadd.f32 0.0, %v522
        %v524 = vpop.f32.mrb[0].mxu0
        %525 = vmatprep.mubr.f32.mxu0 0.0
        %526 = vmatmul.mubr.f32.gmra.mrb[0].mxu0 %v425
        %v527 = vpop.f32.mrb[0].mxu0
        %v528 = vadd.f32 0.0, %v527
        %v529 = vpop.f32.mrb[0].mxu0
        %530 = vmatprep.mubr.f32.mxu0 0.0
        %531 = vmatmul.mubr.f32.gmra.mrb[0].mxu0 %v426
        %v532 = vpop.f32.mrb[0].mxu0
        %v533 = vadd.f32 0.0, %v532
        %v534 = vpop.f32.mrb[0].mxu0
        %535 = vmatprep.mubr.f32.mxu0 0.0
        %536 = vmatmul.mubr.f32.gmra.mrb[0].mxu0 %v427
        %v537 = vpop.f32.mrb[0].mxu0
        %v538 = vadd.f32 0.0, %v537
        %v539 = vpop.f32.mrb[0].mxu0
        %540 = vmatprep.mubr.f32.mxu0 0.0
        %541 = vmatmul.mubr.f32.gmra.mrb[0].mxu0 %v428
        %v542 = vpop.f32.mrb[0].mxu0
        %v543 = vadd.f32 0.0, %v542
        %v544 = vpop.f32.mrb[0].mxu0
        %545 = vmatprep.mubr.f32.mxu0 0.0
        %546 = vmatmul.mubr.f32.gmra.mrb[0].mxu0 %v429
        %v547 = vpop.f32.mrb[0].mxu0
        %v548 = vadd.f32 0.0, %v547
        %v549 = vpop.f32.mrb[0].mxu0
        %550 = vdwg.mxu0
        %551 = vst [vmem:[#allocation4] sm:$0xff] %v513
        %552 = vst [vmem:[#allocation4 + $0x8] sm:$0xff] %v518
        %553 = vst [vmem:[#allocation4 + $0x10] sm:$0xff] %v523
        %554 = vst [vmem:[#allocation4 + $0x18] sm:$0xff] %v528
        %555 = vst [vmem:[#allocation4 + $0x20] sm:$0xff] %v533
        %556 = vst [vmem:[#allocation4 + $0x28] sm:$0xff] %v538
        %557 = vst [vmem:[#allocation4 + $0x30] sm:$0xff] %v543
        %558 = vst [vmem:[#allocation4 + $0x38] sm:$0xff] %v548
        %v559 = vld [vmem:[%s383] sm:$0xff]
        %v560 = vld [vmem:[%s383 + $0x8] sm:$0xff]
        %v561 = vld [vmem:[%s383 + $0x10] sm:$0xff]
        %v562 = vld [vmem:[%s383 + $0x18] sm:$0xff]
        %v563 = vld [vmem:[%s383 + $0x20] sm:$0xff]
        %v564 = vld [vmem:[%s383 + $0x28] sm:$0xff]
        %v565 = vld [vmem:[%s383 + $0x30] sm:$0xff]
        %v566 = vld [vmem:[%s383 + $0x38] sm:$0xff]
        %s567 = scalar_lea.vmem %s1, 128
        %v568 = vld [vmem:[%s567] sm:$0xff]
        %v569 = vld [vmem:[%s567 + $0x8] sm:$0xff]
        %v570 = vld [vmem:[%s567 + $0x10] sm:$0xff]
        %v571 = vld [vmem:[%s567 + $0x18] sm:$0xff]
        %v572 = vld [vmem:[%s567 + $0x20] sm:$0xff]
        %v573 = vld [vmem:[%s567 + $0x28] sm:$0xff]
        %v574 = vld [vmem:[%s567 + $0x30] sm:$0xff]
        %v575 = vld [vmem:[%s567 + $0x38] sm:$0xff]
        %v576 = vld [vmem:[%s567 + $0x40] sm:$0xff]
        %v577 = vld [vmem:[%s567 + $0x48] sm:$0xff]
        %v578 = vld [vmem:[%s567 + $0x50] sm:$0xff]
        %v579 = vld [vmem:[%s567 + $0x58] sm:$0xff]
        %v580 = vld [vmem:[%s567 + $0x60] sm:$0xff]
        %v581 = vld [vmem:[%s567 + $0x68] sm:$0xff]
        %v582 = vld [vmem:[%s567 + $0x70] sm:$0xff]
        %v583 = vld [vmem:[%s567 + $0x78] sm:$0xff]
        %584 = vmatprep.subr.mxu0 0.0
        %585 = vmatpush1.msra.mxu0 %v568
        %586 = vmatprep.subr.mxu0 0.0
        %587 = vmatpush1.msra.mxu0 %v569
        %588 = vmatprep.subr.mxu0 0.0
        %589 = vmatpush1.msra.mxu0 %v570
        %590 = vmatprep.subr.mxu0 0.0
        %591 = vmatpush1.msra.mxu0 %v571
        %592 = vmatprep.subr.mxu0 0.0
        %593 = vmatpush1.msra.mxu0 %v572
        %594 = vmatprep.subr.mxu0 0.0
        %595 = vmatpush1.msra.mxu0 %v573
        %596 = vmatprep.subr.mxu0 0.0
        %597 = vmatpush1.msra.mxu0 %v574
        %598 = vmatprep.subr.mxu0 0.0
        %599 = vmatpush1.msra.mxu0 %v575
        %600 = vmatprep.subr.mxu0 0.0
        %601 = vmatpush1.msra.mxu0 %v576
        %602 = vmatprep.subr.mxu0 0.0
        %603 = vmatpush1.msra.mxu0 %v577
        %604 = vmatprep.subr.mxu0 0.0
        %605 = vmatpush1.msra.mxu0 %v578
        %606 = vmatprep.subr.mxu0 0.0
        %607 = vmatpush1.msra.mxu0 %v579
        %608 = vmatprep.subr.mxu0 0.0
        %609 = vmatpush1.msra.mxu0 %v580
        %610 = vmatprep.subr.mxu0 0.0
        %611 = vmatpush1.msra.mxu0 %v581
        %612 = vmatprep.subr.mxu0 0.0
        %613 = vmatpush1.msra.mxu0 %v582
        %614 = vmatprep.subr.mxu0 0.0
        %615 = vmatpush1.msra.mxu0 %v583
        %616 = vmatprep.subr.mxu0 0.0
        %617 = vmatpush1.msra.mxu0 0.0
        %618 = vmatprep.subr.mxu0 0.0
        %619 = vmatpush1.msra.mxu0 0.0
        %620 = vmatprep.subr.mxu0 0.0
        %621 = vmatpush1.msra.mxu0 0.0
        %622 = vmatprep.subr.mxu0 0.0
        %623 = vmatpush1.msra.mxu0 0.0
        %624 = vmatprep.subr.mxu0 0.0
        %625 = vmatpush1.msra.mxu0 0.0
        %626 = vmatprep.subr.mxu0 0.0
        %627 = vmatpush1.msra.mxu0 0.0
        %628 = vmatprep.subr.mxu0 0.0
        %629 = vmatpush1.msra.mxu0 0.0
        %630 = vmatprep.subr.mxu0 0.0
        %631 = vmatpush1.msra.mxu0 0.0
        %632 = vmatprep.subr.mxu0 0.0
        %633 = vmatpush1.msra.mxu0 0.0
        %634 = vmatprep.subr.mxu0 0.0
        %635 = vmatpush1.msra.mxu0 0.0
        %636 = vmatprep.subr.mxu0 0.0
        %637 = vmatpush1.msra.mxu0 0.0
        %638 = vmatprep.subr.mxu0 0.0
        %639 = vmatpush1.msra.mxu0 0.0
        %640 = vmatprep.subr.mxu0 0.0
        %641 = vmatpush1.msra.mxu0 0.0
        %642 = vmatprep.subr.mxu0 0.0
        %643 = vmatpush1.msra.mxu0 0.0
        %644 = vmatprep.subr.mxu0 0.0
        %645 = vmatpush1.msra.mxu0 0.0
        %646 = vmatprep.subr.mxu0 0.0
        %647 = vmatpush1.msra.mxu0 0.0
        %648 = vmatprep.mubr.f32.mxu0 0.0
        %649 = vmatmul.mubr.f32.gmra.mrb[0].mxu0 %v559
        %v650 = vpop.f32.mrb[0].mxu0
        %v651 = vadd.f32 0.0, %v650
        %v652 = vpop.f32.mrb[0].mxu0
        %653 = vmatprep.mubr.f32.mxu0 0.0
        %654 = vmatmul.mubr.f32.gmra.mrb[0].mxu0 %v560
        %v655 = vpop.f32.mrb[0].mxu0
        %v656 = vadd.f32 0.0, %v655
        %v657 = vpop.f32.mrb[0].mxu0
        %658 = vmatprep.mubr.f32.mxu0 0.0
        %659 = vmatmul.mubr.f32.gmra.mrb[0].mxu0 %v561
        %v660 = vpop.f32.mrb[0].mxu0
        %v661 = vadd.f32 0.0, %v660
        %v662 = vpop.f32.mrb[0].mxu0
        %663 = vmatprep.mubr.f32.mxu0 0.0
        %664 = vmatmul.mubr.f32.gmra.mrb[0].mxu0 %v562
        %v665 = vpop.f32.mrb[0].mxu0
        %v666 = vadd.f32 0.0, %v665
        %v667 = vpop.f32.mrb[0].mxu0
        %668 = vmatprep.mubr.f32.mxu0 0.0
        %669 = vmatmul.mubr.f32.gmra.mrb[0].mxu0 %v563
        %v670 = vpop.f32.mrb[0].mxu0
        %v671 = vadd.f32 0.0, %v670
        %v672 = vpop.f32.mrb[0].mxu0
        %673 = vmatprep.mubr.f32.mxu0 0.0
        %674 = vmatmul.mubr.f32.gmra.mrb[0].mxu0 %v564
        %v675 = vpop.f32.mrb[0].mxu0
        %v676 = vadd.f32 0.0, %v675
        %v677 = vpop.f32.mrb[0].mxu0
        %678 = vmatprep.mubr.f32.mxu0 0.0
        %679 = vmatmul.mubr.f32.gmra.mrb[0].mxu0 %v565
        %v680 = vpop.f32.mrb[0].mxu0
        %v681 = vadd.f32 0.0, %v680
        %v682 = vpop.f32.mrb[0].mxu0
        %683 = vmatprep.mubr.f32.mxu0 0.0
        %684 = vmatmul.mubr.f32.gmra.mrb[0].mxu0 %v566
        %v685 = vpop.f32.mrb[0].mxu0
        %v686 = vadd.f32 0.0, %v685
        %v687 = vpop.f32.mrb[0].mxu0
        %688 = vdwg.mxu0
        %v689 = vld [vmem:[#allocation4] sm:$0xff]
        %v690 = vld [vmem:[#allocation4 + $0x8] sm:$0xff]
        %v691 = vld [vmem:[#allocation4 + $0x10] sm:$0xff]
        %v692 = vld [vmem:[#allocation4 + $0x18] sm:$0xff]
        %v693 = vld [vmem:[#allocation4 + $0x20] sm:$0xff]
        %v694 = vld [vmem:[#allocation4 + $0x28] sm:$0xff]
        %v695 = vld [vmem:[#allocation4 + $0x30] sm:$0xff]
        %v696 = vld [vmem:[#allocation4 + $0x38] sm:$0xff]
        %v697 = vadd.f32 %v689, %v651
        %v698 = vadd.f32 %v690, %v656
        %v699 = vadd.f32 %v691, %v661
        %v700 = vadd.f32 %v692, %v666
        %v701 = vadd.f32 %v693, %v671
        %v702 = vadd.f32 %v694, %v676
        %v703 = vadd.f32 %v695, %v681
        %v704 = vadd.f32 %v696, %v686
        %705 = vst [vmem:[#allocation4] sm:$0xff] %v697
        %706 = vst [vmem:[#allocation4 + $0x8] sm:$0xff] %v698
        %707 = vst [vmem:[#allocation4 + $0x10] sm:$0xff] %v699
        %708 = vst [vmem:[#allocation4 + $0x18] sm:$0xff] %v700
        %709 = vst [vmem:[#allocation4 + $0x20] sm:$0xff] %v701
        %710 = vst [vmem:[#allocation4 + $0x28] sm:$0xff] %v702
        %711 = vst [vmem:[#allocation4 + $0x30] sm:$0xff] %v703
        %712 = vst [vmem:[#allocation4 + $0x38] sm:$0xff] %v704
        %s713 = scalar_lea.vmem [#allocation3], 16
        %v714 = vld [vmem:[%s713] sm:$0xff]
        %v715 = vld [vmem:[%s713 + $0x8] sm:$0xff]
        %v716 = vld [vmem:[%s713 + $0x10] sm:$0xff]
        %v717 = vld [vmem:[%s713 + $0x18] sm:$0xff]
        %v718 = vld [vmem:[%s713 + $0x20] sm:$0xff]
        %v719 = vld [vmem:[%s713 + $0x28] sm:$0xff]
        %v720 = vld [vmem:[%s713 + $0x30] sm:$0xff]
        %v721 = vld [vmem:[%s713 + $0x38] sm:$0xff]
        %s722 = scalar_lea.vmem %s1, 256
        %v723 = vld [vmem:[%s722] sm:$0xff]
        %v724 = vld [vmem:[%s722 + $0x8] sm:$0xff]
        %v725 = vld [vmem:[%s722 + $0x10] sm:$0xff]
        %v726 = vld [vmem:[%s722 + $0x18] sm:$0xff]
        %v727 = vld [vmem:[%s722 + $0x20] sm:$0xff]
        %v728 = vld [vmem:[%s722 + $0x28] sm:$0xff]
        %v729 = vld [vmem:[%s722 + $0x30] sm:$0xff]
        %v730 = vld [vmem:[%s722 + $0x38] sm:$0xff]
        %v731 = vld [vmem:[%s722 + $0x40] sm:$0xff]
        %v732 = vld [vmem:[%s722 + $0x48] sm:$0xff]
        %v733 = vld [vmem:[%s722 + $0x50] sm:$0xff]
        %v734 = vld [vmem:[%s722 + $0x58] sm:$0xff]
        %v735 = vld [vmem:[%s722 + $0x60] sm:$0xff]
        %v736 = vld [vmem:[%s722 + $0x68] sm:$0xff]
        %v737 = vld [vmem:[%s722 + $0x70] sm:$0xff]
        %v738 = vld [vmem:[%s722 + $0x78] sm:$0xff]
        %739 = vmatprep.subr.mxu0 0.0
        %740 = vmatpush1.msra.mxu0 %v723
        %741 = vmatprep.subr.mxu0 0.0
        %742 = vmatpush1.msra.mxu0 %v724
        %743 = vmatprep.subr.mxu0 0.0
        %744 = vmatpush1.msra.mxu0 %v725
        %745 = vmatprep.subr.mxu0 0.0
        %746 = vmatpush1.msra.mxu0 %v726
        %747 = vmatprep.subr.mxu0 0.0
        %748 = vmatpush1.msra.mxu0 %v727
        %749 = vmatprep.subr.mxu0 0.0
        %750 = vmatpush1.msra.mxu0 %v728
        %751 = vmatprep.subr.mxu0 0.0
        %752 = vmatpush1.msra.mxu0 %v729
        %753 = vmatprep.subr.mxu0 0.0
        %754 = vmatpush1.msra.mxu0 %v730
        %755 = vmatprep.subr.mxu0 0.0
        %756 = vmatpush1.msra.mxu0 %v731
        %757 = vmatprep.subr.mxu0 0.0
        %758 = vmatpush1.msra.mxu0 %v732
        %759 = vmatprep.subr.mxu0 0.0
        %760 = vmatpush1.msra.mxu0 %v733
        %761 = vmatprep.subr.mxu0 0.0
        %762 = vmatpush1.msra.mxu0 %v734
        %763 = vmatprep.subr.mxu0 0.0
        %764 = vmatpush1.msra.mxu0 %v735
        %765 = vmatprep.subr.mxu0 0.0
        %766 = vmatpush1.msra.mxu0 %v736
        %767 = vmatprep.subr.mxu0 0.0
        %768 = vmatpush1.msra.mxu0 %v737
        %769 = vmatprep.subr.mxu0 0.0
        %770 = vmatpush1.msra.mxu0 %v738
        %771 = vmatprep.subr.mxu0 0.0
        %772 = vmatpush1.msra.mxu0 0.0
        %773 = vmatprep.subr.mxu0 0.0
        %774 = vmatpush1.msra.mxu0 0.0
        %775 = vmatprep.subr.mxu0 0.0
        %776 = vmatpush1.msra.mxu0 0.0
        %777 = vmatprep.subr.mxu0 0.0
        %778 = vmatpush1.msra.mxu0 0.0
        %779 = vmatprep.subr.mxu0 0.0
        %780 = vmatpush1.msra.mxu0 0.0
        %781 = vmatprep.subr.mxu0 0.0
        %782 = vmatpush1.msra.mxu0 0.0
        %783 = vmatprep.subr.mxu0 0.0
        %784 = vmatpush1.msra.mxu0 0.0
        %785 = vmatprep.subr.mxu0 0.0
        %786 = vmatpush1.msra.mxu0 0.0
        %787 = vmatprep.subr.mxu0 0.0
        %788 = vmatpush1.msra.mxu0 0.0
        %789 = vmatprep.subr.mxu0 0.0
        %790 = vmatpush1.msra.mxu0 0.0
        %791 = vmatprep.subr.mxu0 0.0
        %792 = vmatpush1.msra.mxu0 0.0
        %793 = vmatprep.subr.mxu0 0.0
        %794 = vmatpush1.msra.mxu0 0.0
        %795 = vmatprep.subr.mxu0 0.0
        %796 = vmatpush1.msra.mxu0 0.0
        %797 = vmatprep.subr.mxu0 0.0
        %798 = vmatpush1.msra.mxu0 0.0
        %799 = vmatprep.subr.mxu0 0.0
        %800 = vmatpush1.msra.mxu0 0.0
        %801 = vmatprep.subr.mxu0 0.0
        %802 = vmatpush1.msra.mxu0 0.0
        %803 = vmatprep.mubr.f32.mxu0 0.0
        %804 = vmatmul.mubr.f32.gmra.mrb[0].mxu0 %v714
        %v805 = vpop.f32.mrb[0].mxu0
        %v806 = vadd.f32 0.0, %v805
        %v807 = vpop.f32.mrb[0].mxu0
        %808 = vmatprep.mubr.f32.mxu0 0.0
        %809 = vmatmul.mubr.f32.gmra.mrb[0].mxu0 %v715
        %v810 = vpop.f32.mrb[0].mxu0
        %v811 = vadd.f32 0.0, %v810
        %v812 = vpop.f32.mrb[0].mxu0
        %813 = vmatprep.mubr.f32.mxu0 0.0
        %814 = vmatmul.mubr.f32.gmra.mrb[0].mxu0 %v716
        %v815 = vpop.f32.mrb[0].mxu0
        %v816 = vadd.f32 0.0, %v815
        %v817 = vpop.f32.mrb[0].mxu0
        %818 = vmatprep.mubr.f32.mxu0 0.0
        %819 = vmatmul.mubr.f32.gmra.mrb[0].mxu0 %v717
        %v820 = vpop.f32.mrb[0].mxu0
        %v821 = vadd.f32 0.0, %v820
        %v822 = vpop.f32.mrb[0].mxu0
        %823 = vmatprep.mubr.f32.mxu0 0.0
        %824 = vmatmul.mubr.f32.gmra.mrb[0].mxu0 %v718
        %v825 = vpop.f32.mrb[0].mxu0
        %v826 = vadd.f32 0.0, %v825
        %v827 = vpop.f32.mrb[0].mxu0
        %828 = vmatprep.mubr.f32.mxu0 0.0
        %829 = vmatmul.mubr.f32.gmra.mrb[0].mxu0 %v719
        %v830 = vpop.f32.mrb[0].mxu0
        %v831 = vadd.f32 0.0, %v830
        %v832 = vpop.f32.mrb[0].mxu0
        %833 = vmatprep.mubr.f32.mxu0 0.0
        %834 = vmatmul.mubr.f32.gmra.mrb[0].mxu0 %v720
        %v835 = vpop.f32.mrb[0].mxu0
        %v836 = vadd.f32 0.0, %v835
        %v837 = vpop.f32.mrb[0].mxu0
        %838 = vmatprep.mubr.f32.mxu0 0.0
        %839 = vmatmul.mubr.f32.gmra.mrb[0].mxu0 %v721
        %v840 = vpop.f32.mrb[0].mxu0
        %v841 = vadd.f32 0.0, %v840
        %v842 = vpop.f32.mrb[0].mxu0
        %843 = vdwg.mxu0
        %v844 = vld [vmem:[#allocation4] sm:$0xff]
        %v845 = vld [vmem:[#allocation4 + $0x8] sm:$0xff]
        %v846 = vld [vmem:[#allocation4 + $0x10] sm:$0xff]
        %v847 = vld [vmem:[#allocation4 + $0x18] sm:$0xff]
        %v848 = vld [vmem:[#allocation4 + $0x20] sm:$0xff]
        %v849 = vld [vmem:[#allocation4 + $0x28] sm:$0xff]
        %v850 = vld [vmem:[#allocation4 + $0x30] sm:$0xff]
        %v851 = vld [vmem:[#allocation4 + $0x38] sm:$0xff]
        %v852 = vadd.f32 %v844, %v806
        %v853 = vadd.f32 %v845, %v811
        %v854 = vadd.f32 %v846, %v816
        %v855 = vadd.f32 %v847, %v821
        %v856 = vadd.f32 %v848, %v826
        %v857 = vadd.f32 %v849, %v831
        %v858 = vadd.f32 %v850, %v836
        %v859 = vadd.f32 %v851, %v841
        %860 = vst [vmem:[#allocation4] sm:$0xff] %v852
        %861 = vst [vmem:[#allocation4 + $0x8] sm:$0xff] %v853
        %862 = vst [vmem:[#allocation4 + $0x10] sm:$0xff] %v854
        %863 = vst [vmem:[#allocation4 + $0x18] sm:$0xff] %v855
        %864 = vst [vmem:[#allocation4 + $0x20] sm:$0xff] %v856
        %865 = vst [vmem:[#allocation4 + $0x28] sm:$0xff] %v857
        %866 = vst [vmem:[#allocation4 + $0x30] sm:$0xff] %v858
        %867 = vst [vmem:[#allocation4 + $0x38] sm:$0xff] %v859
        %s868 = scalar_lea.vmem [#allocation3], 112
        %v869 = vld [vmem:[%s868] sm:$0xff]
        %v870 = vld [vmem:[%s868 + $0x8] sm:$0xff]
        %v871 = vld [vmem:[%s868 + $0x10] sm:$0xff]
        %v872 = vld [vmem:[%s868 + $0x18] sm:$0xff]
        %v873 = vld [vmem:[%s868 + $0x20] sm:$0xff]
        %v874 = vld [vmem:[%s868 + $0x28] sm:$0xff]
        %v875 = vld [vmem:[%s868 + $0x30] sm:$0xff]
        %v876 = vld [vmem:[%s868 + $0x38] sm:$0xff]
        %s877 = scalar_lea.vmem %s1, 384
        %v878 = vld [vmem:[%s877] sm:$0xff]
        %v879 = vld [vmem:[%s877 + $0x8] sm:$0xff]
        %v880 = vld [vmem:[%s877 + $0x10] sm:$0xff]
        %v881 = vld [vmem:[%s877 + $0x18] sm:$0xff]
        %v882 = vld [vmem:[%s877 + $0x20] sm:$0xff]
        %v883 = vld [vmem:[%s877 + $0x28] sm:$0xff]
        %v884 = vld [vmem:[%s877 + $0x30] sm:$0xff]
        %v885 = vld [vmem:[%s877 + $0x38] sm:$0xff]
        %v886 = vld [vmem:[%s877 + $0x40] sm:$0xff]
        %v887 = vld [vmem:[%s877 + $0x48] sm:$0xff]
        %v888 = vld [vmem:[%s877 + $0x50] sm:$0xff]
        %v889 = vld [vmem:[%s877 + $0x58] sm:$0xff]
        %v890 = vld [vmem:[%s877 + $0x60] sm:$0xff]
        %v891 = vld [vmem:[%s877 + $0x68] sm:$0xff]
        %v892 = vld [vmem:[%s877 + $0x70] sm:$0xff]
        %v893 = vld [vmem:[%s877 + $0x78] sm:$0xff]
        %894 = vmatprep.subr.mxu0 0.0
        %895 = vmatpush1.msra.mxu0 %v878
        %896 = vmatprep.subr.mxu0 0.0
        %897 = vmatpush1.msra.mxu0 %v879
        %898 = vmatprep.subr.mxu0 0.0
        %899 = vmatpush1.msra.mxu0 %v880
        %900 = vmatprep.subr.mxu0 0.0
        %901 = vmatpush1.msra.mxu0 %v881
        %902 = vmatprep.subr.mxu0 0.0
        %903 = vmatpush1.msra.mxu0 %v882
        %904 = vmatprep.subr.mxu0 0.0
        %905 = vmatpush1.msra.mxu0 %v883
        %906 = vmatprep.subr.mxu0 0.0
        %907 = vmatpush1.msra.mxu0 %v884
        %908 = vmatprep.subr.mxu0 0.0
        %909 = vmatpush1.msra.mxu0 %v885
        %910 = vmatprep.subr.mxu0 0.0
        %911 = vmatpush1.msra.mxu0 %v886
        %912 = vmatprep.subr.mxu0 0.0
        %913 = vmatpush1.msra.mxu0 %v887
        %914 = vmatprep.subr.mxu0 0.0
        %915 = vmatpush1.msra.mxu0 %v888
        %916 = vmatprep.subr.mxu0 0.0
        %917 = vmatpush1.msra.mxu0 %v889
        %918 = vmatprep.subr.mxu0 0.0
        %919 = vmatpush1.msra.mxu0 %v890
        %920 = vmatprep.subr.mxu0 0.0
        %921 = vmatpush1.msra.mxu0 %v891
        %922 = vmatprep.subr.mxu0 0.0
        %923 = vmatpush1.msra.mxu0 %v892
        %924 = vmatprep.subr.mxu0 0.0
        %925 = vmatpush1.msra.mxu0 %v893
        %926 = vmatprep.subr.mxu0 0.0
        %927 = vmatpush1.msra.mxu0 0.0
        %928 = vmatprep.subr.mxu0 0.0
        %929 = vmatpush1.msra.mxu0 0.0
        %930 = vmatprep.subr.mxu0 0.0
        %931 = vmatpush1.msra.mxu0 0.0
        %932 = vmatprep.subr.mxu0 0.0
        %933 = vmatpush1.msra.mxu0 0.0
        %934 = vmatprep.subr.mxu0 0.0
        %935 = vmatpush1.msra.mxu0 0.0
        %936 = vmatprep.subr.mxu0 0.0
        %937 = vmatpush1.msra.mxu0 0.0
        %938 = vmatprep.subr.mxu0 0.0
        %939 = vmatpush1.msra.mxu0 0.0
        %940 = vmatprep.subr.mxu0 0.0
        %941 = vmatpush1.msra.mxu0 0.0
        %942 = vmatprep.subr.mxu0 0.0
        %943 = vmatpush1.msra.mxu0 0.0
        %944 = vmatprep.subr.mxu0 0.0
        %945 = vmatpush1.msra.mxu0 0.0
        %946 = vmatprep.subr.mxu0 0.0
        %947 = vmatpush1.msra.mxu0 0.0
        %948 = vmatprep.subr.mxu0 0.0
        %949 = vmatpush1.msra.mxu0 0.0
        %950 = vmatprep.subr.mxu0 0.0
        %951 = vmatpush1.msra.mxu0 0.0
        %952 = vmatprep.subr.mxu0 0.0
        %953 = vmatpush1.msra.mxu0 0.0
        %954 = vmatprep.subr.mxu0 0.0
        %955 = vmatpush1.msra.mxu0 0.0
        %956 = vmatprep.subr.mxu0 0.0
        %957 = vmatpush1.msra.mxu0 0.0
        %958 = vmatprep.mubr.f32.mxu0 0.0
        %959 = vmatmul.mubr.f32.gmra.mrb[0].mxu0 %v869
        %v960 = vpop.f32.mrb[0].mxu0
        %v961 = vadd.f32 0.0, %v960
        %v962 = vpop.f32.mrb[0].mxu0
        %963 = vmatprep.mubr.f32.mxu0 0.0
        %964 = vmatmul.mubr.f32.gmra.mrb[0].mxu0 %v870
        %v965 = vpop.f32.mrb[0].mxu0
        %v966 = vadd.f32 0.0, %v965
        %v967 = vpop.f32.mrb[0].mxu0
        %968 = vmatprep.mubr.f32.mxu0 0.0
        %969 = vmatmul.mubr.f32.gmra.mrb[0].mxu0 %v871
        %v970 = vpop.f32.mrb[0].mxu0
        %v971 = vadd.f32 0.0, %v970
        %v972 = vpop.f32.mrb[0].mxu0
        %973 = vmatprep.mubr.f32.mxu0 0.0
        %974 = vmatmul.mubr.f32.gmra.mrb[0].mxu0 %v872
        %v975 = vpop.f32.mrb[0].mxu0
        %v976 = vadd.f32 0.0, %v975
        %v977 = vpop.f32.mrb[0].mxu0
        %978 = vmatprep.mubr.f32.mxu0 0.0
        %979 = vmatmul.mubr.f32.gmra.mrb[0].mxu0 %v873
        %v980 = vpop.f32.mrb[0].mxu0
        %v981 = vadd.f32 0.0, %v980
        %v982 = vpop.f32.mrb[0].mxu0
        %983 = vmatprep.mubr.f32.mxu0 0.0
        %984 = vmatmul.mubr.f32.gmra.mrb[0].mxu0 %v874
        %v985 = vpop.f32.mrb[0].mxu0
        %v986 = vadd.f32 0.0, %v985
        %v987 = vpop.f32.mrb[0].mxu0
        %988 = vmatprep.mubr.f32.mxu0 0.0
        %989 = vmatmul.mubr.f32.gmra.mrb[0].mxu0 %v875
        %v990 = vpop.f32.mrb[0].mxu0
        %v991 = vadd.f32 0.0, %v990
        %v992 = vpop.f32.mrb[0].mxu0
        %993 = vmatprep.mubr.f32.mxu0 0.0
        %994 = vmatmul.mubr.f32.gmra.mrb[0].mxu0 %v876
        %v995 = vpop.f32.mrb[0].mxu0
        %v996 = vadd.f32 0.0, %v995
        %v997 = vpop.f32.mrb[0].mxu0
        %998 = vdwg.mxu0
        %v999 = vld [vmem:[#allocation4] sm:$0xff]
        %v1000 = vld [vmem:[#allocation4 + $0x8] sm:$0xff]
        %v1001 = vld [vmem:[#allocation4 + $0x10] sm:$0xff]
        %v1002 = vld [vmem:[#allocation4 + $0x18] sm:$0xff]
        %v1003 = vld [vmem:[#allocation4 + $0x20] sm:$0xff]
        %v1004 = vld [vmem:[#allocation4 + $0x28] sm:$0xff]
        %v1005 = vld [vmem:[#allocation4 + $0x30] sm:$0xff]
        %v1006 = vld [vmem:[#allocation4 + $0x38] sm:$0xff]
        %v1007 = vadd.f32 %v999, %v961
        %v1008 = vadd.f32 %v1000, %v966
        %v1009 = vadd.f32 %v1001, %v971
        %v1010 = vadd.f32 %v1002, %v976
        %v1011 = vadd.f32 %v1003, %v981
        %v1012 = vadd.f32 %v1004, %v986
        %v1013 = vadd.f32 %v1005, %v991
        %v1014 = vadd.f32 %v1006, %v996
        %1015 = vst [vmem:[#allocation4] sm:$0xff] %v1007
        %1016 = vst [vmem:[#allocation4 + $0x8] sm:$0xff] %v1008
        %1017 = vst [vmem:[#allocation4 + $0x10] sm:$0xff] %v1009
        %1018 = vst [vmem:[#allocation4 + $0x18] sm:$0xff] %v1010
        %1019 = vst [vmem:[#allocation4 + $0x20] sm:$0xff] %v1011
        %1020 = vst [vmem:[#allocation4 + $0x28] sm:$0xff] %v1012
        %1021 = vst [vmem:[#allocation4 + $0x30] sm:$0xff] %v1013
        %1022 = vst [vmem:[#allocation4 + $0x38] sm:$0xff] %v1014
        %v1023 = vld [vmem:[#allocation4] sm:$0xff]
        %v1024 = vld [vmem:[#allocation4 + $0x8] sm:$0xff]
        %v1025 = vld [vmem:[#allocation4 + $0x10] sm:$0xff]
        %v1026 = vld [vmem:[#allocation4 + $0x18] sm:$0xff]
        %v1027 = vld [vmem:[#allocation4 + $0x20] sm:$0xff]
        %v1028 = vld [vmem:[#allocation4 + $0x28] sm:$0xff]
        %v1029 = vld [vmem:[#allocation4 + $0x30] sm:$0xff]
        %v1030 = vld [vmem:[#allocation4 + $0x38] sm:$0xff]
        %v1032 = vlaneseq
        %v1033 = vshrl.u32 %v1032, 7
        %v1034 = vsub.s32 0, %v1033
        %v1035 = vrot.slane %v421, %v1034
        %v1037 = vadd.f32 %v1023, %v1035
        %v1038 = vadd.f32 %v1024, %v1035
        %v1039 = vadd.f32 %v1025, %v1035
        %v1040 = vadd.f32 %v1026, %v1035
        %v1041 = vadd.f32 %v1027, %v1035
        %v1042 = vadd.f32 %v1028, %v1035
        %v1043 = vadd.f32 %v1029, %v1035
        %v1044 = vadd.f32 %v1030, %v1035
        %1045 = vst [vmem:[%s143] sm:$0xff] %v1037
        %1046 = vst [vmem:[%s143 + $0x8] sm:$0xff] %v1038
        %1047 = vst [vmem:[%s143 + $0x10] sm:$0xff] %v1039
        %1048 = vst [vmem:[%s143 + $0x18] sm:$0xff] %v1040
        %1049 = vst [vmem:[%s143 + $0x20] sm:$0xff] %v1041
        %1050 = vst [vmem:[%s143 + $0x28] sm:$0xff] %v1042
        %1051 = vst [vmem:[%s143 + $0x30] sm:$0xff] %v1043
        %1052 = vst [vmem:[%s143 + $0x38] sm:$0xff] %v1044
        %v1053 = vld [vmem:[%s383] sm:$0xff]
        %v1054 = vld [vmem:[%s383 + $0x8] sm:$0xff]
        %v1055 = vld [vmem:[%s383 + $0x10] sm:$0xff]
        %v1056 = vld [vmem:[%s383 + $0x18] sm:$0xff]
        %v1057 = vld [vmem:[%s383 + $0x20] sm:$0xff]
        %v1058 = vld [vmem:[%s383 + $0x28] sm:$0xff]
        %v1059 = vld [vmem:[%s383 + $0x30] sm:$0xff]
        %v1060 = vld [vmem:[%s383 + $0x38] sm:$0xff]
        %s1061 = scalar_lea.vmem %s1, 512
        %v1062 = vld [vmem:[%s1061] sm:$0xff]
        %v1063 = vld [vmem:[%s1061 + $0x8] sm:$0xff]
        %v1064 = vld [vmem:[%s1061 + $0x10] sm:$0xff]
        %v1065 = vld [vmem:[%s1061 + $0x18] sm:$0xff]
        %v1066 = vld [vmem:[%s1061 + $0x20] sm:$0xff]
        %v1067 = vld [vmem:[%s1061 + $0x28] sm:$0xff]
        %v1068 = vld [vmem:[%s1061 + $0x30] sm:$0xff]
        %v1069 = vld [vmem:[%s1061 + $0x38] sm:$0xff]
        %v1070 = vld [vmem:[%s1061 + $0x40] sm:$0xff]
        %v1071 = vld [vmem:[%s1061 + $0x48] sm:$0xff]
        %v1072 = vld [vmem:[%s1061 + $0x50] sm:$0xff]
        %v1073 = vld [vmem:[%s1061 + $0x58] sm:$0xff]
        %v1074 = vld [vmem:[%s1061 + $0x60] sm:$0xff]
        %v1075 = vld [vmem:[%s1061 + $0x68] sm:$0xff]
        %v1076 = vld [vmem:[%s1061 + $0x70] sm:$0xff]
        %v1077 = vld [vmem:[%s1061 + $0x78] sm:$0xff]
        %1078 = vmatprep.subr.mxu0 0.0
        %1079 = vmatpush1.msra.mxu0 %v1062
        %1080 = vmatprep.subr.mxu0 0.0
        %1081 = vmatpush1.msra.mxu0 %v1063
        %1082 = vmatprep.subr.mxu0 0.0
        %1083 = vmatpush1.msra.mxu0 %v1064
        %1084 = vmatprep.subr.mxu0 0.0
        %1085 = vmatpush1.msra.mxu0 %v1065
        %1086 = vmatprep.subr.mxu0 0.0
        %1087 = vmatpush1.msra.mxu0 %v1066
        %1088 = vmatprep.subr.mxu0 0.0
        %1089 = vmatpush1.msra.mxu0 %v1067
        %1090 = vmatprep.subr.mxu0 0.0
        %1091 = vmatpush1.msra.mxu0 %v1068
        %1092 = vmatprep.subr.mxu0 0.0
        %1093 = vmatpush1.msra.mxu0 %v1069
        %1094 = vmatprep.subr.mxu0 0.0
        %1095 = vmatpush1.msra.mxu0 %v1070
        %1096 = vmatprep.subr.mxu0 0.0
        %1097 = vmatpush1.msra.mxu0 %v1071
        %1098 = vmatprep.subr.mxu0 0.0
        %1099 = vmatpush1.msra.mxu0 %v1072
        %1100 = vmatprep.subr.mxu0 0.0
        %1101 = vmatpush1.msra.mxu0 %v1073
        %1102 = vmatprep.subr.mxu0 0.0
        %1103 = vmatpush1.msra.mxu0 %v1074
        %1104 = vmatprep.subr.mxu0 0.0
        %1105 = vmatpush1.msra.mxu0 %v1075
        %1106 = vmatprep.subr.mxu0 0.0
        %1107 = vmatpush1.msra.mxu0 %v1076
        %1108 = vmatprep.subr.mxu0 0.0
        %1109 = vmatpush1.msra.mxu0 %v1077
        %1110 = vmatprep.subr.mxu0 0.0
        %1111 = vmatpush1.msra.mxu0 0.0
        %1112 = vmatprep.subr.mxu0 0.0
        %1113 = vmatpush1.msra.mxu0 0.0
        %1114 = vmatprep.subr.mxu0 0.0
        %1115 = vmatpush1.msra.mxu0 0.0
        %1116 = vmatprep.subr.mxu0 0.0
        %1117 = vmatpush1.msra.mxu0 0.0
        %1118 = vmatprep.subr.mxu0 0.0
        %1119 = vmatpush1.msra.mxu0 0.0
        %1120 = vmatprep.subr.mxu0 0.0
        %1121 = vmatpush1.msra.mxu0 0.0
        %1122 = vmatprep.subr.mxu0 0.0
        %1123 = vmatpush1.msra.mxu0 0.0
        %1124 = vmatprep.subr.mxu0 0.0
        %1125 = vmatpush1.msra.mxu0 0.0
        %1126 = vmatprep.subr.mxu0 0.0
        %1127 = vmatpush1.msra.mxu0 0.0
        %1128 = vmatprep.subr.mxu0 0.0
        %1129 = vmatpush1.msra.mxu0 0.0
        %1130 = vmatprep.subr.mxu0 0.0
        %1131 = vmatpush1.msra.mxu0 0.0
        %1132 = vmatprep.subr.mxu0 0.0
        %1133 = vmatpush1.msra.mxu0 0.0
        %1134 = vmatprep.subr.mxu0 0.0
        %1135 = vmatpush1.msra.mxu0 0.0
        %1136 = vmatprep.subr.mxu0 0.0
        %1137 = vmatpush1.msra.mxu0 0.0
        %1138 = vmatprep.subr.mxu0 0.0
        %1139 = vmatpush1.msra.mxu0 0.0
        %1140 = vmatprep.subr.mxu0 0.0
        %1141 = vmatpush1.msra.mxu0 0.0
        %1142 = vmatprep.mubr.f32.mxu0 0.0
        %1143 = vmatmul.mubr.f32.gmra.mrb[0].mxu0 %v1053
        %v1144 = vpop.f32.mrb[0].mxu0
        %v1145 = vadd.f32 0.0, %v1144
        %v1146 = vpop.f32.mrb[0].mxu0
        %1147 = vmatprep.mubr.f32.mxu0 0.0
        %1148 = vmatmul.mubr.f32.gmra.mrb[0].mxu0 %v1054
        %v1149 = vpop.f32.mrb[0].mxu0
        %v1150 = vadd.f32 0.0, %v1149
        %v1151 = vpop.f32.mrb[0].mxu0
        %1152 = vmatprep.mubr.f32.mxu0 0.0
        %1153 = vmatmul.mubr.f32.gmra.mrb[0].mxu0 %v1055
        %v1154 = vpop.f32.mrb[0].mxu0
        %v1155 = vadd.f32 0.0, %v1154
        %v1156 = vpop.f32.mrb[0].mxu0
        %1157 = vmatprep.mubr.f32.mxu0 0.0
        %1158 = vmatmul.mubr.f32.gmra.mrb[0].mxu0 %v1056
        %v1159 = vpop.f32.mrb[0].mxu0
        %v1160 = vadd.f32 0.0, %v1159
        %v1161 = vpop.f32.mrb[0].mxu0
        %1162 = vmatprep.mubr.f32.mxu0 0.0
        %1163 = vmatmul.mubr.f32.gmra.mrb[0].mxu0 %v1057
        %v1164 = vpop.f32.mrb[0].mxu0
        %v1165 = vadd.f32 0.0, %v1164
        %v1166 = vpop.f32.mrb[0].mxu0
        %1167 = vmatprep.mubr.f32.mxu0 0.0
        %1168 = vmatmul.mubr.f32.gmra.mrb[0].mxu0 %v1058
        %v1169 = vpop.f32.mrb[0].mxu0
        %v1170 = vadd.f32 0.0, %v1169
        %v1171 = vpop.f32.mrb[0].mxu0
        %1172 = vmatprep.mubr.f32.mxu0 0.0
        %1173 = vmatmul.mubr.f32.gmra.mrb[0].mxu0 %v1059
        %v1174 = vpop.f32.mrb[0].mxu0
        %v1175 = vadd.f32 0.0, %v1174
        %v1176 = vpop.f32.mrb[0].mxu0
        %1177 = vmatprep.mubr.f32.mxu0 0.0
        %1178 = vmatmul.mubr.f32.gmra.mrb[0].mxu0 %v1060
        %v1179 = vpop.f32.mrb[0].mxu0
        %v1180 = vadd.f32 0.0, %v1179
        %v1181 = vpop.f32.mrb[0].mxu0
        %1182 = vdwg.mxu0
        %1183 = vst [vmem:[#allocation4] sm:$0xff] %v1145
        %1184 = vst [vmem:[#allocation4 + $0x8] sm:$0xff] %v1150
        %1185 = vst [vmem:[#allocation4 + $0x10] sm:$0xff] %v1155
        %1186 = vst [vmem:[#allocation4 + $0x18] sm:$0xff] %v1160
        %1187 = vst [vmem:[#allocation4 + $0x20] sm:$0xff] %v1165
        %1188 = vst [vmem:[#allocation4 + $0x28] sm:$0xff] %v1170
        %1189 = vst [vmem:[#allocation4 + $0x30] sm:$0xff] %v1175
        %1190 = vst [vmem:[#allocation4 + $0x38] sm:$0xff] %v1180
        %v1191 = vld [vmem:[%s408] sm:$0xff]
        %v1192 = vld [vmem:[%s408 + $0x8] sm:$0xff]
        %v1193 = vld [vmem:[%s408 + $0x10] sm:$0xff]
        %v1194 = vld [vmem:[%s408 + $0x18] sm:$0xff]
        %v1195 = vld [vmem:[%s408 + $0x20] sm:$0xff]
        %v1196 = vld [vmem:[%s408 + $0x28] sm:$0xff]
        %v1197 = vld [vmem:[%s408 + $0x30] sm:$0xff]
        %v1198 = vld [vmem:[%s408 + $0x38] sm:$0xff]
        %s1199 = scalar_lea.vmem %s1, 640
        %v1200 = vld [vmem:[%s1199] sm:$0xff]
        %v1201 = vld [vmem:[%s1199 + $0x8] sm:$0xff]
        %v1202 = vld [vmem:[%s1199 + $0x10] sm:$0xff]
        %v1203 = vld [vmem:[%s1199 + $0x18] sm:$0xff]
        %v1204 = vld [vmem:[%s1199 + $0x20] sm:$0xff]
        %v1205 = vld [vmem:[%s1199 + $0x28] sm:$0xff]
        %v1206 = vld [vmem:[%s1199 + $0x30] sm:$0xff]
        %v1207 = vld [vmem:[%s1199 + $0x38] sm:$0xff]
        %v1208 = vld [vmem:[%s1199 + $0x40] sm:$0xff]
        %v1209 = vld [vmem:[%s1199 + $0x48] sm:$0xff]
        %v1210 = vld [vmem:[%s1199 + $0x50] sm:$0xff]
        %v1211 = vld [vmem:[%s1199 + $0x58] sm:$0xff]
        %v1212 = vld [vmem:[%s1199 + $0x60] sm:$0xff]
        %v1213 = vld [vmem:[%s1199 + $0x68] sm:$0xff]
        %v1214 = vld [vmem:[%s1199 + $0x70] sm:$0xff]
        %v1215 = vld [vmem:[%s1199 + $0x78] sm:$0xff]
        %1216 = vmatprep.subr.mxu0 0.0
        %1217 = vmatpush1.msra.mxu0 %v1200
        %1218 = vmatprep.subr.mxu0 0.0
        %1219 = vmatpush1.msra.mxu0 %v1201
        %1220 = vmatprep.subr.mxu0 0.0
        %1221 = vmatpush1.msra.mxu0 %v1202
        %1222 = vmatprep.subr.mxu0 0.0
        %1223 = vmatpush1.msra.mxu0 %v1203
        %1224 = vmatprep.subr.mxu0 0.0
        %1225 = vmatpush1.msra.mxu0 %v1204
        %1226 = vmatprep.subr.mxu0 0.0
        %1227 = vmatpush1.msra.mxu0 %v1205
        %1228 = vmatprep.subr.mxu0 0.0
        %1229 = vmatpush1.msra.mxu0 %v1206
        %1230 = vmatprep.subr.mxu0 0.0
        %1231 = vmatpush1.msra.mxu0 %v1207
        %1232 = vmatprep.subr.mxu0 0.0
        %1233 = vmatpush1.msra.mxu0 %v1208
        %1234 = vmatprep.subr.mxu0 0.0
        %1235 = vmatpush1.msra.mxu0 %v1209
        %1236 = vmatprep.subr.mxu0 0.0
        %1237 = vmatpush1.msra.mxu0 %v1210
        %1238 = vmatprep.subr.mxu0 0.0
        %1239 = vmatpush1.msra.mxu0 %v1211
        %1240 = vmatprep.subr.mxu0 0.0
        %1241 = vmatpush1.msra.mxu0 %v1212
        %1242 = vmatprep.subr.mxu0 0.0
        %1243 = vmatpush1.msra.mxu0 %v1213
        %1244 = vmatprep.subr.mxu0 0.0
        %1245 = vmatpush1.msra.mxu0 %v1214
        %1246 = vmatprep.subr.mxu0 0.0
        %1247 = vmatpush1.msra.mxu0 %v1215
        %1248 = vmatprep.subr.mxu0 0.0
        %1249 = vmatpush1.msra.mxu0 0.0
        %1250 = vmatprep.subr.mxu0 0.0
        %1251 = vmatpush1.msra.mxu0 0.0
        %1252 = vmatprep.subr.mxu0 0.0
        %1253 = vmatpush1.msra.mxu0 0.0
        %1254 = vmatprep.subr.mxu0 0.0
        %1255 = vmatpush1.msra.mxu0 0.0
        %1256 = vmatprep.subr.mxu0 0.0
        %1257 = vmatpush1.msra.mxu0 0.0
        %1258 = vmatprep.subr.mxu0 0.0
        %1259 = vmatpush1.msra.mxu0 0.0
        %1260 = vmatprep.subr.mxu0 0.0
        %1261 = vmatpush1.msra.mxu0 0.0
        %1262 = vmatprep.subr.mxu0 0.0
        %1263 = vmatpush1.msra.mxu0 0.0
        %1264 = vmatprep.subr.mxu0 0.0
        %1265 = vmatpush1.msra.mxu0 0.0
        %1266 = vmatprep.subr.mxu0 0.0
        %1267 = vmatpush1.msra.mxu0 0.0
        %1268 = vmatprep.subr.mxu0 0.0
        %1269 = vmatpush1.msra.mxu0 0.0
        %1270 = vmatprep.subr.mxu0 0.0
        %1271 = vmatpush1.msra.mxu0 0.0
        %1272 = vmatprep.subr.mxu0 0.0
        %1273 = vmatpush1.msra.mxu0 0.0
        %1274 = vmatprep.subr.mxu0 0.0
        %1275 = vmatpush1.msra.mxu0 0.0
        %1276 = vmatprep.subr.mxu0 0.0
        %1277 = vmatpush1.msra.mxu0 0.0
        %1278 = vmatprep.subr.mxu0 0.0
        %1279 = vmatpush1.msra.mxu0 0.0
        %1280 = vmatprep.mubr.f32.mxu0 0.0
        %1281 = vmatmul.mubr.f32.gmra.mrb[0].mxu0 %v1191
        %v1282 = vpop.f32.mrb[0].mxu0
        %v1283 = vadd.f32 0.0, %v1282
        %v1284 = vpop.f32.mrb[0].mxu0
        %1285 = vmatprep.mubr.f32.mxu0 0.0
        %1286 = vmatmul.mubr.f32.gmra.mrb[0].mxu0 %v1192
        %v1287 = vpop.f32.mrb[0].mxu0
        %v1288 = vadd.f32 0.0, %v1287
        %v1289 = vpop.f32.mrb[0].mxu0
        %1290 = vmatprep.mubr.f32.mxu0 0.0
        %1291 = vmatmul.mubr.f32.gmra.mrb[0].mxu0 %v1193
        %v1292 = vpop.f32.mrb[0].mxu0
        %v1293 = vadd.f32 0.0, %v1292
        %v1294 = vpop.f32.mrb[0].mxu0
        %1295 = vmatprep.mubr.f32.mxu0 0.0
        %1296 = vmatmul.mubr.f32.gmra.mrb[0].mxu0 %v1194
        %v1297 = vpop.f32.mrb[0].mxu0
        %v1298 = vadd.f32 0.0, %v1297
        %v1299 = vpop.f32.mrb[0].mxu0
        %1300 = vmatprep.mubr.f32.mxu0 0.0
        %1301 = vmatmul.mubr.f32.gmra.mrb[0].mxu0 %v1195
        %v1302 = vpop.f32.mrb[0].mxu0
        %v1303 = vadd.f32 0.0, %v1302
        %v1304 = vpop.f32.mrb[0].mxu0
        %1305 = vmatprep.mubr.f32.mxu0 0.0
        %1306 = vmatmul.mubr.f32.gmra.mrb[0].mxu0 %v1196
        %v1307 = vpop.f32.mrb[0].mxu0
        %v1308 = vadd.f32 0.0, %v1307
        %v1309 = vpop.f32.mrb[0].mxu0
        %1310 = vmatprep.mubr.f32.mxu0 0.0
        %1311 = vmatmul.mubr.f32.gmra.mrb[0].mxu0 %v1197
        %v1312 = vpop.f32.mrb[0].mxu0
        %v1313 = vadd.f32 0.0, %v1312
        %v1314 = vpop.f32.mrb[0].mxu0
        %1315 = vmatprep.mubr.f32.mxu0 0.0
        %1316 = vmatmul.mubr.f32.gmra.mrb[0].mxu0 %v1198
        %v1317 = vpop.f32.mrb[0].mxu0
        %v1318 = vadd.f32 0.0, %v1317
        %v1319 = vpop.f32.mrb[0].mxu0
        %1320 = vdwg.mxu0
        %v1321 = vld [vmem:[#allocation4] sm:$0xff]
        %v1322 = vld [vmem:[#allocation4 + $0x8] sm:$0xff]
        %v1323 = vld [vmem:[#allocation4 + $0x10] sm:$0xff]
        %v1324 = vld [vmem:[#allocation4 + $0x18] sm:$0xff]
        %v1325 = vld [vmem:[#allocation4 + $0x20] sm:$0xff]
        %v1326 = vld [vmem:[#allocation4 + $0x28] sm:$0xff]
        %v1327 = vld [vmem:[#allocation4 + $0x30] sm:$0xff]
        %v1328 = vld [vmem:[#allocation4 + $0x38] sm:$0xff]
        %v1329 = vadd.f32 %v1321, %v1283
        %v1330 = vadd.f32 %v1322, %v1288
        %v1331 = vadd.f32 %v1323, %v1293
        %v1332 = vadd.f32 %v1324, %v1298
        %v1333 = vadd.f32 %v1325, %v1303
        %v1334 = vadd.f32 %v1326, %v1308
        %v1335 = vadd.f32 %v1327, %v1313
        %v1336 = vadd.f32 %v1328, %v1318
        %1337 = vst [vmem:[#allocation4] sm:$0xff] %v1329
        %1338 = vst [vmem:[#allocation4 + $0x8] sm:$0xff] %v1330
        %1339 = vst [vmem:[#allocation4 + $0x10] sm:$0xff] %v1331
        %1340 = vst [vmem:[#allocation4 + $0x18] sm:$0xff] %v1332
        %1341 = vst [vmem:[#allocation4 + $0x20] sm:$0xff] %v1333
        %1342 = vst [vmem:[#allocation4 + $0x28] sm:$0xff] %v1334
        %1343 = vst [vmem:[#allocation4 + $0x30] sm:$0xff] %v1335
        %1344 = vst [vmem:[#allocation4 + $0x38] sm:$0xff] %v1336
        %v1345 = vld [vmem:[%s868] sm:$0xff]
        %v1346 = vld [vmem:[%s868 + $0x8] sm:$0xff]
        %v1347 = vld [vmem:[%s868 + $0x10] sm:$0xff]
        %v1348 = vld [vmem:[%s868 + $0x18] sm:$0xff]
        %v1349 = vld [vmem:[%s868 + $0x20] sm:$0xff]
        %v1350 = vld [vmem:[%s868 + $0x28] sm:$0xff]
        %v1351 = vld [vmem:[%s868 + $0x30] sm:$0xff]
        %v1352 = vld [vmem:[%s868 + $0x38] sm:$0xff]
        %s1353 = scalar_lea.vmem %s1, 768
        %v1354 = vld [vmem:[%s1353] sm:$0xff]
        %v1355 = vld [vmem:[%s1353 + $0x8] sm:$0xff]
        %v1356 = vld [vmem:[%s1353 + $0x10] sm:$0xff]
        %v1357 = vld [vmem:[%s1353 + $0x18] sm:$0xff]
        %v1358 = vld [vmem:[%s1353 + $0x20] sm:$0xff]
        %v1359 = vld [vmem:[%s1353 + $0x28] sm:$0xff]
        %v1360 = vld [vmem:[%s1353 + $0x30] sm:$0xff]
        %v1361 = vld [vmem:[%s1353 + $0x38] sm:$0xff]
        %v1362 = vld [vmem:[%s1353 + $0x40] sm:$0xff]
        %v1363 = vld [vmem:[%s1353 + $0x48] sm:$0xff]
        %v1364 = vld [vmem:[%s1353 + $0x50] sm:$0xff]
        %v1365 = vld [vmem:[%s1353 + $0x58] sm:$0xff]
        %v1366 = vld [vmem:[%s1353 + $0x60] sm:$0xff]
        %v1367 = vld [vmem:[%s1353 + $0x68] sm:$0xff]
        %v1368 = vld [vmem:[%s1353 + $0x70] sm:$0xff]
        %v1369 = vld [vmem:[%s1353 + $0x78] sm:$0xff]
        %1370 = vmatprep.subr.mxu0 0.0
        %1371 = vmatpush1.msra.mxu0 %v1354
        %1372 = vmatprep.subr.mxu0 0.0
        %1373 = vmatpush1.msra.mxu0 %v1355
        %1374 = vmatprep.subr.mxu0 0.0
        %1375 = vmatpush1.msra.mxu0 %v1356
        %1376 = vmatprep.subr.mxu0 0.0
        %1377 = vmatpush1.msra.mxu0 %v1357
        %1378 = vmatprep.subr.mxu0 0.0
        %1379 = vmatpush1.msra.mxu0 %v1358
        %1380 = vmatprep.subr.mxu0 0.0
        %1381 = vmatpush1.msra.mxu0 %v1359
        %1382 = vmatprep.subr.mxu0 0.0
        %1383 = vmatpush1.msra.mxu0 %v1360
        %1384 = vmatprep.subr.mxu0 0.0
        %1385 = vmatpush1.msra.mxu0 %v1361
        %1386 = vmatprep.subr.mxu0 0.0
        %1387 = vmatpush1.msra.mxu0 %v1362
        %1388 = vmatprep.subr.mxu0 0.0
        %1389 = vmatpush1.msra.mxu0 %v1363
        %1390 = vmatprep.subr.mxu0 0.0
        %1391 = vmatpush1.msra.mxu0 %v1364
        %1392 = vmatprep.subr.mxu0 0.0
        %1393 = vmatpush1.msra.mxu0 %v1365
        %1394 = vmatprep.subr.mxu0 0.0
        %1395 = vmatpush1.msra.mxu0 %v1366
        %1396 = vmatprep.subr.mxu0 0.0
        %1397 = vmatpush1.msra.mxu0 %v1367
        %1398 = vmatprep.subr.mxu0 0.0
        %1399 = vmatpush1.msra.mxu0 %v1368
        %1400 = vmatprep.subr.mxu0 0.0
        %1401 = vmatpush1.msra.mxu0 %v1369
        %1402 = vmatprep.subr.mxu0 0.0
        %1403 = vmatpush1.msra.mxu0 0.0
        %1404 = vmatprep.subr.mxu0 0.0
        %1405 = vmatpush1.msra.mxu0 0.0
        %1406 = vmatprep.subr.mxu0 0.0
        %1407 = vmatpush1.msra.mxu0 0.0
        %1408 = vmatprep.subr.mxu0 0.0
        %1409 = vmatpush1.msra.mxu0 0.0
        %1410 = vmatprep.subr.mxu0 0.0
        %1411 = vmatpush1.msra.mxu0 0.0
        %1412 = vmatprep.subr.mxu0 0.0
        %1413 = vmatpush1.msra.mxu0 0.0
        %1414 = vmatprep.subr.mxu0 0.0
        %1415 = vmatpush1.msra.mxu0 0.0
        %1416 = vmatprep.subr.mxu0 0.0
        %1417 = vmatpush1.msra.mxu0 0.0
        %1418 = vmatprep.subr.mxu0 0.0
        %1419 = vmatpush1.msra.mxu0 0.0
        %1420 = vmatprep.subr.mxu0 0.0
        %1421 = vmatpush1.msra.mxu0 0.0
        %1422 = vmatprep.subr.mxu0 0.0
        %1423 = vmatpush1.msra.mxu0 0.0
        %1424 = vmatprep.subr.mxu0 0.0
        %1425 = vmatpush1.msra.mxu0 0.0
        %1426 = vmatprep.subr.mxu0 0.0
        %1427 = vmatpush1.msra.mxu0 0.0
        %1428 = vmatprep.subr.mxu0 0.0
        %1429 = vmatpush1.msra.mxu0 0.0
        %1430 = vmatprep.subr.mxu0 0.0
        %1431 = vmatpush1.msra.mxu0 0.0
        %1432 = vmatprep.subr.mxu0 0.0
        %1433 = vmatpush1.msra.mxu0 0.0
        %1434 = vmatprep.mubr.f32.mxu0 0.0
        %1435 = vmatmul.mubr.f32.gmra.mrb[0].mxu0 %v1345
        %v1436 = vpop.f32.mrb[0].mxu0
        %v1437 = vadd.f32 0.0, %v1436
        %v1438 = vpop.f32.mrb[0].mxu0
        %1439 = vmatprep.mubr.f32.mxu0 0.0
        %1440 = vmatmul.mubr.f32.gmra.mrb[0].mxu0 %v1346
        %v1441 = vpop.f32.mrb[0].mxu0
        %v1442 = vadd.f32 0.0, %v1441
        %v1443 = vpop.f32.mrb[0].mxu0
        %1444 = vmatprep.mubr.f32.mxu0 0.0
        %1445 = vmatmul.mubr.f32.gmra.mrb[0].mxu0 %v1347
        %v1446 = vpop.f32.mrb[0].mxu0
        %v1447 = vadd.f32 0.0, %v1446
        %v1448 = vpop.f32.mrb[0].mxu0
        %1449 = vmatprep.mubr.f32.mxu0 0.0
        %1450 = vmatmul.mubr.f32.gmra.mrb[0].mxu0 %v1348
        %v1451 = vpop.f32.mrb[0].mxu0
        %v1452 = vadd.f32 0.0, %v1451
        %v1453 = vpop.f32.mrb[0].mxu0
        %1454 = vmatprep.mubr.f32.mxu0 0.0
        %1455 = vmatmul.mubr.f32.gmra.mrb[0].mxu0 %v1349
        %v1456 = vpop.f32.mrb[0].mxu0
        %v1457 = vadd.f32 0.0, %v1456
        %v1458 = vpop.f32.mrb[0].mxu0
        %1459 = vmatprep.mubr.f32.mxu0 0.0
        %1460 = vmatmul.mubr.f32.gmra.mrb[0].mxu0 %v1350
        %v1461 = vpop.f32.mrb[0].mxu0
        %v1462 = vadd.f32 0.0, %v1461
        %v1463 = vpop.f32.mrb[0].mxu0
        %1464 = vmatprep.mubr.f32.mxu0 0.0
        %1465 = vmatmul.mubr.f32.gmra.mrb[0].mxu0 %v1351
        %v1466 = vpop.f32.mrb[0].mxu0
        %v1467 = vadd.f32 0.0, %v1466
        %v1468 = vpop.f32.mrb[0].mxu0
        %1469 = vmatprep.mubr.f32.mxu0 0.0
        %1470 = vmatmul.mubr.f32.gmra.mrb[0].mxu0 %v1352
        %v1471 = vpop.f32.mrb[0].mxu0
        %v1472 = vadd.f32 0.0, %v1471
        %v1473 = vpop.f32.mrb[0].mxu0
        %1474 = vdwg.mxu0
        %v1475 = vld [vmem:[#allocation4] sm:$0xff]
        %v1476 = vld [vmem:[#allocation4 + $0x8] sm:$0xff]
        %v1477 = vld [vmem:[#allocation4 + $0x10] sm:$0xff]
        %v1478 = vld [vmem:[#allocation4 + $0x18] sm:$0xff]
        %v1479 = vld [vmem:[#allocation4 + $0x20] sm:$0xff]
        %v1480 = vld [vmem:[#allocation4 + $0x28] sm:$0xff]
        %v1481 = vld [vmem:[#allocation4 + $0x30] sm:$0xff]
        %v1482 = vld [vmem:[#allocation4 + $0x38] sm:$0xff]
        %v1483 = vadd.f32 %v1475, %v1437
        %v1484 = vadd.f32 %v1476, %v1442
        %v1485 = vadd.f32 %v1477, %v1447
        %v1486 = vadd.f32 %v1478, %v1452
        %v1487 = vadd.f32 %v1479, %v1457
        %v1488 = vadd.f32 %v1480, %v1462
        %v1489 = vadd.f32 %v1481, %v1467
        %v1490 = vadd.f32 %v1482, %v1472
        %1491 = vst [vmem:[#allocation4] sm:$0xff] %v1483
        %1492 = vst [vmem:[#allocation4 + $0x8] sm:$0xff] %v1484
        %1493 = vst [vmem:[#allocation4 + $0x10] sm:$0xff] %v1485
        %1494 = vst [vmem:[#allocation4 + $0x18] sm:$0xff] %v1486
        %1495 = vst [vmem:[#allocation4 + $0x20] sm:$0xff] %v1487
        %1496 = vst [vmem:[#allocation4 + $0x28] sm:$0xff] %v1488
        %1497 = vst [vmem:[#allocation4 + $0x30] sm:$0xff] %v1489
        %1498 = vst [vmem:[#allocation4 + $0x38] sm:$0xff] %v1490
        %s1499 = scalar_lea.vmem [#allocation3], 208
        %v1500 = vld [vmem:[%s1499] sm:$0xff]
        %v1501 = vld [vmem:[%s1499 + $0x8] sm:$0xff]
        %v1502 = vld [vmem:[%s1499 + $0x10] sm:$0xff]
        %v1503 = vld [vmem:[%s1499 + $0x18] sm:$0xff]
        %v1504 = vld [vmem:[%s1499 + $0x20] sm:$0xff]
        %v1505 = vld [vmem:[%s1499 + $0x28] sm:$0xff]
        %v1506 = vld [vmem:[%s1499 + $0x30] sm:$0xff]
        %v1507 = vld [vmem:[%s1499 + $0x38] sm:$0xff]
        %s1508 = scalar_lea.vmem %s1, 896
        %v1509 = vld [vmem:[%s1508] sm:$0xff]
        %v1510 = vld [vmem:[%s1508 + $0x8] sm:$0xff]
        %v1511 = vld [vmem:[%s1508 + $0x10] sm:$0xff]
        %v1512 = vld [vmem:[%s1508 + $0x18] sm:$0xff]
        %v1513 = vld [vmem:[%s1508 + $0x20] sm:$0xff]
        %v1514 = vld [vmem:[%s1508 + $0x28] sm:$0xff]
        %v1515 = vld [vmem:[%s1508 + $0x30] sm:$0xff]
        %v1516 = vld [vmem:[%s1508 + $0x38] sm:$0xff]
        %v1517 = vld [vmem:[%s1508 + $0x40] sm:$0xff]
        %v1518 = vld [vmem:[%s1508 + $0x48] sm:$0xff]
        %v1519 = vld [vmem:[%s1508 + $0x50] sm:$0xff]
        %v1520 = vld [vmem:[%s1508 + $0x58] sm:$0xff]
        %v1521 = vld [vmem:[%s1508 + $0x60] sm:$0xff]
        %v1522 = vld [vmem:[%s1508 + $0x68] sm:$0xff]
        %v1523 = vld [vmem:[%s1508 + $0x70] sm:$0xff]
        %v1524 = vld [vmem:[%s1508 + $0x78] sm:$0xff]
        %1525 = vmatprep.subr.mxu0 0.0
        %1526 = vmatpush1.msra.mxu0 %v1509
        %1527 = vmatprep.subr.mxu0 0.0
        %1528 = vmatpush1.msra.mxu0 %v1510
        %1529 = vmatprep.subr.mxu0 0.0
        %1530 = vmatpush1.msra.mxu0 %v1511
        %1531 = vmatprep.subr.mxu0 0.0
        %1532 = vmatpush1.msra.mxu0 %v1512
        %1533 = vmatprep.subr.mxu0 0.0
        %1534 = vmatpush1.msra.mxu0 %v1513
        %1535 = vmatprep.subr.mxu0 0.0
        %1536 = vmatpush1.msra.mxu0 %v1514
        %1537 = vmatprep.subr.mxu0 0.0
        %1538 = vmatpush1.msra.mxu0 %v1515
        %1539 = vmatprep.subr.mxu0 0.0
        %1540 = vmatpush1.msra.mxu0 %v1516
        %1541 = vmatprep.subr.mxu0 0.0
        %1542 = vmatpush1.msra.mxu0 %v1517
        %1543 = vmatprep.subr.mxu0 0.0
        %1544 = vmatpush1.msra.mxu0 %v1518
        %1545 = vmatprep.subr.mxu0 0.0
        %1546 = vmatpush1.msra.mxu0 %v1519
        %1547 = vmatprep.subr.mxu0 0.0
        %1548 = vmatpush1.msra.mxu0 %v1520
        %1549 = vmatprep.subr.mxu0 0.0
        %1550 = vmatpush1.msra.mxu0 %v1521
        %1551 = vmatprep.subr.mxu0 0.0
        %1552 = vmatpush1.msra.mxu0 %v1522
        %1553 = vmatprep.subr.mxu0 0.0
        %1554 = vmatpush1.msra.mxu0 %v1523
        %1555 = vmatprep.subr.mxu0 0.0
        %1556 = vmatpush1.msra.mxu0 %v1524
        %1557 = vmatprep.subr.mxu0 0.0
        %1558 = vmatpush1.msra.mxu0 0.0
        %1559 = vmatprep.subr.mxu0 0.0
        %1560 = vmatpush1.msra.mxu0 0.0
        %1561 = vmatprep.subr.mxu0 0.0
        %1562 = vmatpush1.msra.mxu0 0.0
        %1563 = vmatprep.subr.mxu0 0.0
        %1564 = vmatpush1.msra.mxu0 0.0
        %1565 = vmatprep.subr.mxu0 0.0
        %1566 = vmatpush1.msra.mxu0 0.0
        %1567 = vmatprep.subr.mxu0 0.0
        %1568 = vmatpush1.msra.mxu0 0.0
        %1569 = vmatprep.subr.mxu0 0.0
        %1570 = vmatpush1.msra.mxu0 0.0
        %1571 = vmatprep.subr.mxu0 0.0
        %1572 = vmatpush1.msra.mxu0 0.0
        %1573 = vmatprep.subr.mxu0 0.0
        %1574 = vmatpush1.msra.mxu0 0.0
        %1575 = vmatprep.subr.mxu0 0.0
        %1576 = vmatpush1.msra.mxu0 0.0
        %1577 = vmatprep.subr.mxu0 0.0
        %1578 = vmatpush1.msra.mxu0 0.0
        %1579 = vmatprep.subr.mxu0 0.0
        %1580 = vmatpush1.msra.mxu0 0.0
        %1581 = vmatprep.subr.mxu0 0.0
        %1582 = vmatpush1.msra.mxu0 0.0
        %1583 = vmatprep.subr.mxu0 0.0
        %1584 = vmatpush1.msra.mxu0 0.0
        %1585 = vmatprep.subr.mxu0 0.0
        %1586 = vmatpush1.msra.mxu0 0.0
        %1587 = vmatprep.subr.mxu0 0.0
        %1588 = vmatpush1.msra.mxu0 0.0
        %1589 = vmatprep.mubr.f32.mxu0 0.0
        %1590 = vmatmul.mubr.f32.gmra.mrb[0].mxu0 %v1500
        %v1591 = vpop.f32.mrb[0].mxu0
        %v1592 = vadd.f32 0.0, %v1591
        %v1593 = vpop.f32.mrb[0].mxu0
        %1594 = vmatprep.mubr.f32.mxu0 0.0
        %1595 = vmatmul.mubr.f32.gmra.mrb[0].mxu0 %v1501
        %v1596 = vpop.f32.mrb[0].mxu0
        %v1597 = vadd.f32 0.0, %v1596
        %v1598 = vpop.f32.mrb[0].mxu0
        %1599 = vmatprep.mubr.f32.mxu0 0.0
        %1600 = vmatmul.mubr.f32.gmra.mrb[0].mxu0 %v1502
        %v1601 = vpop.f32.mrb[0].mxu0
        %v1602 = vadd.f32 0.0, %v1601
        %v1603 = vpop.f32.mrb[0].mxu0
        %1604 = vmatprep.mubr.f32.mxu0 0.0
        %1605 = vmatmul.mubr.f32.gmra.mrb[0].mxu0 %v1503
        %v1606 = vpop.f32.mrb[0].mxu0
        %v1607 = vadd.f32 0.0, %v1606
        %v1608 = vpop.f32.mrb[0].mxu0
        %1609 = vmatprep.mubr.f32.mxu0 0.0
        %1610 = vmatmul.mubr.f32.gmra.mrb[0].mxu0 %v1504
        %v1611 = vpop.f32.mrb[0].mxu0
        %v1612 = vadd.f32 0.0, %v1611
        %v1613 = vpop.f32.mrb[0].mxu0
        %1614 = vmatprep.mubr.f32.mxu0 0.0
        %1615 = vmatmul.mubr.f32.gmra.mrb[0].mxu0 %v1505
        %v1616 = vpop.f32.mrb[0].mxu0
        %v1617 = vadd.f32 0.0, %v1616
        %v1618 = vpop.f32.mrb[0].mxu0
        %1619 = vmatprep.mubr.f32.mxu0 0.0
        %1620 = vmatmul.mubr.f32.gmra.mrb[0].mxu0 %v1506
        %v1621 = vpop.f32.mrb[0].mxu0
        %v1622 = vadd.f32 0.0, %v1621
        %v1623 = vpop.f32.mrb[0].mxu0
        %1624 = vmatprep.mubr.f32.mxu0 0.0
        %1625 = vmatmul.mubr.f32.gmra.mrb[0].mxu0 %v1507
        %v1626 = vpop.f32.mrb[0].mxu0
        %v1627 = vadd.f32 0.0, %v1626
        %v1628 = vpop.f32.mrb[0].mxu0
        %1629 = vdwg.mxu0
        %v1630 = vld [vmem:[#allocation4] sm:$0xff]
        %v1631 = vld [vmem:[#allocation4 + $0x8] sm:$0xff]
        %v1632 = vld [vmem:[#allocation4 + $0x10] sm:$0xff]
        %v1633 = vld [vmem:[#allocation4 + $0x18] sm:$0xff]
        %v1634 = vld [vmem:[#allocation4 + $0x20] sm:$0xff]
        %v1635 = vld [vmem:[#allocation4 + $0x28] sm:$0xff]
        %v1636 = vld [vmem:[#allocation4 + $0x30] sm:$0xff]
        %v1637 = vld [vmem:[#allocation4 + $0x38] sm:$0xff]
        %v1638 = vadd.f32 %v1630, %v1592
        %v1639 = vadd.f32 %v1631, %v1597
        %v1640 = vadd.f32 %v1632, %v1602
        %v1641 = vadd.f32 %v1633, %v1607
        %v1642 = vadd.f32 %v1634, %v1612
        %v1643 = vadd.f32 %v1635, %v1617
        %v1644 = vadd.f32 %v1636, %v1622
        %v1645 = vadd.f32 %v1637, %v1627
        %1646 = vst [vmem:[#allocation4] sm:$0xff] %v1638
        %1647 = vst [vmem:[#allocation4 + $0x8] sm:$0xff] %v1639
        %1648 = vst [vmem:[#allocation4 + $0x10] sm:$0xff] %v1640
        %1649 = vst [vmem:[#allocation4 + $0x18] sm:$0xff] %v1641
        %1650 = vst [vmem:[#allocation4 + $0x20] sm:$0xff] %v1642
        %1651 = vst [vmem:[#allocation4 + $0x28] sm:$0xff] %v1643
        %1652 = vst [vmem:[#allocation4 + $0x30] sm:$0xff] %v1644
        %1653 = vst [vmem:[#allocation4 + $0x38] sm:$0xff] %v1645
        %v1654 = vld [vmem:[#allocation4] sm:$0xff]
        %v1655 = vld [vmem:[#allocation4 + $0x8] sm:$0xff]
        %v1656 = vld [vmem:[#allocation4 + $0x10] sm:$0xff]
        %v1657 = vld [vmem:[#allocation4 + $0x18] sm:$0xff]
        %v1658 = vld [vmem:[#allocation4 + $0x20] sm:$0xff]
        %v1659 = vld [vmem:[#allocation4 + $0x28] sm:$0xff]
        %v1660 = vld [vmem:[#allocation4 + $0x30] sm:$0xff]
        %v1661 = vld [vmem:[#allocation4 + $0x38] sm:$0xff]
        %v1662 = vadd.f32 %v1654, %v1035
        %v1663 = vadd.f32 %v1655, %v1035
        %v1664 = vadd.f32 %v1656, %v1035
        %v1665 = vadd.f32 %v1657, %v1035
        %v1666 = vadd.f32 %v1658, %v1035
        %v1667 = vadd.f32 %v1659, %v1035
        %v1668 = vadd.f32 %v1660, %v1035
        %v1669 = vadd.f32 %v1661, %v1035
        %s1670 = scalar_lea.vmem %s143, 64 [#allocation6]
        %1671 = vst [vmem:[%s1670] sm:$0xff] %v1662
        %1672 = vst [vmem:[%s1670 + $0x8] sm:$0xff] %v1663
        %1673 = vst [vmem:[%s1670 + $0x10] sm:$0xff] %v1664
        %1674 = vst [vmem:[%s1670 + $0x18] sm:$0xff] %v1665
        %1675 = vst [vmem:[%s1670 + $0x20] sm:$0xff] %v1666
        %1676 = vst [vmem:[%s1670 + $0x28] sm:$0xff] %v1667
        %1677 = vst [vmem:[%s1670 + $0x30] sm:$0xff] %v1668
        %1678 = vst [vmem:[%s1670 + $0x38] sm:$0xff] %v1669
        %v1679 = vld [vmem:[%s713] sm:$0xff]
        %v1680 = vld [vmem:[%s713 + $0x8] sm:$0xff]
        %v1681 = vld [vmem:[%s713 + $0x10] sm:$0xff]
        %v1682 = vld [vmem:[%s713 + $0x18] sm:$0xff]
        %v1683 = vld [vmem:[%s713 + $0x20] sm:$0xff]
        %v1684 = vld [vmem:[%s713 + $0x28] sm:$0xff]
        %v1685 = vld [vmem:[%s713 + $0x30] sm:$0xff]
        %v1686 = vld [vmem:[%s713 + $0x38] sm:$0xff]
        %s1687 = scalar_lea.vmem %s1, 1024
        %v1688 = vld [vmem:[%s1687] sm:$0xff]
        %v1689 = vld [vmem:[%s1687 + $0x8] sm:$0xff]
        %v1690 = vld [vmem:[%s1687 + $0x10] sm:$0xff]
        %v1691 = vld [vmem:[%s1687 + $0x18] sm:$0xff]
        %v1692 = vld [vmem:[%s1687 + $0x20] sm:$0xff]
        %v1693 = vld [vmem:[%s1687 + $0x28] sm:$0xff]
        %v1694 = vld [vmem:[%s1687 + $0x30] sm:$0xff]
        %v1695 = vld [vmem:[%s1687 + $0x38] sm:$0xff]
        %v1696 = vld [vmem:[%s1687 + $0x40] sm:$0xff]
        %v1697 = vld [vmem:[%s1687 + $0x48] sm:$0xff]
        %v1698 = vld [vmem:[%s1687 + $0x50] sm:$0xff]
        %v1699 = vld [vmem:[%s1687 + $0x58] sm:$0xff]
        %v1700 = vld [vmem:[%s1687 + $0x60] sm:$0xff]
        %v1701 = vld [vmem:[%s1687 + $0x68] sm:$0xff]
        %v1702 = vld [vmem:[%s1687 + $0x70] sm:$0xff]
        %v1703 = vld [vmem:[%s1687 + $0x78] sm:$0xff]
        %1704 = vmatprep.subr.mxu0 0.0
        %1705 = vmatpush1.msra.mxu0 %v1688
        %1706 = vmatprep.subr.mxu0 0.0
        %1707 = vmatpush1.msra.mxu0 %v1689
        %1708 = vmatprep.subr.mxu0 0.0
        %1709 = vmatpush1.msra.mxu0 %v1690
        %1710 = vmatprep.subr.mxu0 0.0
        %1711 = vmatpush1.msra.mxu0 %v1691
        %1712 = vmatprep.subr.mxu0 0.0
        %1713 = vmatpush1.msra.mxu0 %v1692
        %1714 = vmatprep.subr.mxu0 0.0
        %1715 = vmatpush1.msra.mxu0 %v1693
        %1716 = vmatprep.subr.mxu0 0.0
        %1717 = vmatpush1.msra.mxu0 %v1694
        %1718 = vmatprep.subr.mxu0 0.0
        %1719 = vmatpush1.msra.mxu0 %v1695
        %1720 = vmatprep.subr.mxu0 0.0
        %1721 = vmatpush1.msra.mxu0 %v1696
        %1722 = vmatprep.subr.mxu0 0.0
        %1723 = vmatpush1.msra.mxu0 %v1697
        %1724 = vmatprep.subr.mxu0 0.0
        %1725 = vmatpush1.msra.mxu0 %v1698
        %1726 = vmatprep.subr.mxu0 0.0
        %1727 = vmatpush1.msra.mxu0 %v1699
        %1728 = vmatprep.subr.mxu0 0.0
        %1729 = vmatpush1.msra.mxu0 %v1700
        %1730 = vmatprep.subr.mxu0 0.0
        %1731 = vmatpush1.msra.mxu0 %v1701
        %1732 = vmatprep.subr.mxu0 0.0
        %1733 = vmatpush1.msra.mxu0 %v1702
        %1734 = vmatprep.subr.mxu0 0.0
        %1735 = vmatpush1.msra.mxu0 %v1703
        %1736 = vmatprep.subr.mxu0 0.0
        %1737 = vmatpush1.msra.mxu0 0.0
        %1738 = vmatprep.subr.mxu0 0.0
        %1739 = vmatpush1.msra.mxu0 0.0
        %1740 = vmatprep.subr.mxu0 0.0
        %1741 = vmatpush1.msra.mxu0 0.0
        %1742 = vmatprep.subr.mxu0 0.0
        %1743 = vmatpush1.msra.mxu0 0.0
        %1744 = vmatprep.subr.mxu0 0.0
        %1745 = vmatpush1.msra.mxu0 0.0
        %1746 = vmatprep.subr.mxu0 0.0
        %1747 = vmatpush1.msra.mxu0 0.0
        %1748 = vmatprep.subr.mxu0 0.0
        %1749 = vmatpush1.msra.mxu0 0.0
        %1750 = vmatprep.subr.mxu0 0.0
        %1751 = vmatpush1.msra.mxu0 0.0
        %1752 = vmatprep.subr.mxu0 0.0
        %1753 = vmatpush1.msra.mxu0 0.0
        %1754 = vmatprep.subr.mxu0 0.0
        %1755 = vmatpush1.msra.mxu0 0.0
        %1756 = vmatprep.subr.mxu0 0.0
        %1757 = vmatpush1.msra.mxu0 0.0
        %1758 = vmatprep.subr.mxu0 0.0
        %1759 = vmatpush1.msra.mxu0 0.0
        %1760 = vmatprep.subr.mxu0 0.0
        %1761 = vmatpush1.msra.mxu0 0.0
        %1762 = vmatprep.subr.mxu0 0.0
        %1763 = vmatpush1.msra.mxu0 0.0
        %1764 = vmatprep.subr.mxu0 0.0
        %1765 = vmatpush1.msra.mxu0 0.0
        %1766 = vmatprep.subr.mxu0 0.0
        %1767 = vmatpush1.msra.mxu0 0.0
        %1768 = vmatprep.mubr.f32.mxu0 0.0
        %1769 = vmatmul.mubr.f32.gmra.mrb[0].mxu0 %v1679
        %v1770 = vpop.f32.mrb[0].mxu0
        %v1771 = vadd.f32 0.0, %v1770
        %v1772 = vpop.f32.mrb[0].mxu0
        %1773 = vmatprep.mubr.f32.mxu0 0.0
        %1774 = vmatmul.mubr.f32.gmra.mrb[0].mxu0 %v1680
        %v1775 = vpop.f32.mrb[0].mxu0
        %v1776 = vadd.f32 0.0, %v1775
        %v1777 = vpop.f32.mrb[0].mxu0
        %1778 = vmatprep.mubr.f32.mxu0 0.0
        %1779 = vmatmul.mubr.f32.gmra.mrb[0].mxu0 %v1681
        %v1780 = vpop.f32.mrb[0].mxu0
        %v1781 = vadd.f32 0.0, %v1780
        %v1782 = vpop.f32.mrb[0].mxu0
        %1783 = vmatprep.mubr.f32.mxu0 0.0
        %1784 = vmatmul.mubr.f32.gmra.mrb[0].mxu0 %v1682
        %v1785 = vpop.f32.mrb[0].mxu0
        %v1786 = vadd.f32 0.0, %v1785
        %v1787 = vpop.f32.mrb[0].mxu0
        %1788 = vmatprep.mubr.f32.mxu0 0.0
        %1789 = vmatmul.mubr.f32.gmra.mrb[0].mxu0 %v1683
        %v1790 = vpop.f32.mrb[0].mxu0
        %v1791 = vadd.f32 0.0, %v1790
        %v1792 = vpop.f32.mrb[0].mxu0
        %1793 = vmatprep.mubr.f32.mxu0 0.0
        %1794 = vmatmul.mubr.f32.gmra.mrb[0].mxu0 %v1684
        %v1795 = vpop.f32.mrb[0].mxu0
        %v1796 = vadd.f32 0.0, %v1795
        %v1797 = vpop.f32.mrb[0].mxu0
        %1798 = vmatprep.mubr.f32.mxu0 0.0
        %1799 = vmatmul.mubr.f32.gmra.mrb[0].mxu0 %v1685
        %v1800 = vpop.f32.mrb[0].mxu0
        %v1801 = vadd.f32 0.0, %v1800
        %v1802 = vpop.f32.mrb[0].mxu0
        %1803 = vmatprep.mubr.f32.mxu0 0.0
        %1804 = vmatmul.mubr.f32.gmra.mrb[0].mxu0 %v1686
        %v1805 = vpop.f32.mrb[0].mxu0
        %v1806 = vadd.f32 0.0, %v1805
        %v1807 = vpop.f32.mrb[0].mxu0
        %1808 = vdwg.mxu0
        %1809 = vst [vmem:[#allocation4] sm:$0xff] %v1771
        %1810 = vst [vmem:[#allocation4 + $0x8] sm:$0xff] %v1776
        %1811 = vst [vmem:[#allocation4 + $0x10] sm:$0xff] %v1781
        %1812 = vst [vmem:[#allocation4 + $0x18] sm:$0xff] %v1786
        %1813 = vst [vmem:[#allocation4 + $0x20] sm:$0xff] %v1791
        %1814 = vst [vmem:[#allocation4 + $0x28] sm:$0xff] %v1796
        %1815 = vst [vmem:[#allocation4 + $0x30] sm:$0xff] %v1801
        %1816 = vst [vmem:[#allocation4 + $0x38] sm:$0xff] %v1806
        %v1817 = vld [vmem:[%s868] sm:$0xff]
        %v1818 = vld [vmem:[%s868 + $0x8] sm:$0xff]
        %v1819 = vld [vmem:[%s868 + $0x10] sm:$0xff]
        %v1820 = vld [vmem:[%s868 + $0x18] sm:$0xff]
        %v1821 = vld [vmem:[%s868 + $0x20] sm:$0xff]
        %v1822 = vld [vmem:[%s868 + $0x28] sm:$0xff]
        %v1823 = vld [vmem:[%s868 + $0x30] sm:$0xff]
        %v1824 = vld [vmem:[%s868 + $0x38] sm:$0xff]
        %s1825 = scalar_lea.vmem %s1, 1152
        %v1826 = vld [vmem:[%s1825] sm:$0xff]
        %v1827 = vld [vmem:[%s1825 + $0x8] sm:$0xff]
        %v1828 = vld [vmem:[%s1825 + $0x10] sm:$0xff]
        %v1829 = vld [vmem:[%s1825 + $0x18] sm:$0xff]
        %v1830 = vld [vmem:[%s1825 + $0x20] sm:$0xff]
        %v1831 = vld [vmem:[%s1825 + $0x28] sm:$0xff]
        %v1832 = vld [vmem:[%s1825 + $0x30] sm:$0xff]
        %v1833 = vld [vmem:[%s1825 + $0x38] sm:$0xff]
        %v1834 = vld [vmem:[%s1825 + $0x40] sm:$0xff]
        %v1835 = vld [vmem:[%s1825 + $0x48] sm:$0xff]
        %v1836 = vld [vmem:[%s1825 + $0x50] sm:$0xff]
        %v1837 = vld [vmem:[%s1825 + $0x58] sm:$0xff]
        %v1838 = vld [vmem:[%s1825 + $0x60] sm:$0xff]
        %v1839 = vld [vmem:[%s1825 + $0x68] sm:$0xff]
        %v1840 = vld [vmem:[%s1825 + $0x70] sm:$0xff]
        %v1841 = vld [vmem:[%s1825 + $0x78] sm:$0xff]
        %1842 = vmatprep.subr.mxu0 0.0
        %1843 = vmatpush1.msra.mxu0 %v1826
        %1844 = vmatprep.subr.mxu0 0.0
        %1845 = vmatpush1.msra.mxu0 %v1827
        %1846 = vmatprep.subr.mxu0 0.0
        %1847 = vmatpush1.msra.mxu0 %v1828
        %1848 = vmatprep.subr.mxu0 0.0
        %1849 = vmatpush1.msra.mxu0 %v1829
        %1850 = vmatprep.subr.mxu0 0.0
        %1851 = vmatpush1.msra.mxu0 %v1830
        %1852 = vmatprep.subr.mxu0 0.0
        %1853 = vmatpush1.msra.mxu0 %v1831
        %1854 = vmatprep.subr.mxu0 0.0
        %1855 = vmatpush1.msra.mxu0 %v1832
        %1856 = vmatprep.subr.mxu0 0.0
        %1857 = vmatpush1.msra.mxu0 %v1833
        %1858 = vmatprep.subr.mxu0 0.0
        %1859 = vmatpush1.msra.mxu0 %v1834
        %1860 = vmatprep.subr.mxu0 0.0
        %1861 = vmatpush1.msra.mxu0 %v1835
        %1862 = vmatprep.subr.mxu0 0.0
        %1863 = vmatpush1.msra.mxu0 %v1836
        %1864 = vmatprep.subr.mxu0 0.0
        %1865 = vmatpush1.msra.mxu0 %v1837
        %1866 = vmatprep.subr.mxu0 0.0
        %1867 = vmatpush1.msra.mxu0 %v1838
        %1868 = vmatprep.subr.mxu0 0.0
        %1869 = vmatpush1.msra.mxu0 %v1839
        %1870 = vmatprep.subr.mxu0 0.0
        %1871 = vmatpush1.msra.mxu0 %v1840
        %1872 = vmatprep.subr.mxu0 0.0
        %1873 = vmatpush1.msra.mxu0 %v1841
        %1874 = vmatprep.subr.mxu0 0.0
        %1875 = vmatpush1.msra.mxu0 0.0
        %1876 = vmatprep.subr.mxu0 0.0
        %1877 = vmatpush1.msra.mxu0 0.0
        %1878 = vmatprep.subr.mxu0 0.0
        %1879 = vmatpush1.msra.mxu0 0.0
        %1880 = vmatprep.subr.mxu0 0.0
        %1881 = vmatpush1.msra.mxu0 0.0
        %1882 = vmatprep.subr.mxu0 0.0
        %1883 = vmatpush1.msra.mxu0 0.0
        %1884 = vmatprep.subr.mxu0 0.0
        %1885 = vmatpush1.msra.mxu0 0.0
        %1886 = vmatprep.subr.mxu0 0.0
        %1887 = vmatpush1.msra.mxu0 0.0
        %1888 = vmatprep.subr.mxu0 0.0
        %1889 = vmatpush1.msra.mxu0 0.0
        %1890 = vmatprep.subr.mxu0 0.0
        %1891 = vmatpush1.msra.mxu0 0.0
        %1892 = vmatprep.subr.mxu0 0.0
        %1893 = vmatpush1.msra.mxu0 0.0
        %1894 = vmatprep.subr.mxu0 0.0
        %1895 = vmatpush1.msra.mxu0 0.0
        %1896 = vmatprep.subr.mxu0 0.0
        %1897 = vmatpush1.msra.mxu0 0.0
        %1898 = vmatprep.subr.mxu0 0.0
        %1899 = vmatpush1.msra.mxu0 0.0
        %1900 = vmatprep.subr.mxu0 0.0
        %1901 = vmatpush1.msra.mxu0 0.0
        %1902 = vmatprep.subr.mxu0 0.0
        %1903 = vmatpush1.msra.mxu0 0.0
        %1904 = vmatprep.subr.mxu0 0.0
        %1905 = vmatpush1.msra.mxu0 0.0
        %1906 = vmatprep.mubr.f32.mxu0 0.0
        %1907 = vmatmul.mubr.f32.gmra.mrb[0].mxu0 %v1817
        %v1908 = vpop.f32.mrb[0].mxu0
        %v1909 = vadd.f32 0.0, %v1908
        %v1910 = vpop.f32.mrb[0].mxu0
        %1911 = vmatprep.mubr.f32.mxu0 0.0
        %1912 = vmatmul.mubr.f32.gmra.mrb[0].mxu0 %v1818
        %v1913 = vpop.f32.mrb[0].mxu0
        %v1914 = vadd.f32 0.0, %v1913
        %v1915 = vpop.f32.mrb[0].mxu0
        %1916 = vmatprep.mubr.f32.mxu0 0.0
        %1917 = vmatmul.mubr.f32.gmra.mrb[0].mxu0 %v1819
        %v1918 = vpop.f32.mrb[0].mxu0
        %v1919 = vadd.f32 0.0, %v1918
        %v1920 = vpop.f32.mrb[0].mxu0
        %1921 = vmatprep.mubr.f32.mxu0 0.0
        %1922 = vmatmul.mubr.f32.gmra.mrb[0].mxu0 %v1820
        %v1923 = vpop.f32.mrb[0].mxu0
        %v1924 = vadd.f32 0.0, %v1923
        %v1925 = vpop.f32.mrb[0].mxu0
        %1926 = vmatprep.mubr.f32.mxu0 0.0
        %1927 = vmatmul.mubr.f32.gmra.mrb[0].mxu0 %v1821
        %v1928 = vpop.f32.mrb[0].mxu0
        %v1929 = vadd.f32 0.0, %v1928
        %v1930 = vpop.f32.mrb[0].mxu0
        %1931 = vmatprep.mubr.f32.mxu0 0.0
        %1932 = vmatmul.mubr.f32.gmra.mrb[0].mxu0 %v1822
        %v1933 = vpop.f32.mrb[0].mxu0
        %v1934 = vadd.f32 0.0, %v1933
        %v1935 = vpop.f32.mrb[0].mxu0
        %1936 = vmatprep.mubr.f32.mxu0 0.0
        %1937 = vmatmul.mubr.f32.gmra.mrb[0].mxu0 %v1823
        %v1938 = vpop.f32.mrb[0].mxu0
        %v1939 = vadd.f32 0.0, %v1938
        %v1940 = vpop.f32.mrb[0].mxu0
        %1941 = vmatprep.mubr.f32.mxu0 0.0
        %1942 = vmatmul.mubr.f32.gmra.mrb[0].mxu0 %v1824
        %v1943 = vpop.f32.mrb[0].mxu0
        %v1944 = vadd.f32 0.0, %v1943
        %v1945 = vpop.f32.mrb[0].mxu0
        %1946 = vdwg.mxu0
        %v1947 = vld [vmem:[#allocation4] sm:$0xff]
        %v1948 = vld [vmem:[#allocation4 + $0x8] sm:$0xff]
        %v1949 = vld [vmem:[#allocation4 + $0x10] sm:$0xff]
        %v1950 = vld [vmem:[#allocation4 + $0x18] sm:$0xff]
        %v1951 = vld [vmem:[#allocation4 + $0x20] sm:$0xff]
        %v1952 = vld [vmem:[#allocation4 + $0x28] sm:$0xff]
        %v1953 = vld [vmem:[#allocation4 + $0x30] sm:$0xff]
        %v1954 = vld [vmem:[#allocation4 + $0x38] sm:$0xff]
        %v1955 = vadd.f32 %v1947, %v1909
        %v1956 = vadd.f32 %v1948, %v1914
        %v1957 = vadd.f32 %v1949, %v1919
        %v1958 = vadd.f32 %v1950, %v1924
        %v1959 = vadd.f32 %v1951, %v1929
        %v1960 = vadd.f32 %v1952, %v1934
        %v1961 = vadd.f32 %v1953, %v1939
        %v1962 = vadd.f32 %v1954, %v1944
        %1963 = vst [vmem:[#allocation4] sm:$0xff] %v1955
        %1964 = vst [vmem:[#allocation4 + $0x8] sm:$0xff] %v1956
        %1965 = vst [vmem:[#allocation4 + $0x10] sm:$0xff] %v1957
        %1966 = vst [vmem:[#allocation4 + $0x18] sm:$0xff] %v1958
        %1967 = vst [vmem:[#allocation4 + $0x20] sm:$0xff] %v1959
        %1968 = vst [vmem:[#allocation4 + $0x28] sm:$0xff] %v1960
        %1969 = vst [vmem:[#allocation4 + $0x30] sm:$0xff] %v1961
        %1970 = vst [vmem:[#allocation4 + $0x38] sm:$0xff] %v1962
        %s1971 = scalar_lea.vmem [#allocation3], 32
        %v1972 = vld [vmem:[%s1971] sm:$0xff]
        %v1973 = vld [vmem:[%s1971 + $0x8] sm:$0xff]
        %v1974 = vld [vmem:[%s1971 + $0x10] sm:$0xff]
        %v1975 = vld [vmem:[%s1971 + $0x18] sm:$0xff]
        %v1976 = vld [vmem:[%s1971 + $0x20] sm:$0xff]
        %v1977 = vld [vmem:[%s1971 + $0x28] sm:$0xff]
        %v1978 = vld [vmem:[%s1971 + $0x30] sm:$0xff]
        %v1979 = vld [vmem:[%s1971 + $0x38] sm:$0xff]
        %s1980 = scalar_lea.vmem %s1, 1280
        %v1981 = vld [vmem:[%s1980] sm:$0xff]
        %v1982 = vld [vmem:[%s1980 + $0x8] sm:$0xff]
        %v1983 = vld [vmem:[%s1980 + $0x10] sm:$0xff]
        %v1984 = vld [vmem:[%s1980 + $0x18] sm:$0xff]
        %v1985 = vld [vmem:[%s1980 + $0x20] sm:$0xff]
        %v1986 = vld [vmem:[%s1980 + $0x28] sm:$0xff]
        %v1987 = vld [vmem:[%s1980 + $0x30] sm:$0xff]
        %v1988 = vld [vmem:[%s1980 + $0x38] sm:$0xff]
        %v1989 = vld [vmem:[%s1980 + $0x40] sm:$0xff]
        %v1990 = vld [vmem:[%s1980 + $0x48] sm:$0xff]
        %v1991 = vld [vmem:[%s1980 + $0x50] sm:$0xff]
        %v1992 = vld [vmem:[%s1980 + $0x58] sm:$0xff]
        %v1993 = vld [vmem:[%s1980 + $0x60] sm:$0xff]
        %v1994 = vld [vmem:[%s1980 + $0x68] sm:$0xff]
        %v1995 = vld [vmem:[%s1980 + $0x70] sm:$0xff]
        %v1996 = vld [vmem:[%s1980 + $0x78] sm:$0xff]
        %1997 = vmatprep.subr.mxu0 0.0
        %1998 = vmatpush1.msra.mxu0 %v1981
        %1999 = vmatprep.subr.mxu0 0.0
        %2000 = vmatpush1.msra.mxu0 %v1982
        %2001 = vmatprep.subr.mxu0 0.0
        %2002 = vmatpush1.msra.mxu0 %v1983
        %2003 = vmatprep.subr.mxu0 0.0
        %2004 = vmatpush1.msra.mxu0 %v1984
        %2005 = vmatprep.subr.mxu0 0.0
        %2006 = vmatpush1.msra.mxu0 %v1985
        %2007 = vmatprep.subr.mxu0 0.0
        %2008 = vmatpush1.msra.mxu0 %v1986
        %2009 = vmatprep.subr.mxu0 0.0
        %2010 = vmatpush1.msra.mxu0 %v1987
        %2011 = vmatprep.subr.mxu0 0.0
        %2012 = vmatpush1.msra.mxu0 %v1988
        %2013 = vmatprep.subr.mxu0 0.0
        %2014 = vmatpush1.msra.mxu0 %v1989
        %2015 = vmatprep.subr.mxu0 0.0
        %2016 = vmatpush1.msra.mxu0 %v1990
        %2017 = vmatprep.subr.mxu0 0.0
        %2018 = vmatpush1.msra.mxu0 %v1991
        %2019 = vmatprep.subr.mxu0 0.0
        %2020 = vmatpush1.msra.mxu0 %v1992
        %2021 = vmatprep.subr.mxu0 0.0
        %2022 = vmatpush1.msra.mxu0 %v1993
        %2023 = vmatprep.subr.mxu0 0.0
        %2024 = vmatpush1.msra.mxu0 %v1994
        %2025 = vmatprep.subr.mxu0 0.0
        %2026 = vmatpush1.msra.mxu0 %v1995
        %2027 = vmatprep.subr.mxu0 0.0
        %2028 = vmatpush1.msra.mxu0 %v1996
        %2029 = vmatprep.subr.mxu0 0.0
        %2030 = vmatpush1.msra.mxu0 0.0
        %2031 = vmatprep.subr.mxu0 0.0
        %2032 = vmatpush1.msra.mxu0 0.0
        %2033 = vmatprep.subr.mxu0 0.0
        %2034 = vmatpush1.msra.mxu0 0.0
        %2035 = vmatprep.subr.mxu0 0.0
        %2036 = vmatpush1.msra.mxu0 0.0
        %2037 = vmatprep.subr.mxu0 0.0
        %2038 = vmatpush1.msra.mxu0 0.0
        %2039 = vmatprep.subr.mxu0 0.0
        %2040 = vmatpush1.msra.mxu0 0.0
        %2041 = vmatprep.subr.mxu0 0.0
        %2042 = vmatpush1.msra.mxu0 0.0
        %2043 = vmatprep.subr.mxu0 0.0
        %2044 = vmatpush1.msra.mxu0 0.0
        %2045 = vmatprep.subr.mxu0 0.0
        %2046 = vmatpush1.msra.mxu0 0.0
        %2047 = vmatprep.subr.mxu0 0.0
        %2048 = vmatpush1.msra.mxu0 0.0
        %2049 = vmatprep.subr.mxu0 0.0
        %2050 = vmatpush1.msra.mxu0 0.0
        %2051 = vmatprep.subr.mxu0 0.0
        %2052 = vmatpush1.msra.mxu0 0.0
        %2053 = vmatprep.subr.mxu0 0.0
        %2054 = vmatpush1.msra.mxu0 0.0
        %2055 = vmatprep.subr.mxu0 0.0
        %2056 = vmatpush1.msra.mxu0 0.0
        %2057 = vmatprep.subr.mxu0 0.0
        %2058 = vmatpush1.msra.mxu0 0.0
        %2059 = vmatprep.subr.mxu0 0.0
        %2060 = vmatpush1.msra.mxu0 0.0
        %2061 = vmatprep.mubr.f32.mxu0 0.0
        %2062 = vmatmul.mubr.f32.gmra.mrb[0].mxu0 %v1972
        %v2063 = vpop.f32.mrb[0].mxu0
        %v2064 = vadd.f32 0.0, %v2063
        %v2065 = vpop.f32.mrb[0].mxu0
        %2066 = vmatprep.mubr.f32.mxu0 0.0
        %2067 = vmatmul.mubr.f32.gmra.mrb[0].mxu0 %v1973
        %v2068 = vpop.f32.mrb[0].mxu0
        %v2069 = vadd.f32 0.0, %v2068
        %v2070 = vpop.f32.mrb[0].mxu0
        %2071 = vmatprep.mubr.f32.mxu0 0.0
        %2072 = vmatmul.mubr.f32.gmra.mrb[0].mxu0 %v1974
        %v2073 = vpop.f32.mrb[0].mxu0
        %v2074 = vadd.f32 0.0, %v2073
        %v2075 = vpop.f32.mrb[0].mxu0
        %2076 = vmatprep.mubr.f32.mxu0 0.0
        %2077 = vmatmul.mubr.f32.gmra.mrb[0].mxu0 %v1975
        %v2078 = vpop.f32.mrb[0].mxu0
        %v2079 = vadd.f32 0.0, %v2078
        %v2080 = vpop.f32.mrb[0].mxu0
        %2081 = vmatprep.mubr.f32.mxu0 0.0
        %2082 = vmatmul.mubr.f32.gmra.mrb[0].mxu0 %v1976
        %v2083 = vpop.f32.mrb[0].mxu0
        %v2084 = vadd.f32 0.0, %v2083
        %v2085 = vpop.f32.mrb[0].mxu0
        %2086 = vmatprep.mubr.f32.mxu0 0.0
        %2087 = vmatmul.mubr.f32.gmra.mrb[0].mxu0 %v1977
        %v2088 = vpop.f32.mrb[0].mxu0
        %v2089 = vadd.f32 0.0, %v2088
        %v2090 = vpop.f32.mrb[0].mxu0
        %2091 = vmatprep.mubr.f32.mxu0 0.0
        %2092 = vmatmul.mubr.f32.gmra.mrb[0].mxu0 %v1978
        %v2093 = vpop.f32.mrb[0].mxu0
        %v2094 = vadd.f32 0.0, %v2093
        %v2095 = vpop.f32.mrb[0].mxu0
        %2096 = vmatprep.mubr.f32.mxu0 0.0
        %2097 = vmatmul.mubr.f32.gmra.mrb[0].mxu0 %v1979
        %v2098 = vpop.f32.mrb[0].mxu0
        %v2099 = vadd.f32 0.0, %v2098
        %v2100 = vpop.f32.mrb[0].mxu0
        %2101 = vdwg.mxu0
        %v2102 = vld [vmem:[#allocation4] sm:$0xff]
        %v2103 = vld [vmem:[#allocation4 + $0x8] sm:$0xff]
        %v2104 = vld [vmem:[#allocation4 + $0x10] sm:$0xff]
        %v2105 = vld [vmem:[#allocation4 + $0x18] sm:$0xff]
        %v2106 = vld [vmem:[#allocation4 + $0x20] sm:$0xff]
        %v2107 = vld [vmem:[#allocation4 + $0x28] sm:$0xff]
        %v2108 = vld [vmem:[#allocation4 + $0x30] sm:$0xff]
        %v2109 = vld [vmem:[#allocation4 + $0x38] sm:$0xff]
        %v2110 = vadd.f32 %v2102, %v2064
        %v2111 = vadd.f32 %v2103, %v2069
        %v2112 = vadd.f32 %v2104, %v2074
        %v2113 = vadd.f32 %v2105, %v2079
        %v2114 = vadd.f32 %v2106, %v2084
        %v2115 = vadd.f32 %v2107, %v2089
        %v2116 = vadd.f32 %v2108, %v2094
        %v2117 = vadd.f32 %v2109, %v2099
        %2118 = vst [vmem:[#allocation4] sm:$0xff] %v2110
        %2119 = vst [vmem:[#allocation4 + $0x8] sm:$0xff] %v2111
        %2120 = vst [vmem:[#allocation4 + $0x10] sm:$0xff] %v2112
        %2121 = vst [vmem:[#allocation4 + $0x18] sm:$0xff] %v2113
        %2122 = vst [vmem:[#allocation4 + $0x20] sm:$0xff] %v2114
        %2123 = vst [vmem:[#allocation4 + $0x28] sm:$0xff] %v2115
        %2124 = vst [vmem:[#allocation4 + $0x30] sm:$0xff] %v2116
        %2125 = vst [vmem:[#allocation4 + $0x38] sm:$0xff] %v2117
        %s2126 = scalar_lea.vmem [#allocation3], 128
        %v2127 = vld [vmem:[%s2126] sm:$0xff]
        %v2128 = vld [vmem:[%s2126 + $0x8] sm:$0xff]
        %v2129 = vld [vmem:[%s2126 + $0x10] sm:$0xff]
        %v2130 = vld [vmem:[%s2126 + $0x18] sm:$0xff]
        %v2131 = vld [vmem:[%s2126 + $0x20] sm:$0xff]
        %v2132 = vld [vmem:[%s2126 + $0x28] sm:$0xff]
        %v2133 = vld [vmem:[%s2126 + $0x30] sm:$0xff]
        %v2134 = vld [vmem:[%s2126 + $0x38] sm:$0xff]
        %s2135 = scalar_lea.vmem %s1, 1408
        %v2136 = vld [vmem:[%s2135] sm:$0xff]
        %v2137 = vld [vmem:[%s2135 + $0x8] sm:$0xff]
        %v2138 = vld [vmem:[%s2135 + $0x10] sm:$0xff]
        %v2139 = vld [vmem:[%s2135 + $0x18] sm:$0xff]
        %v2140 = vld [vmem:[%s2135 + $0x20] sm:$0xff]
        %v2141 = vld [vmem:[%s2135 + $0x28] sm:$0xff]
        %v2142 = vld [vmem:[%s2135 + $0x30] sm:$0xff]
        %v2143 = vld [vmem:[%s2135 + $0x38] sm:$0xff]
        %v2144 = vld [vmem:[%s2135 + $0x40] sm:$0xff]
        %v2145 = vld [vmem:[%s2135 + $0x48] sm:$0xff]
        %v2146 = vld [vmem:[%s2135 + $0x50] sm:$0xff]
        %v2147 = vld [vmem:[%s2135 + $0x58] sm:$0xff]
        %v2148 = vld [vmem:[%s2135 + $0x60] sm:$0xff]
        %v2149 = vld [vmem:[%s2135 + $0x68] sm:$0xff]
        %v2150 = vld [vmem:[%s2135 + $0x70] sm:$0xff]
        %v2151 = vld [vmem:[%s2135 + $0x78] sm:$0xff]
        %2152 = vmatprep.subr.mxu0 0.0
        %2153 = vmatpush1.msra.mxu0 %v2136
        %2154 = vmatprep.subr.mxu0 0.0
        %2155 = vmatpush1.msra.mxu0 %v2137
        %2156 = vmatprep.subr.mxu0 0.0
        %2157 = vmatpush1.msra.mxu0 %v2138
        %2158 = vmatprep.subr.mxu0 0.0
        %2159 = vmatpush1.msra.mxu0 %v2139
        %2160 = vmatprep.subr.mxu0 0.0
        %2161 = vmatpush1.msra.mxu0 %v2140
        %2162 = vmatprep.subr.mxu0 0.0
        %2163 = vmatpush1.msra.mxu0 %v2141
        %2164 = vmatprep.subr.mxu0 0.0
        %2165 = vmatpush1.msra.mxu0 %v2142
        %2166 = vmatprep.subr.mxu0 0.0
        %2167 = vmatpush1.msra.mxu0 %v2143
        %2168 = vmatprep.subr.mxu0 0.0
        %2169 = vmatpush1.msra.mxu0 %v2144
        %2170 = vmatprep.subr.mxu0 0.0
        %2171 = vmatpush1.msra.mxu0 %v2145
        %2172 = vmatprep.subr.mxu0 0.0
        %2173 = vmatpush1.msra.mxu0 %v2146
        %2174 = vmatprep.subr.mxu0 0.0
        %2175 = vmatpush1.msra.mxu0 %v2147
        %2176 = vmatprep.subr.mxu0 0.0
        %2177 = vmatpush1.msra.mxu0 %v2148
        %2178 = vmatprep.subr.mxu0 0.0
        %2179 = vmatpush1.msra.mxu0 %v2149
        %2180 = vmatprep.subr.mxu0 0.0
        %2181 = vmatpush1.msra.mxu0 %v2150
        %2182 = vmatprep.subr.mxu0 0.0
        %2183 = vmatpush1.msra.mxu0 %v2151
        %2184 = vmatprep.subr.mxu0 0.0
        %2185 = vmatpush1.msra.mxu0 0.0
        %2186 = vmatprep.subr.mxu0 0.0
        %2187 = vmatpush1.msra.mxu0 0.0
        %2188 = vmatprep.subr.mxu0 0.0
        %2189 = vmatpush1.msra.mxu0 0.0
        %2190 = vmatprep.subr.mxu0 0.0
        %2191 = vmatpush1.msra.mxu0 0.0
        %2192 = vmatprep.subr.mxu0 0.0
        %2193 = vmatpush1.msra.mxu0 0.0
        %2194 = vmatprep.subr.mxu0 0.0
        %2195 = vmatpush1.msra.mxu0 0.0
        %2196 = vmatprep.subr.mxu0 0.0
        %2197 = vmatpush1.msra.mxu0 0.0
        %2198 = vmatprep.subr.mxu0 0.0
        %2199 = vmatpush1.msra.mxu0 0.0
        %2200 = vmatprep.subr.mxu0 0.0
        %2201 = vmatpush1.msra.mxu0 0.0
        %2202 = vmatprep.subr.mxu0 0.0
        %2203 = vmatpush1.msra.mxu0 0.0
        %2204 = vmatprep.subr.mxu0 0.0
        %2205 = vmatpush1.msra.mxu0 0.0
        %2206 = vmatprep.subr.mxu0 0.0
        %2207 = vmatpush1.msra.mxu0 0.0
        %2208 = vmatprep.subr.mxu0 0.0
        %2209 = vmatpush1.msra.mxu0 0.0
        %2210 = vmatprep.subr.mxu0 0.0
        %2211 = vmatpush1.msra.mxu0 0.0
        %2212 = vmatprep.subr.mxu0 0.0
        %2213 = vmatpush1.msra.mxu0 0.0
        %2214 = vmatprep.subr.mxu0 0.0
        %2215 = vmatpush1.msra.mxu0 0.0
        %2216 = vmatprep.mubr.f32.mxu0 0.0
        %2217 = vmatmul.mubr.f32.gmra.mrb[0].mxu0 %v2127
        %v2218 = vpop.f32.mrb[0].mxu0
        %v2219 = vadd.f32 0.0, %v2218
        %v2220 = vpop.f32.mrb[0].mxu0
        %2221 = vmatprep.mubr.f32.mxu0 0.0
        %2222 = vmatmul.mubr.f32.gmra.mrb[0].mxu0 %v2128
        %v2223 = vpop.f32.mrb[0].mxu0
        %v2224 = vadd.f32 0.0, %v2223
        %v2225 = vpop.f32.mrb[0].mxu0
        %2226 = vmatprep.mubr.f32.mxu0 0.0
        %2227 = vmatmul.mubr.f32.gmra.mrb[0].mxu0 %v2129
        %v2228 = vpop.f32.mrb[0].mxu0
        %v2229 = vadd.f32 0.0, %v2228
        %v2230 = vpop.f32.mrb[0].mxu0
        %2231 = vmatprep.mubr.f32.mxu0 0.0
        %2232 = vmatmul.mubr.f32.gmra.mrb[0].mxu0 %v2130
        %v2233 = vpop.f32.mrb[0].mxu0
        %v2234 = vadd.f32 0.0, %v2233
        %v2235 = vpop.f32.mrb[0].mxu0
        %2236 = vmatprep.mubr.f32.mxu0 0.0
        %2237 = vmatmul.mubr.f32.gmra.mrb[0].mxu0 %v2131
        %v2238 = vpop.f32.mrb[0].mxu0
        %v2239 = vadd.f32 0.0, %v2238
        %v2240 = vpop.f32.mrb[0].mxu0
        %2241 = vmatprep.mubr.f32.mxu0 0.0
        %2242 = vmatmul.mubr.f32.gmra.mrb[0].mxu0 %v2132
        %v2243 = vpop.f32.mrb[0].mxu0
        %v2244 = vadd.f32 0.0, %v2243
        %v2245 = vpop.f32.mrb[0].mxu0
        %2246 = vmatprep.mubr.f32.mxu0 0.0
        %2247 = vmatmul.mubr.f32.gmra.mrb[0].mxu0 %v2133
        %v2248 = vpop.f32.mrb[0].mxu0
        %v2249 = vadd.f32 0.0, %v2248
        %v2250 = vpop.f32.mrb[0].mxu0
        %2251 = vmatprep.mubr.f32.mxu0 0.0
        %2252 = vmatmul.mubr.f32.gmra.mrb[0].mxu0 %v2134
        %v2253 = vpop.f32.mrb[0].mxu0
        %v2254 = vadd.f32 0.0, %v2253
        %v2255 = vpop.f32.mrb[0].mxu0
        %2256 = vdwg.mxu0
        %v2257 = vld [vmem:[#allocation4] sm:$0xff]
        %v2258 = vld [vmem:[#allocation4 + $0x8] sm:$0xff]
        %v2259 = vld [vmem:[#allocation4 + $0x10] sm:$0xff]
        %v2260 = vld [vmem:[#allocation4 + $0x18] sm:$0xff]
        %v2261 = vld [vmem:[#allocation4 + $0x20] sm:$0xff]
        %v2262 = vld [vmem:[#allocation4 + $0x28] sm:$0xff]
        %v2263 = vld [vmem:[#allocation4 + $0x30] sm:$0xff]
        %v2264 = vld [vmem:[#allocation4 + $0x38] sm:$0xff]
        %v2265 = vadd.f32 %v2257, %v2219
        %v2266 = vadd.f32 %v2258, %v2224
        %v2267 = vadd.f32 %v2259, %v2229
        %v2268 = vadd.f32 %v2260, %v2234
        %v2269 = vadd.f32 %v2261, %v2239
        %v2270 = vadd.f32 %v2262, %v2244
        %v2271 = vadd.f32 %v2263, %v2249
        %v2272 = vadd.f32 %v2264, %v2254
        %2273 = vst [vmem:[#allocation4] sm:$0xff] %v2265
        %2274 = vst [vmem:[#allocation4 + $0x8] sm:$0xff] %v2266
        %2275 = vst [vmem:[#allocation4 + $0x10] sm:$0xff] %v2267
        %2276 = vst [vmem:[#allocation4 + $0x18] sm:$0xff] %v2268
        %2277 = vst [vmem:[#allocation4 + $0x20] sm:$0xff] %v2269
        %2278 = vst [vmem:[#allocation4 + $0x28] sm:$0xff] %v2270
        %2279 = vst [vmem:[#allocation4 + $0x30] sm:$0xff] %v2271
        %2280 = vst [vmem:[#allocation4 + $0x38] sm:$0xff] %v2272
        %v2281 = vld [vmem:[#allocation4] sm:$0xff]
        %v2282 = vld [vmem:[#allocation4 + $0x8] sm:$0xff]
        %v2283 = vld [vmem:[#allocation4 + $0x10] sm:$0xff]
        %v2284 = vld [vmem:[#allocation4 + $0x18] sm:$0xff]
        %v2285 = vld [vmem:[#allocation4 + $0x20] sm:$0xff]
        %v2286 = vld [vmem:[#allocation4 + $0x28] sm:$0xff]
        %v2287 = vld [vmem:[#allocation4 + $0x30] sm:$0xff]
        %v2288 = vld [vmem:[#allocation4 + $0x38] sm:$0xff]
        %v2289 = vadd.f32 %v2281, %v1035
        %v2290 = vadd.f32 %v2282, %v1035
        %v2291 = vadd.f32 %v2283, %v1035
        %v2292 = vadd.f32 %v2284, %v1035
        %v2293 = vadd.f32 %v2285, %v1035
        %v2294 = vadd.f32 %v2286, %v1035
        %v2295 = vadd.f32 %v2287, %v1035
        %v2296 = vadd.f32 %v2288, %v1035
        %s2297 = scalar_lea.vmem %s143, 128 [#allocation6]
        %2298 = vst [vmem:[%s2297] sm:$0xff] %v2289
        %2299 = vst [vmem:[%s2297 + $0x8] sm:$0xff] %v2290
        %2300 = vst [vmem:[%s2297 + $0x10] sm:$0xff] %v2291
        %2301 = vst [vmem:[%s2297 + $0x18] sm:$0xff] %v2292
        %2302 = vst [vmem:[%s2297 + $0x20] sm:$0xff] %v2293
        %2303 = vst [vmem:[%s2297 + $0x28] sm:$0xff] %v2294
        %2304 = vst [vmem:[%s2297 + $0x30] sm:$0xff] %v2295
        %2305 = vst [vmem:[%s2297 + $0x38] sm:$0xff] %v2296
        %v2306 = vld [vmem:[%s868] sm:$0xff]
        %v2307 = vld [vmem:[%s868 + $0x8] sm:$0xff]
        %v2308 = vld [vmem:[%s868 + $0x10] sm:$0xff]
        %v2309 = vld [vmem:[%s868 + $0x18] sm:$0xff]
        %v2310 = vld [vmem:[%s868 + $0x20] sm:$0xff]
        %v2311 = vld [vmem:[%s868 + $0x28] sm:$0xff]
        %v2312 = vld [vmem:[%s868 + $0x30] sm:$0xff]
        %v2313 = vld [vmem:[%s868 + $0x38] sm:$0xff]
        %s2314 = scalar_lea.vmem %s1, 1536
        %v2315 = vld [vmem:[%s2314] sm:$0xff]
        %v2316 = vld [vmem:[%s2314 + $0x8] sm:$0xff]
        %v2317 = vld [vmem:[%s2314 + $0x10] sm:$0xff]
        %v2318 = vld [vmem:[%s2314 + $0x18] sm:$0xff]
        %v2319 = vld [vmem:[%s2314 + $0x20] sm:$0xff]
        %v2320 = vld [vmem:[%s2314 + $0x28] sm:$0xff]
        %v2321 = vld [vmem:[%s2314 + $0x30] sm:$0xff]
        %v2322 = vld [vmem:[%s2314 + $0x38] sm:$0xff]
        %v2323 = vld [vmem:[%s2314 + $0x40] sm:$0xff]
        %v2324 = vld [vmem:[%s2314 + $0x48] sm:$0xff]
        %v2325 = vld [vmem:[%s2314 + $0x50] sm:$0xff]
        %v2326 = vld [vmem:[%s2314 + $0x58] sm:$0xff]
        %v2327 = vld [vmem:[%s2314 + $0x60] sm:$0xff]
        %v2328 = vld [vmem:[%s2314 + $0x68] sm:$0xff]
        %v2329 = vld [vmem:[%s2314 + $0x70] sm:$0xff]
        %v2330 = vld [vmem:[%s2314 + $0x78] sm:$0xff]
        %2331 = vmatprep.subr.mxu0 0.0
        %2332 = vmatpush1.msra.mxu0 %v2315
        %2333 = vmatprep.subr.mxu0 0.0
        %2334 = vmatpush1.msra.mxu0 %v2316
        %2335 = vmatprep.subr.mxu0 0.0
        %2336 = vmatpush1.msra.mxu0 %v2317
        %2337 = vmatprep.subr.mxu0 0.0
        %2338 = vmatpush1.msra.mxu0 %v2318
        %2339 = vmatprep.subr.mxu0 0.0
        %2340 = vmatpush1.msra.mxu0 %v2319
        %2341 = vmatprep.subr.mxu0 0.0
        %2342 = vmatpush1.msra.mxu0 %v2320
        %2343 = vmatprep.subr.mxu0 0.0
        %2344 = vmatpush1.msra.mxu0 %v2321
        %2345 = vmatprep.subr.mxu0 0.0
        %2346 = vmatpush1.msra.mxu0 %v2322
        %2347 = vmatprep.subr.mxu0 0.0
        %2348 = vmatpush1.msra.mxu0 %v2323
        %2349 = vmatprep.subr.mxu0 0.0
        %2350 = vmatpush1.msra.mxu0 %v2324
        %2351 = vmatprep.subr.mxu0 0.0
        %2352 = vmatpush1.msra.mxu0 %v2325
        %2353 = vmatprep.subr.mxu0 0.0
        %2354 = vmatpush1.msra.mxu0 %v2326
        %2355 = vmatprep.subr.mxu0 0.0
        %2356 = vmatpush1.msra.mxu0 %v2327
        %2357 = vmatprep.subr.mxu0 0.0
        %2358 = vmatpush1.msra.mxu0 %v2328
        %2359 = vmatprep.subr.mxu0 0.0
        %2360 = vmatpush1.msra.mxu0 %v2329
        %2361 = vmatprep.subr.mxu0 0.0
        %2362 = vmatpush1.msra.mxu0 %v2330
        %2363 = vmatprep.subr.mxu0 0.0
        %2364 = vmatpush1.msra.mxu0 0.0
        %2365 = vmatprep.subr.mxu0 0.0
        %2366 = vmatpush1.msra.mxu0 0.0
        %2367 = vmatprep.subr.mxu0 0.0
        %2368 = vmatpush1.msra.mxu0 0.0
        %2369 = vmatprep.subr.mxu0 0.0
        %2370 = vmatpush1.msra.mxu0 0.0
        %2371 = vmatprep.subr.mxu0 0.0
        %2372 = vmatpush1.msra.mxu0 0.0
        %2373 = vmatprep.subr.mxu0 0.0
        %2374 = vmatpush1.msra.mxu0 0.0
        %2375 = vmatprep.subr.mxu0 0.0
        %2376 = vmatpush1.msra.mxu0 0.0
        %2377 = vmatprep.subr.mxu0 0.0
        %2378 = vmatpush1.msra.mxu0 0.0
        %2379 = vmatprep.subr.mxu0 0.0
        %2380 = vmatpush1.msra.mxu0 0.0
        %2381 = vmatprep.subr.mxu0 0.0
        %2382 = vmatpush1.msra.mxu0 0.0
        %2383 = vmatprep.subr.mxu0 0.0
        %2384 = vmatpush1.msra.mxu0 0.0
        %2385 = vmatprep.subr.mxu0 0.0
        %2386 = vmatpush1.msra.mxu0 0.0
        %2387 = vmatprep.subr.mxu0 0.0
        %2388 = vmatpush1.msra.mxu0 0.0
        %2389 = vmatprep.subr.mxu0 0.0
        %2390 = vmatpush1.msra.mxu0 0.0
        %2391 = vmatprep.subr.mxu0 0.0
        %2392 = vmatpush1.msra.mxu0 0.0
        %2393 = vmatprep.subr.mxu0 0.0
        %2394 = vmatpush1.msra.mxu0 0.0
        %2395 = vmatprep.mubr.f32.mxu0 0.0
        %2396 = vmatmul.mubr.f32.gmra.mrb[0].mxu0 %v2306
        %v2397 = vpop.f32.mrb[0].mxu0
        %v2398 = vadd.f32 0.0, %v2397
        %v2399 = vpop.f32.mrb[0].mxu0
        %2400 = vmatprep.mubr.f32.mxu0 0.0
        %2401 = vmatmul.mubr.f32.gmra.mrb[0].mxu0 %v2307
        %v2402 = vpop.f32.mrb[0].mxu0
        %v2403 = vadd.f32 0.0, %v2402
        %v2404 = vpop.f32.mrb[0].mxu0
        %2405 = vmatprep.mubr.f32.mxu0 0.0
        %2406 = vmatmul.mubr.f32.gmra.mrb[0].mxu0 %v2308
        %v2407 = vpop.f32.mrb[0].mxu0
        %v2408 = vadd.f32 0.0, %v2407
        %v2409 = vpop.f32.mrb[0].mxu0
        %2410 = vmatprep.mubr.f32.mxu0 0.0
        %2411 = vmatmul.mubr.f32.gmra.mrb[0].mxu0 %v2309
        %v2412 = vpop.f32.mrb[0].mxu0
        %v2413 = vadd.f32 0.0, %v2412
        %v2414 = vpop.f32.mrb[0].mxu0
        %2415 = vmatprep.mubr.f32.mxu0 0.0
        %2416 = vmatmul.mubr.f32.gmra.mrb[0].mxu0 %v2310
        %v2417 = vpop.f32.mrb[0].mxu0
        %v2418 = vadd.f32 0.0, %v2417
        %v2419 = vpop.f32.mrb[0].mxu0
        %2420 = vmatprep.mubr.f32.mxu0 0.0
        %2421 = vmatmul.mubr.f32.gmra.mrb[0].mxu0 %v2311
        %v2422 = vpop.f32.mrb[0].mxu0
        %v2423 = vadd.f32 0.0, %v2422
        %v2424 = vpop.f32.mrb[0].mxu0
        %2425 = vmatprep.mubr.f32.mxu0 0.0
        %2426 = vmatmul.mubr.f32.gmra.mrb[0].mxu0 %v2312
        %v2427 = vpop.f32.mrb[0].mxu0
        %v2428 = vadd.f32 0.0, %v2427
        %v2429 = vpop.f32.mrb[0].mxu0
        %2430 = vmatprep.mubr.f32.mxu0 0.0
        %2431 = vmatmul.mubr.f32.gmra.mrb[0].mxu0 %v2313
        %v2432 = vpop.f32.mrb[0].mxu0
        %v2433 = vadd.f32 0.0, %v2432
        %v2434 = vpop.f32.mrb[0].mxu0
        %2435 = vdwg.mxu0
        %2436 = vst [vmem:[#allocation4] sm:$0xff] %v2398
        %2437 = vst [vmem:[#allocation4 + $0x8] sm:$0xff] %v2403
        %2438 = vst [vmem:[#allocation4 + $0x10] sm:$0xff] %v2408
        %2439 = vst [vmem:[#allocation4 + $0x18] sm:$0xff] %v2413
        %2440 = vst [vmem:[#allocation4 + $0x20] sm:$0xff] %v2418
        %2441 = vst [vmem:[#allocation4 + $0x28] sm:$0xff] %v2423
        %2442 = vst [vmem:[#allocation4 + $0x30] sm:$0xff] %v2428
        %2443 = vst [vmem:[#allocation4 + $0x38] sm:$0xff] %v2433
        %v2444 = vld [vmem:[%s1499] sm:$0xff]
        %v2445 = vld [vmem:[%s1499 + $0x8] sm:$0xff]
        %v2446 = vld [vmem:[%s1499 + $0x10] sm:$0xff]
        %v2447 = vld [vmem:[%s1499 + $0x18] sm:$0xff]
        %v2448 = vld [vmem:[%s1499 + $0x20] sm:$0xff]
        %v2449 = vld [vmem:[%s1499 + $0x28] sm:$0xff]
        %v2450 = vld [vmem:[%s1499 + $0x30] sm:$0xff]
        %v2451 = vld [vmem:[%s1499 + $0x38] sm:$0xff]
        %s2452 = scalar_lea.vmem %s1, 1664
        %v2453 = vld [vmem:[%s2452] sm:$0xff]
        %v2454 = vld [vmem:[%s2452 + $0x8] sm:$0xff]
        %v2455 = vld [vmem:[%s2452 + $0x10] sm:$0xff]
        %v2456 = vld [vmem:[%s2452 + $0x18] sm:$0xff]
        %v2457 = vld [vmem:[%s2452 + $0x20] sm:$0xff]
        %v2458 = vld [vmem:[%s2452 + $0x28] sm:$0xff]
        %v2459 = vld [vmem:[%s2452 + $0x30] sm:$0xff]
        %v2460 = vld [vmem:[%s2452 + $0x38] sm:$0xff]
        %v2461 = vld [vmem:[%s2452 + $0x40] sm:$0xff]
        %v2462 = vld [vmem:[%s2452 + $0x48] sm:$0xff]
        %v2463 = vld [vmem:[%s2452 + $0x50] sm:$0xff]
        %v2464 = vld [vmem:[%s2452 + $0x58] sm:$0xff]
        %v2465 = vld [vmem:[%s2452 + $0x60] sm:$0xff]
        %v2466 = vld [vmem:[%s2452 + $0x68] sm:$0xff]
        %v2467 = vld [vmem:[%s2452 + $0x70] sm:$0xff]
        %v2468 = vld [vmem:[%s2452 + $0x78] sm:$0xff]
        %2469 = vmatprep.subr.mxu0 0.0
        %2470 = vmatpush1.msra.mxu0 %v2453
        %2471 = vmatprep.subr.mxu0 0.0
        %2472 = vmatpush1.msra.mxu0 %v2454
        %2473 = vmatprep.subr.mxu0 0.0
        %2474 = vmatpush1.msra.mxu0 %v2455
        %2475 = vmatprep.subr.mxu0 0.0
        %2476 = vmatpush1.msra.mxu0 %v2456
        %2477 = vmatprep.subr.mxu0 0.0
        %2478 = vmatpush1.msra.mxu0 %v2457
        %2479 = vmatprep.subr.mxu0 0.0
        %2480 = vmatpush1.msra.mxu0 %v2458
        %2481 = vmatprep.subr.mxu0 0.0
        %2482 = vmatpush1.msra.mxu0 %v2459
        %2483 = vmatprep.subr.mxu0 0.0
        %2484 = vmatpush1.msra.mxu0 %v2460
        %2485 = vmatprep.subr.mxu0 0.0
        %2486 = vmatpush1.msra.mxu0 %v2461
        %2487 = vmatprep.subr.mxu0 0.0
        %2488 = vmatpush1.msra.mxu0 %v2462
        %2489 = vmatprep.subr.mxu0 0.0
        %2490 = vmatpush1.msra.mxu0 %v2463
        %2491 = vmatprep.subr.mxu0 0.0
        %2492 = vmatpush1.msra.mxu0 %v2464
        %2493 = vmatprep.subr.mxu0 0.0
        %2494 = vmatpush1.msra.mxu0 %v2465
        %2495 = vmatprep.subr.mxu0 0.0
        %2496 = vmatpush1.msra.mxu0 %v2466
        %2497 = vmatprep.subr.mxu0 0.0
        %2498 = vmatpush1.msra.mxu0 %v2467
        %2499 = vmatprep.subr.mxu0 0.0
        %2500 = vmatpush1.msra.mxu0 %v2468
        %2501 = vmatprep.subr.mxu0 0.0
        %2502 = vmatpush1.msra.mxu0 0.0
        %2503 = vmatprep.subr.mxu0 0.0
        %2504 = vmatpush1.msra.mxu0 0.0
        %2505 = vmatprep.subr.mxu0 0.0
        %2506 = vmatpush1.msra.mxu0 0.0
        %2507 = vmatprep.subr.mxu0 0.0
        %2508 = vmatpush1.msra.mxu0 0.0
        %2509 = vmatprep.subr.mxu0 0.0
        %2510 = vmatpush1.msra.mxu0 0.0
        %2511 = vmatprep.subr.mxu0 0.0
        %2512 = vmatpush1.msra.mxu0 0.0
        %2513 = vmatprep.subr.mxu0 0.0
        %2514 = vmatpush1.msra.mxu0 0.0
        %2515 = vmatprep.subr.mxu0 0.0
        %2516 = vmatpush1.msra.mxu0 0.0
        %2517 = vmatprep.subr.mxu0 0.0
        %2518 = vmatpush1.msra.mxu0 0.0
        %2519 = vmatprep.subr.mxu0 0.0
        %2520 = vmatpush1.msra.mxu0 0.0
        %2521 = vmatprep.subr.mxu0 0.0
        %2522 = vmatpush1.msra.mxu0 0.0
        %2523 = vmatprep.subr.mxu0 0.0
        %2524 = vmatpush1.msra.mxu0 0.0
        %2525 = vmatprep.subr.mxu0 0.0
        %2526 = vmatpush1.msra.mxu0 0.0
        %2527 = vmatprep.subr.mxu0 0.0
        %2528 = vmatpush1.msra.mxu0 0.0
        %2529 = vmatprep.subr.mxu0 0.0
        %2530 = vmatpush1.msra.mxu0 0.0
        %2531 = vmatprep.subr.mxu0 0.0
        %2532 = vmatpush1.msra.mxu0 0.0
        %2533 = vmatprep.mubr.f32.mxu0 0.0
        %2534 = vmatmul.mubr.f32.gmra.mrb[0].mxu0 %v2444
        %v2535 = vpop.f32.mrb[0].mxu0
        %v2536 = vadd.f32 0.0, %v2535
        %v2537 = vpop.f32.mrb[0].mxu0
        %2538 = vmatprep.mubr.f32.mxu0 0.0
        %2539 = vmatmul.mubr.f32.gmra.mrb[0].mxu0 %v2445
        %v2540 = vpop.f32.mrb[0].mxu0
        %v2541 = vadd.f32 0.0, %v2540
        %v2542 = vpop.f32.mrb[0].mxu0
        %2543 = vmatprep.mubr.f32.mxu0 0.0
        %2544 = vmatmul.mubr.f32.gmra.mrb[0].mxu0 %v2446
        %v2545 = vpop.f32.mrb[0].mxu0
        %v2546 = vadd.f32 0.0, %v2545
        %v2547 = vpop.f32.mrb[0].mxu0
        %2548 = vmatprep.mubr.f32.mxu0 0.0
        %2549 = vmatmul.mubr.f32.gmra.mrb[0].mxu0 %v2447
        %v2550 = vpop.f32.mrb[0].mxu0
        %v2551 = vadd.f32 0.0, %v2550
        %v2552 = vpop.f32.mrb[0].mxu0
        %2553 = vmatprep.mubr.f32.mxu0 0.0
        %2554 = vmatmul.mubr.f32.gmra.mrb[0].mxu0 %v2448
        %v2555 = vpop.f32.mrb[0].mxu0
        %v2556 = vadd.f32 0.0, %v2555
        %v2557 = vpop.f32.mrb[0].mxu0
        %2558 = vmatprep.mubr.f32.mxu0 0.0
        %2559 = vmatmul.mubr.f32.gmra.mrb[0].mxu0 %v2449
        %v2560 = vpop.f32.mrb[0].mxu0
        %v2561 = vadd.f32 0.0, %v2560
        %v2562 = vpop.f32.mrb[0].mxu0
        %2563 = vmatprep.mubr.f32.mxu0 0.0
        %2564 = vmatmul.mubr.f32.gmra.mrb[0].mxu0 %v2450
        %v2565 = vpop.f32.mrb[0].mxu0
        %v2566 = vadd.f32 0.0, %v2565
        %v2567 = vpop.f32.mrb[0].mxu0
        %2568 = vmatprep.mubr.f32.mxu0 0.0
        %2569 = vmatmul.mubr.f32.gmra.mrb[0].mxu0 %v2451
        %v2570 = vpop.f32.mrb[0].mxu0
        %v2571 = vadd.f32 0.0, %v2570
        %v2572 = vpop.f32.mrb[0].mxu0
        %2573 = vdwg.mxu0
        %v2574 = vld [vmem:[#allocation4] sm:$0xff]
        %v2575 = vld [vmem:[#allocation4 + $0x8] sm:$0xff]
        %v2576 = vld [vmem:[#allocation4 + $0x10] sm:$0xff]
        %v2577 = vld [vmem:[#allocation4 + $0x18] sm:$0xff]
        %v2578 = vld [vmem:[#allocation4 + $0x20] sm:$0xff]
        %v2579 = vld [vmem:[#allocation4 + $0x28] sm:$0xff]
        %v2580 = vld [vmem:[#allocation4 + $0x30] sm:$0xff]
        %v2581 = vld [vmem:[#allocation4 + $0x38] sm:$0xff]
        %v2582 = vadd.f32 %v2574, %v2536
        %v2583 = vadd.f32 %v2575, %v2541
        %v2584 = vadd.f32 %v2576, %v2546
        %v2585 = vadd.f32 %v2577, %v2551
        %v2586 = vadd.f32 %v2578, %v2556
        %v2587 = vadd.f32 %v2579, %v2561
        %v2588 = vadd.f32 %v2580, %v2566
        %v2589 = vadd.f32 %v2581, %v2571
        %2590 = vst [vmem:[#allocation4] sm:$0xff] %v2582
        %2591 = vst [vmem:[#allocation4 + $0x8] sm:$0xff] %v2583
        %2592 = vst [vmem:[#allocation4 + $0x10] sm:$0xff] %v2584
        %2593 = vst [vmem:[#allocation4 + $0x18] sm:$0xff] %v2585
        %2594 = vst [vmem:[#allocation4 + $0x20] sm:$0xff] %v2586
        %2595 = vst [vmem:[#allocation4 + $0x28] sm:$0xff] %v2587
        %2596 = vst [vmem:[#allocation4 + $0x30] sm:$0xff] %v2588
        %2597 = vst [vmem:[#allocation4 + $0x38] sm:$0xff] %v2589
        %v2598 = vld [vmem:[%s2126] sm:$0xff]
        %v2599 = vld [vmem:[%s2126 + $0x8] sm:$0xff]
        %v2600 = vld [vmem:[%s2126 + $0x10] sm:$0xff]
        %v2601 = vld [vmem:[%s2126 + $0x18] sm:$0xff]
        %v2602 = vld [vmem:[%s2126 + $0x20] sm:$0xff]
        %v2603 = vld [vmem:[%s2126 + $0x28] sm:$0xff]
        %v2604 = vld [vmem:[%s2126 + $0x30] sm:$0xff]
        %v2605 = vld [vmem:[%s2126 + $0x38] sm:$0xff]
        %s2606 = scalar_lea.vmem %s1, 1792
        %v2607 = vld [vmem:[%s2606] sm:$0xff]
        %v2608 = vld [vmem:[%s2606 + $0x8] sm:$0xff]
        %v2609 = vld [vmem:[%s2606 + $0x10] sm:$0xff]
        %v2610 = vld [vmem:[%s2606 + $0x18] sm:$0xff]
        %v2611 = vld [vmem:[%s2606 + $0x20] sm:$0xff]
        %v2612 = vld [vmem:[%s2606 + $0x28] sm:$0xff]
        %v2613 = vld [vmem:[%s2606 + $0x30] sm:$0xff]
        %v2614 = vld [vmem:[%s2606 + $0x38] sm:$0xff]
        %v2615 = vld [vmem:[%s2606 + $0x40] sm:$0xff]
        %v2616 = vld [vmem:[%s2606 + $0x48] sm:$0xff]
        %v2617 = vld [vmem:[%s2606 + $0x50] sm:$0xff]
        %v2618 = vld [vmem:[%s2606 + $0x58] sm:$0xff]
        %v2619 = vld [vmem:[%s2606 + $0x60] sm:$0xff]
        %v2620 = vld [vmem:[%s2606 + $0x68] sm:$0xff]
        %v2621 = vld [vmem:[%s2606 + $0x70] sm:$0xff]
        %v2622 = vld [vmem:[%s2606 + $0x78] sm:$0xff]
        %2623 = vmatprep.subr.mxu0 0.0
        %2624 = vmatpush1.msra.mxu0 %v2607
        %2625 = vmatprep.subr.mxu0 0.0
        %2626 = vmatpush1.msra.mxu0 %v2608
        %2627 = vmatprep.subr.mxu0 0.0
        %2628 = vmatpush1.msra.mxu0 %v2609
        %2629 = vmatprep.subr.mxu0 0.0
        %2630 = vmatpush1.msra.mxu0 %v2610
        %2631 = vmatprep.subr.mxu0 0.0
        %2632 = vmatpush1.msra.mxu0 %v2611
        %2633 = vmatprep.subr.mxu0 0.0
        %2634 = vmatpush1.msra.mxu0 %v2612
        %2635 = vmatprep.subr.mxu0 0.0
        %2636 = vmatpush1.msra.mxu0 %v2613
        %2637 = vmatprep.subr.mxu0 0.0
        %2638 = vmatpush1.msra.mxu0 %v2614
        %2639 = vmatprep.subr.mxu0 0.0
        %2640 = vmatpush1.msra.mxu0 %v2615
        %2641 = vmatprep.subr.mxu0 0.0
        %2642 = vmatpush1.msra.mxu0 %v2616
        %2643 = vmatprep.subr.mxu0 0.0
        %2644 = vmatpush1.msra.mxu0 %v2617
        %2645 = vmatprep.subr.mxu0 0.0
        %2646 = vmatpush1.msra.mxu0 %v2618
        %2647 = vmatprep.subr.mxu0 0.0
        %2648 = vmatpush1.msra.mxu0 %v2619
        %2649 = vmatprep.subr.mxu0 0.0
        %2650 = vmatpush1.msra.mxu0 %v2620
        %2651 = vmatprep.subr.mxu0 0.0
        %2652 = vmatpush1.msra.mxu0 %v2621
        %2653 = vmatprep.subr.mxu0 0.0
        %2654 = vmatpush1.msra.mxu0 %v2622
        %2655 = vmatprep.subr.mxu0 0.0
        %2656 = vmatpush1.msra.mxu0 0.0
        %2657 = vmatprep.subr.mxu0 0.0
        %2658 = vmatpush1.msra.mxu0 0.0
        %2659 = vmatprep.subr.mxu0 0.0
        %2660 = vmatpush1.msra.mxu0 0.0
        %2661 = vmatprep.subr.mxu0 0.0
        %2662 = vmatpush1.msra.mxu0 0.0
        %2663 = vmatprep.subr.mxu0 0.0
        %2664 = vmatpush1.msra.mxu0 0.0
        %2665 = vmatprep.subr.mxu0 0.0
        %2666 = vmatpush1.msra.mxu0 0.0
        %2667 = vmatprep.subr.mxu0 0.0
        %2668 = vmatpush1.msra.mxu0 0.0
        %2669 = vmatprep.subr.mxu0 0.0
        %2670 = vmatpush1.msra.mxu0 0.0
        %2671 = vmatprep.subr.mxu0 0.0
        %2672 = vmatpush1.msra.mxu0 0.0
        %2673 = vmatprep.subr.mxu0 0.0
        %2674 = vmatpush1.msra.mxu0 0.0
        %2675 = vmatprep.subr.mxu0 0.0
        %2676 = vmatpush1.msra.mxu0 0.0
        %2677 = vmatprep.subr.mxu0 0.0
        %2678 = vmatpush1.msra.mxu0 0.0
        %2679 = vmatprep.subr.mxu0 0.0
        %2680 = vmatpush1.msra.mxu0 0.0
        %2681 = vmatprep.subr.mxu0 0.0
        %2682 = vmatpush1.msra.mxu0 0.0
        %2683 = vmatprep.subr.mxu0 0.0
        %2684 = vmatpush1.msra.mxu0 0.0
        %2685 = vmatprep.subr.mxu0 0.0
        %2686 = vmatpush1.msra.mxu0 0.0
        %2687 = vmatprep.mubr.f32.mxu0 0.0
        %2688 = vmatmul.mubr.f32.gmra.mrb[0].mxu0 %v2598
        %v2689 = vpop.f32.mrb[0].mxu0
        %v2690 = vadd.f32 0.0, %v2689
        %v2691 = vpop.f32.mrb[0].mxu0
        %2692 = vmatprep.mubr.f32.mxu0 0.0
        %2693 = vmatmul.mubr.f32.gmra.mrb[0].mxu0 %v2599
        %v2694 = vpop.f32.mrb[0].mxu0
        %v2695 = vadd.f32 0.0, %v2694
        %v2696 = vpop.f32.mrb[0].mxu0
        %2697 = vmatprep.mubr.f32.mxu0 0.0
        %2698 = vmatmul.mubr.f32.gmra.mrb[0].mxu0 %v2600
        %v2699 = vpop.f32.mrb[0].mxu0
        %v2700 = vadd.f32 0.0, %v2699
        %v2701 = vpop.f32.mrb[0].mxu0
        %2702 = vmatprep.mubr.f32.mxu0 0.0
        %2703 = vmatmul.mubr.f32.gmra.mrb[0].mxu0 %v2601
        %v2704 = vpop.f32.mrb[0].mxu0
        %v2705 = vadd.f32 0.0, %v2704
        %v2706 = vpop.f32.mrb[0].mxu0
        %2707 = vmatprep.mubr.f32.mxu0 0.0
        %2708 = vmatmul.mubr.f32.gmra.mrb[0].mxu0 %v2602
        %v2709 = vpop.f32.mrb[0].mxu0
        %v2710 = vadd.f32 0.0, %v2709
        %v2711 = vpop.f32.mrb[0].mxu0
        %2712 = vmatprep.mubr.f32.mxu0 0.0
        %2713 = vmatmul.mubr.f32.gmra.mrb[0].mxu0 %v2603
        %v2714 = vpop.f32.mrb[0].mxu0
        %v2715 = vadd.f32 0.0, %v2714
        %v2716 = vpop.f32.mrb[0].mxu0
        %2717 = vmatprep.mubr.f32.mxu0 0.0
        %2718 = vmatmul.mubr.f32.gmra.mrb[0].mxu0 %v2604
        %v2719 = vpop.f32.mrb[0].mxu0
        %v2720 = vadd.f32 0.0, %v2719
        %v2721 = vpop.f32.mrb[0].mxu0
        %2722 = vmatprep.mubr.f32.mxu0 0.0
        %2723 = vmatmul.mubr.f32.gmra.mrb[0].mxu0 %v2605
        %v2724 = vpop.f32.mrb[0].mxu0
        %v2725 = vadd.f32 0.0, %v2724
        %v2726 = vpop.f32.mrb[0].mxu0
        %2727 = vdwg.mxu0
        %v2728 = vld [vmem:[#allocation4] sm:$0xff]
        %v2729 = vld [vmem:[#allocation4 + $0x8] sm:$0xff]
        %v2730 = vld [vmem:[#allocation4 + $0x10] sm:$0xff]
        %v2731 = vld [vmem:[#allocation4 + $0x18] sm:$0xff]
        %v2732 = vld [vmem:[#allocation4 + $0x20] sm:$0xff]
        %v2733 = vld [vmem:[#allocation4 + $0x28] sm:$0xff]
        %v2734 = vld [vmem:[#allocation4 + $0x30] sm:$0xff]
        %v2735 = vld [vmem:[#allocation4 + $0x38] sm:$0xff]
        %v2736 = vadd.f32 %v2728, %v2690
        %v2737 = vadd.f32 %v2729, %v2695
        %v2738 = vadd.f32 %v2730, %v2700
        %v2739 = vadd.f32 %v2731, %v2705
        %v2740 = vadd.f32 %v2732, %v2710
        %v2741 = vadd.f32 %v2733, %v2715
        %v2742 = vadd.f32 %v2734, %v2720
        %v2743 = vadd.f32 %v2735, %v2725
        %2744 = vst [vmem:[#allocation4] sm:$0xff] %v2736
        %2745 = vst [vmem:[#allocation4 + $0x8] sm:$0xff] %v2737
        %2746 = vst [vmem:[#allocation4 + $0x10] sm:$0xff] %v2738
        %2747 = vst [vmem:[#allocation4 + $0x18] sm:$0xff] %v2739
        %2748 = vst [vmem:[#allocation4 + $0x20] sm:$0xff] %v2740
        %2749 = vst [vmem:[#allocation4 + $0x28] sm:$0xff] %v2741
        %2750 = vst [vmem:[#allocation4 + $0x30] sm:$0xff] %v2742
        %2751 = vst [vmem:[#allocation4 + $0x38] sm:$0xff] %v2743
        %s2752 = scalar_lea.vmem [#allocation3], 224
        %v2753 = vld [vmem:[%s2752] sm:$0xff]
        %v2754 = vld [vmem:[%s2752 + $0x8] sm:$0xff]
        %v2755 = vld [vmem:[%s2752 + $0x10] sm:$0xff]
        %v2756 = vld [vmem:[%s2752 + $0x18] sm:$0xff]
        %v2757 = vld [vmem:[%s2752 + $0x20] sm:$0xff]
        %v2758 = vld [vmem:[%s2752 + $0x28] sm:$0xff]
        %v2759 = vld [vmem:[%s2752 + $0x30] sm:$0xff]
        %v2760 = vld [vmem:[%s2752 + $0x38] sm:$0xff]
        %s2761 = scalar_lea.vmem %s1, 1920
        %v2762 = vld [vmem:[%s2761] sm:$0xff]
        %v2763 = vld [vmem:[%s2761 + $0x8] sm:$0xff]
        %v2764 = vld [vmem:[%s2761 + $0x10] sm:$0xff]
        %v2765 = vld [vmem:[%s2761 + $0x18] sm:$0xff]
        %v2766 = vld [vmem:[%s2761 + $0x20] sm:$0xff]
        %v2767 = vld [vmem:[%s2761 + $0x28] sm:$0xff]
        %v2768 = vld [vmem:[%s2761 + $0x30] sm:$0xff]
        %v2769 = vld [vmem:[%s2761 + $0x38] sm:$0xff]
        %v2770 = vld [vmem:[%s2761 + $0x40] sm:$0xff]
        %v2771 = vld [vmem:[%s2761 + $0x48] sm:$0xff]
        %v2772 = vld [vmem:[%s2761 + $0x50] sm:$0xff]
        %v2773 = vld [vmem:[%s2761 + $0x58] sm:$0xff]
        %v2774 = vld [vmem:[%s2761 + $0x60] sm:$0xff]
        %v2775 = vld [vmem:[%s2761 + $0x68] sm:$0xff]
        %v2776 = vld [vmem:[%s2761 + $0x70] sm:$0xff]
        %v2777 = vld [vmem:[%s2761 + $0x78] sm:$0xff]
        %2778 = vmatprep.subr.mxu0 0.0
        %2779 = vmatpush1.msra.mxu0 %v2762
        %2780 = vmatprep.subr.mxu0 0.0
        %2781 = vmatpush1.msra.mxu0 %v2763
        %2782 = vmatprep.subr.mxu0 0.0
        %2783 = vmatpush1.msra.mxu0 %v2764
        %2784 = vmatprep.subr.mxu0 0.0
        %2785 = vmatpush1.msra.mxu0 %v2765
        %2786 = vmatprep.subr.mxu0 0.0
        %2787 = vmatpush1.msra.mxu0 %v2766
        %2788 = vmatprep.subr.mxu0 0.0
        %2789 = vmatpush1.msra.mxu0 %v2767
        %2790 = vmatprep.subr.mxu0 0.0
        %2791 = vmatpush1.msra.mxu0 %v2768
        %2792 = vmatprep.subr.mxu0 0.0
        %2793 = vmatpush1.msra.mxu0 %v2769
        %2794 = vmatprep.subr.mxu0 0.0
        %2795 = vmatpush1.msra.mxu0 %v2770
        %2796 = vmatprep.subr.mxu0 0.0
        %2797 = vmatpush1.msra.mxu0 %v2771
        %2798 = vmatprep.subr.mxu0 0.0
        %2799 = vmatpush1.msra.mxu0 %v2772
        %2800 = vmatprep.subr.mxu0 0.0
        %2801 = vmatpush1.msra.mxu0 %v2773
        %2802 = vmatprep.subr.mxu0 0.0
        %2803 = vmatpush1.msra.mxu0 %v2774
        %2804 = vmatprep.subr.mxu0 0.0
        %2805 = vmatpush1.msra.mxu0 %v2775
        %2806 = vmatprep.subr.mxu0 0.0
        %2807 = vmatpush1.msra.mxu0 %v2776
        %2808 = vmatprep.subr.mxu0 0.0
        %2809 = vmatpush1.msra.mxu0 %v2777
        %2810 = vmatprep.subr.mxu0 0.0
        %2811 = vmatpush1.msra.mxu0 0.0
        %2812 = vmatprep.subr.mxu0 0.0
        %2813 = vmatpush1.msra.mxu0 0.0
        %2814 = vmatprep.subr.mxu0 0.0
        %2815 = vmatpush1.msra.mxu0 0.0
        %2816 = vmatprep.subr.mxu0 0.0
        %2817 = vmatpush1.msra.mxu0 0.0
        %2818 = vmatprep.subr.mxu0 0.0
        %2819 = vmatpush1.msra.mxu0 0.0
        %2820 = vmatprep.subr.mxu0 0.0
        %2821 = vmatpush1.msra.mxu0 0.0
        %2822 = vmatprep.subr.mxu0 0.0
        %2823 = vmatpush1.msra.mxu0 0.0
        %2824 = vmatprep.subr.mxu0 0.0
        %2825 = vmatpush1.msra.mxu0 0.0
        %2826 = vmatprep.subr.mxu0 0.0
        %2827 = vmatpush1.msra.mxu0 0.0
        %2828 = vmatprep.subr.mxu0 0.0
        %2829 = vmatpush1.msra.mxu0 0.0
        %2830 = vmatprep.subr.mxu0 0.0
        %2831 = vmatpush1.msra.mxu0 0.0
        %2832 = vmatprep.subr.mxu0 0.0
        %2833 = vmatpush1.msra.mxu0 0.0
        %2834 = vmatprep.subr.mxu0 0.0
        %2835 = vmatpush1.msra.mxu0 0.0
        %2836 = vmatprep.subr.mxu0 0.0
        %2837 = vmatpush1.msra.mxu0 0.0
        %2838 = vmatprep.subr.mxu0 0.0
        %2839 = vmatpush1.msra.mxu0 0.0
        %2840 = vmatprep.subr.mxu0 0.0
        %2841 = vmatpush1.msra.mxu0 0.0
        %2842 = vmatprep.mubr.f32.mxu0 0.0
        %2843 = vmatmul.mubr.f32.gmra.mrb[0].mxu0 %v2753
        %v2844 = vpop.f32.mrb[0].mxu0
        %v2845 = vadd.f32 0.0, %v2844
        %v2846 = vpop.f32.mrb[0].mxu0
        %2847 = vmatprep.mubr.f32.mxu0 0.0
        %2848 = vmatmul.mubr.f32.gmra.mrb[0].mxu0 %v2754
        %v2849 = vpop.f32.mrb[0].mxu0
        %v2850 = vadd.f32 0.0, %v2849
        %v2851 = vpop.f32.mrb[0].mxu0
        %2852 = vmatprep.mubr.f32.mxu0 0.0
        %2853 = vmatmul.mubr.f32.gmra.mrb[0].mxu0 %v2755
        %v2854 = vpop.f32.mrb[0].mxu0
        %v2855 = vadd.f32 0.0, %v2854
        %v2856 = vpop.f32.mrb[0].mxu0
        %2857 = vmatprep.mubr.f32.mxu0 0.0
        %2858 = vmatmul.mubr.f32.gmra.mrb[0].mxu0 %v2756
        %v2859 = vpop.f32.mrb[0].mxu0
        %v2860 = vadd.f32 0.0, %v2859
        %v2861 = vpop.f32.mrb[0].mxu0
        %2862 = vmatprep.mubr.f32.mxu0 0.0
        %2863 = vmatmul.mubr.f32.gmra.mrb[0].mxu0 %v2757
        %v2864 = vpop.f32.mrb[0].mxu0
        %v2865 = vadd.f32 0.0, %v2864
        %v2866 = vpop.f32.mrb[0].mxu0
        %2867 = vmatprep.mubr.f32.mxu0 0.0
        %2868 = vmatmul.mubr.f32.gmra.mrb[0].mxu0 %v2758
        %v2869 = vpop.f32.mrb[0].mxu0
        %v2870 = vadd.f32 0.0, %v2869
        %v2871 = vpop.f32.mrb[0].mxu0
        %2872 = vmatprep.mubr.f32.mxu0 0.0
        %2873 = vmatmul.mubr.f32.gmra.mrb[0].mxu0 %v2759
        %v2874 = vpop.f32.mrb[0].mxu0
        %v2875 = vadd.f32 0.0, %v2874
        %v2876 = vpop.f32.mrb[0].mxu0
        %2877 = vmatprep.mubr.f32.mxu0 0.0
        %2878 = vmatmul.mubr.f32.gmra.mrb[0].mxu0 %v2760
        %v2879 = vpop.f32.mrb[0].mxu0
        %v2880 = vadd.f32 0.0, %v2879
        %v2881 = vpop.f32.mrb[0].mxu0
        %2882 = vdwg.mxu0
        %v2883 = vld [vmem:[#allocation4] sm:$0xff]
        %v2884 = vld [vmem:[#allocation4 + $0x8] sm:$0xff]
        %v2885 = vld [vmem:[#allocation4 + $0x10] sm:$0xff]
        %v2886 = vld [vmem:[#allocation4 + $0x18] sm:$0xff]
        %v2887 = vld [vmem:[#allocation4 + $0x20] sm:$0xff]
        %v2888 = vld [vmem:[#allocation4 + $0x28] sm:$0xff]
        %v2889 = vld [vmem:[#allocation4 + $0x30] sm:$0xff]
        %v2890 = vld [vmem:[#allocation4 + $0x38] sm:$0xff]
        %v2891 = vadd.f32 %v2883, %v2845
        %v2892 = vadd.f32 %v2884, %v2850
        %v2893 = vadd.f32 %v2885, %v2855
        %v2894 = vadd.f32 %v2886, %v2860
        %v2895 = vadd.f32 %v2887, %v2865
        %v2896 = vadd.f32 %v2888, %v2870
        %v2897 = vadd.f32 %v2889, %v2875
        %v2898 = vadd.f32 %v2890, %v2880
        %2899 = vst [vmem:[#allocation4] sm:$0xff] %v2891
        %2900 = vst [vmem:[#allocation4 + $0x8] sm:$0xff] %v2892
        %2901 = vst [vmem:[#allocation4 + $0x10] sm:$0xff] %v2893
        %2902 = vst [vmem:[#allocation4 + $0x18] sm:$0xff] %v2894
        %2903 = vst [vmem:[#allocation4 + $0x20] sm:$0xff] %v2895
        %2904 = vst [vmem:[#allocation4 + $0x28] sm:$0xff] %v2896
        %2905 = vst [vmem:[#allocation4 + $0x30] sm:$0xff] %v2897
        %2906 = vst [vmem:[#allocation4 + $0x38] sm:$0xff] %v2898
        %v2907 = vld [vmem:[#allocation4] sm:$0xff]
        %v2908 = vld [vmem:[#allocation4 + $0x8] sm:$0xff]
        %v2909 = vld [vmem:[#allocation4 + $0x10] sm:$0xff]
        %v2910 = vld [vmem:[#allocation4 + $0x18] sm:$0xff]
        %v2911 = vld [vmem:[#allocation4 + $0x20] sm:$0xff]
        %v2912 = vld [vmem:[#allocation4 + $0x28] sm:$0xff]
        %v2913 = vld [vmem:[#allocation4 + $0x30] sm:$0xff]
        %v2914 = vld [vmem:[#allocation4 + $0x38] sm:$0xff]
        %v2915 = vadd.f32 %v2907, %v1035
        %v2916 = vadd.f32 %v2908, %v1035
        %v2917 = vadd.f32 %v2909, %v1035
        %v2918 = vadd.f32 %v2910, %v1035
        %v2919 = vadd.f32 %v2911, %v1035
        %v2920 = vadd.f32 %v2912, %v1035
        %v2921 = vadd.f32 %v2913, %v1035
        %v2922 = vadd.f32 %v2914, %v1035
        %s2923 = scalar_lea.vmem %s143, 192 [#allocation6]
        %2924 = vst [vmem:[%s2923] sm:$0xff] %v2915
        %2925 = vst [vmem:[%s2923 + $0x8] sm:$0xff] %v2916
        %2926 = vst [vmem:[%s2923 + $0x10] sm:$0xff] %v2917
        %2927 = vst [vmem:[%s2923 + $0x18] sm:$0xff] %v2918
        %2928 = vst [vmem:[%s2923 + $0x20] sm:$0xff] %v2919
        %2929 = vst [vmem:[%s2923 + $0x28] sm:$0xff] %v2920
        %2930 = vst [vmem:[%s2923 + $0x30] sm:$0xff] %v2921
        %2931 = vst [vmem:[%s2923 + $0x38] sm:$0xff] %v2922
        %s2932 = sand.u32 %s89, 1
        %s2933 = sand.u32 %s89, 1
        %s2934 = smul.addr %s2933, 256
        %s2935 = scalar_lea.vmem [#allocation6], %s2934
        // Predicated region
        $region105: #{upsample_forward.1} parent=27 // pred_check
          %p2936 = pneg %p99
        $region106: #{upsample_forward.1} parent=27 // pred_check_branch
          %2938 = sbr.rel (%p2936) target = $region108
        $region107: #{upsample_forward.1} parent=27 // pred_region
          %s2939 = smul.u32 %s20, 4
          %s2940 = sadd.s32 %s2939, %s21
          %s2941 = smul.u32 4, %s2940
          %s2942 = smul.addr %s2941, 2
          %s2943 = smul.addr %s19, 128
          %s2944 = sadd.s32 %s2942, %s2943
          %s2945 = smul.addr %s2944, 8
          %s2946 = scalar_lea.vmem %s3, %s2945
          // Predicated region
          $region109: #{upsample_forward.1} parent=107 // pred_check
            _
          $region110: #{upsample_forward.1} parent=107 // pred_check_branch
            %2948 = sbr.rel (0) target = $region112
          $region111: #{upsample_forward.1} parent=107 // pred_region
            // Predicated region
            $region113: #{upsample_forward.1} parent=111 // pred_check
              _
            $region114: #{upsample_forward.1} parent=111 // pred_check_branch
              %2950 = sbr.rel (0) target = $region116
            $region115: #{upsample_forward.1} parent=111 // pred_region
              // Predicated region
              $region128: #{upsample_forward.1} parent=115 // pred_check
                _
              $region129: #{upsample_forward.1} parent=115 // pred_check_branch
                %3027 = sbr.rel (0) target = $region131
              $region130: #{upsample_forward.1} parent=115 // pred_region
                loop: start=0, step=1, limit=1
                $region132: #{upsample_forward.1} parent=130 // loop_pre_header
                  _
                $region133: #{upsample_forward.1} parent=130 // loop_header
                  %s3029 = sphi 0, %s3033
                  %p3030 = scmp.ge.s32.totalorder %s3029, 1
                  %s3034 = sphi %s2935, %s2935
                  %s3035 = sphi %s2946, %s2946
                $region134: #{upsample_forward.1} parent=130 // loop_header_branch
                  %3032 = sbr.rel (%p3030) target = $region138
                $region135: #{upsample_forward.1} parent=130 // loop_body
                  %v3036 = vld [vmem:[%s3034] sm:$0xff]
                  %3037 = vst [vmem:[%s3035] sm:$0xff] %v3036
                  %v3038 = vld [vmem:[%s3034 + $0x8] sm:$0xff]
                  %3039 = vst [vmem:[%s3035 + $0x8] sm:$0xff] %v3038
                  %v3040 = vld [vmem:[%s3034 + $0x10] sm:$0xff]
                  %3041 = vst [vmem:[%s3035 + $0x10] sm:$0xff] %v3040
                  %v3042 = vld [vmem:[%s3034 + $0x18] sm:$0xff]
                  %3043 = vst [vmem:[%s3035 + $0x18] sm:$0xff] %v3042
                  %v3044 = vld [vmem:[%s3034 + $0x20] sm:$0xff]
                  %3045 = vst [vmem:[%s3035 + $0x20] sm:$0xff] %v3044
                  %v3046 = vld [vmem:[%s3034 + $0x28] sm:$0xff]
                  %3047 = vst [vmem:[%s3035 + $0x28] sm:$0xff] %v3046
                  %v3048 = vld [vmem:[%s3034 + $0x30] sm:$0xff]
                  %3049 = vst [vmem:[%s3035 + $0x30] sm:$0xff] %v3048
                  %v3050 = vld [vmem:[%s3034 + $0x38] sm:$0xff]
                  %3051 = vst [vmem:[%s3035 + $0x38] sm:$0xff] %v3050
                  %v3052 = vld [vmem:[%s3034 + $0x40] sm:$0xff]
                  %3053 = vst [vmem:[%s3035 + $0x100] sm:$0xff] %v3052
                  %v3054 = vld [vmem:[%s3034 + $0x48] sm:$0xff]
                  %3055 = vst [vmem:[%s3035 + $0x108] sm:$0xff] %v3054
                  %v3056 = vld [vmem:[%s3034 + $0x50] sm:$0xff]
                  %3057 = vst [vmem:[%s3035 + $0x110] sm:$0xff] %v3056
                  %v3058 = vld [vmem:[%s3034 + $0x58] sm:$0xff]
                  %3059 = vst [vmem:[%s3035 + $0x118] sm:$0xff] %v3058
                  %v3060 = vld [vmem:[%s3034 + $0x60] sm:$0xff]
                  %3061 = vst [vmem:[%s3035 + $0x120] sm:$0xff] %v3060
                  %v3062 = vld [vmem:[%s3034 + $0x68] sm:$0xff]
                  %3063 = vst [vmem:[%s3035 + $0x128] sm:$0xff] %v3062
                  %v3064 = vld [vmem:[%s3034 + $0x70] sm:$0xff]
                  %3065 = vst [vmem:[%s3035 + $0x130] sm:$0xff] %v3064
                  %v3066 = vld [vmem:[%s3034 + $0x78] sm:$0xff]
                  %3067 = vst [vmem:[%s3035 + $0x138] sm:$0xff] %v3066
                  %v3068 = vld [vmem:[%s3034 + $0x80] sm:$0xff]
                  %3069 = vst [vmem:[%s3035 + $0x200] sm:$0xff] %v3068
                  %v3070 = vld [vmem:[%s3034 + $0x88] sm:$0xff]
                  %3071 = vst [vmem:[%s3035 + $0x208] sm:$0xff] %v3070
                  %v3072 = vld [vmem:[%s3034 + $0x90] sm:$0xff]
                  %3073 = vst [vmem:[%s3035 + $0x210] sm:$0xff] %v3072
                  %v3074 = vld [vmem:[%s3034 + $0x98] sm:$0xff]
                  %3075 = vst [vmem:[%s3035 + $0x218] sm:$0xff] %v3074
                  %v3076 = vld [vmem:[%s3034 + $0xa0] sm:$0xff]
                  %3077 = vst [vmem:[%s3035 + $0x220] sm:$0xff] %v3076
                  %v3078 = vld [vmem:[%s3034 + $0xa8] sm:$0xff]
                  %3079 = vst [vmem:[%s3035 + $0x228] sm:$0xff] %v3078
                  %v3080 = vld [vmem:[%s3034 + $0xb0] sm:$0xff]
                  %3081 = vst [vmem:[%s3035 + $0x230] sm:$0xff] %v3080
                  %v3082 = vld [vmem:[%s3034 + $0xb8] sm:$0xff]
                  %3083 = vst [vmem:[%s3035 + $0x238] sm:$0xff] %v3082
                  %v3084 = vld [vmem:[%s3034 + $0xc0] sm:$0xff]
                  %3085 = vst [vmem:[%s3035 + $0x300] sm:$0xff] %v3084
                  %v3086 = vld [vmem:[%s3034 + $0xc8] sm:$0xff]
                  %3087 = vst [vmem:[%s3035 + $0x308] sm:$0xff] %v3086
                  %v3088 = vld [vmem:[%s3034 + $0xd0] sm:$0xff]
                  %3089 = vst [vmem:[%s3035 + $0x310] sm:$0xff] %v3088
                  %v3090 = vld [vmem:[%s3034 + $0xd8] sm:$0xff]
                  %3091 = vst [vmem:[%s3035 + $0x318] sm:$0xff] %v3090
                  %v3092 = vld [vmem:[%s3034 + $0xe0] sm:$0xff]
                  %3093 = vst [vmem:[%s3035 + $0x320] sm:$0xff] %v3092
                  %v3094 = vld [vmem:[%s3034 + $0xe8] sm:$0xff]
                  %3095 = vst [vmem:[%s3035 + $0x328] sm:$0xff] %v3094
                  %v3096 = vld [vmem:[%s3034 + $0xf0] sm:$0xff]
                  %3097 = vst [vmem:[%s3035 + $0x330] sm:$0xff] %v3096
                  %v3098 = vld [vmem:[%s3034 + $0xf8] sm:$0xff]
                  %3099 = vst [vmem:[%s3035 + $0x338] sm:$0xff] %v3098
                $region136: #{upsample_forward.1} parent=130 // loop_footer
                  %s3033 = sadd.s32 1, %s3029
                $region137: #{upsample_forward.1} parent=130 // loop_footer_branch
                  %3028 = sbr.rel target = $region133
                $region138: #{upsample_forward.1} parent=130 // loop_exit
                  _
              $region131: #{upsample_forward.1} parent=115 // pred_fallthru
                _
              // Predicated region
              $region139: #{upsample_forward.1} parent=115 // pred_check
                _
              $region140: #{upsample_forward.1} parent=115 // pred_check_branch
                %3101 = sbr.rel target = $region142
              $region141: #{upsample_forward.1} parent=115 // pred_region
                _
              $region142: #{upsample_forward.1} parent=115 // pred_fallthru
                _
            $region116: #{upsample_forward.1} parent=111 // pred_fallthru
              _
            // Predicated region
            $region117: #{upsample_forward.1} parent=111 // pred_check
              _
            $region118: #{upsample_forward.1} parent=111 // pred_check_branch
              %2952 = sbr.rel target = $region120
            $region119: #{upsample_forward.1} parent=111 // pred_region
              loop: start=0, step=1, limit=1
              $region121: #{upsample_forward.1} parent=119 // loop_pre_header
                _
              $region122: #{upsample_forward.1} parent=119 // loop_header
                %s2955 = sphi 0, %s2959
                %p2956 = scmp.ge.s32.totalorder %s2955, 1
                %s2960 = sphi %s2935, %s2935
                %s2961 = sphi %s2946, %s2946
              $region123: #{upsample_forward.1} parent=119 // loop_header_branch
                %2958 = sbr.rel (%p2956) target = $region127
              $region124: #{upsample_forward.1} parent=119 // loop_body
                %v2962 = vld [vmem:[%s2960] sm:$0xff]
                %2963 = vst [vmem:[%s2961] sm:$0xff] %v2962
                %v2964 = vld [vmem:[%s2960 + $0x8] sm:$0xff]
                %2965 = vst [vmem:[%s2961 + $0x8] sm:$0xff] %v2964
                %v2966 = vld [vmem:[%s2960 + $0x10] sm:$0xff]
                %2967 = vst [vmem:[%s2961 + $0x10] sm:$0xff] %v2966
                %v2968 = vld [vmem:[%s2960 + $0x18] sm:$0xff]
                %2969 = vst [vmem:[%s2961 + $0x18] sm:$0xff] %v2968
                %v2970 = vld [vmem:[%s2960 + $0x20] sm:$0xff]
                %2971 = vst [vmem:[%s2961 + $0x20] sm:$0xff] %v2970
                %v2972 = vld [vmem:[%s2960 + $0x28] sm:$0xff]
                %2973 = vst [vmem:[%s2961 + $0x28] sm:$0xff] %v2972
                %v2974 = vld [vmem:[%s2960 + $0x30] sm:$0xff]
                %2975 = vst [vmem:[%s2961 + $0x30] sm:$0xff] %v2974
                %v2976 = vld [vmem:[%s2960 + $0x38] sm:$0xff]
                %2977 = vst [vmem:[%s2961 + $0x38] sm:$0xff] %v2976
                %v2978 = vld [vmem:[%s2960 + $0x40] sm:$0xff]
                %2979 = vst [vmem:[%s2961 + $0x100] sm:$0xff] %v2978
                %v2980 = vld [vmem:[%s2960 + $0x48] sm:$0xff]
                %2981 = vst [vmem:[%s2961 + $0x108] sm:$0xff] %v2980
                %v2982 = vld [vmem:[%s2960 + $0x50] sm:$0xff]
                %2983 = vst [vmem:[%s2961 + $0x110] sm:$0xff] %v2982
                %v2984 = vld [vmem:[%s2960 + $0x58] sm:$0xff]
                %2985 = vst [vmem:[%s2961 + $0x118] sm:$0xff] %v2984
                %v2986 = vld [vmem:[%s2960 + $0x60] sm:$0xff]
                %2987 = vst [vmem:[%s2961 + $0x120] sm:$0xff] %v2986
                %v2988 = vld [vmem:[%s2960 + $0x68] sm:$0xff]
                %2989 = vst [vmem:[%s2961 + $0x128] sm:$0xff] %v2988
                %v2990 = vld [vmem:[%s2960 + $0x70] sm:$0xff]
                %2991 = vst [vmem:[%s2961 + $0x130] sm:$0xff] %v2990
                %v2992 = vld [vmem:[%s2960 + $0x78] sm:$0xff]
                %2993 = vst [vmem:[%s2961 + $0x138] sm:$0xff] %v2992
                %v2994 = vld [vmem:[%s2960 + $0x80] sm:$0xff]
                %2995 = vst [vmem:[%s2961 + $0x200] sm:$0xff] %v2994
                %v2996 = vld [vmem:[%s2960 + $0x88] sm:$0xff]
                %2997 = vst [vmem:[%s2961 + $0x208] sm:$0xff] %v2996
                %v2998 = vld [vmem:[%s2960 + $0x90] sm:$0xff]
                %2999 = vst [vmem:[%s2961 + $0x210] sm:$0xff] %v2998
                %v3000 = vld [vmem:[%s2960 + $0x98] sm:$0xff]
                %3001 = vst [vmem:[%s2961 + $0x218] sm:$0xff] %v3000
                %v3002 = vld [vmem:[%s2960 + $0xa0] sm:$0xff]
                %3003 = vst [vmem:[%s2961 + $0x220] sm:$0xff] %v3002
                %v3004 = vld [vmem:[%s2960 + $0xa8] sm:$0xff]
                %3005 = vst [vmem:[%s2961 + $0x228] sm:$0xff] %v3004
                %v3006 = vld [vmem:[%s2960 + $0xb0] sm:$0xff]
                %3007 = vst [vmem:[%s2961 + $0x230] sm:$0xff] %v3006
                %v3008 = vld [vmem:[%s2960 + $0xb8] sm:$0xff]
                %3009 = vst [vmem:[%s2961 + $0x238] sm:$0xff] %v3008
                %v3010 = vld [vmem:[%s2960 + $0xc0] sm:$0xff]
                %3011 = vst [vmem:[%s2961 + $0x300] sm:$0xff] %v3010
                %v3012 = vld [vmem:[%s2960 + $0xc8] sm:$0xff]
                %3013 = vst [vmem:[%s2961 + $0x308] sm:$0xff] %v3012
                %v3014 = vld [vmem:[%s2960 + $0xd0] sm:$0xff]
                %3015 = vst [vmem:[%s2961 + $0x310] sm:$0xff] %v3014
                %v3016 = vld [vmem:[%s2960 + $0xd8] sm:$0xff]
                %3017 = vst [vmem:[%s2961 + $0x318] sm:$0xff] %v3016
                %v3018 = vld [vmem:[%s2960 + $0xe0] sm:$0xff]
                %3019 = vst [vmem:[%s2961 + $0x320] sm:$0xff] %v3018
                %v3020 = vld [vmem:[%s2960 + $0xe8] sm:$0xff]
                %3021 = vst [vmem:[%s2961 + $0x328] sm:$0xff] %v3020
                %v3022 = vld [vmem:[%s2960 + $0xf0] sm:$0xff]
                %3023 = vst [vmem:[%s2961 + $0x330] sm:$0xff] %v3022
                %v3024 = vld [vmem:[%s2960 + $0xf8] sm:$0xff]
                %3025 = vst [vmem:[%s2961 + $0x338] sm:$0xff] %v3024
              $region125: #{upsample_forward.1} parent=119 // loop_footer
                %s2959 = sadd.s32 1, %s2955
              $region126: #{upsample_forward.1} parent=119 // loop_footer_branch
                %2954 = sbr.rel target = $region122
              $region127: #{upsample_forward.1} parent=119 // loop_exit
                _
            $region120: #{upsample_forward.1} parent=111 // pred_fallthru
              _
          $region112: #{upsample_forward.1} parent=107 // pred_fallthru
            _
          %3102 = vnop
        $region108: #{upsample_forward.1} parent=27 // pred_fallthru
          _
      $region28: #{upsample_forward.1} parent=5 // pred_fallthru
        _
      %p3103 = scmp.le.s32.totalorder 2, %s9
      // Predicated region
      $region143: #{upsample_forward.1} parent=5 // pred_check
        %p3104 = pneg %p3103
      $region144: #{upsample_forward.1} parent=5 // pred_check_branch
        %3106 = sbr.rel (%p3104) target = $region146
      $region145: #{upsample_forward.1} parent=5 // pred_region
        %s3107 = ssub.s32 %s9, 2
        // Predicated region
        $region147: #{upsample_forward.1} parent=145 // pred_check
          %p3108 = pneg %p105
        $region148: #{upsample_forward.1} parent=145 // pred_check_branch
          %3110 = sbr.rel (%p3108) target = $region150
        $region149: #{upsample_forward.1} parent=145 // pred_region
          %s3111 = sand.u32 %s90, 1
          %s3112 = sand.u32 %s90, 1
          %s3113 = smul.addr %s3112, 256
          %s3114 = scalar_lea.vmem [#allocation6], %s3113
        $region150: #{upsample_forward.1} parent=145 // pred_fallthru
          _
      $region146: #{upsample_forward.1} parent=5 // pred_fallthru
        _
    $region6: #{upsample_forward.1} parent=1 // loop_footer
      %s13 = sadd.s32 1, %s9
    $region7: #{upsample_forward.1} parent=1 // loop_footer_branch
      %8 = sbr.rel target = $region3
    $region8: #{upsample_forward.1} parent=1 // loop_exit
      _
  %3115 = vsyncmov [#allocation5]
  %s3116 = vpop.sfrf %3115
  %p3117 = scmp.eq.s32.totalorder %s3116, 0
  %p3118 = pneg %p3117
  %3120 = shalt.err (%p3118)
  %s3121 = scalar_lea.sflag [#allocation5], 1
  %3122 = vsyncmov %s3121
  %s3123 = vpop.sfrf %3122
  %p3124 = scmp.eq.s32.totalorder %s3123, 0
  %p3125 = pneg %p3124
  %3127 = shalt.err (%p3125)

</llo_original>
